<compile_context>
chip_gen: v7x
topology: tpu7x:2x2x1
jax: 0.10.0
libtpu: 0.0.40
codegen_flags: <defaults>
</compile_context>

<pallas_src>
import math
import functools

import jax
import jax.numpy as jnp
from jax.experimental import pallas as pl
from jax.experimental.pallas import tpu as pltpu


# ----------------------------- in-kernel helpers -----------------------------

def _layernorm(x, g, b, eps=1e-5):
    mean = jnp.mean(x, axis=-1, keepdims=True)
    var = jnp.mean((x - mean) ** 2, axis=-1, keepdims=True)
    return (x - mean) * jax.lax.rsqrt(var + eps) * g + b


# ------------------------ fused transformer-stack kernel ----------------------
#
# grid = (batch_tiles, L); batch axis 'parallel', layer axis 'arbitrary' (innermost).
# acc_ref (VMEM scratch, f32) holds the running activation across the layer axis; the
# bf16 output block is written only at the last layer.

def transformer_stack_kernel(x_ref,
                             wqkv_ref, bqkv_ref, wo_ref,
                             w1_ref, b1_ref, w2_ref,
                             vecs_ref,
                             o_ref, acc_ref, *, num_heads):
    layer = pl.program_id(1)
    last = pl.num_programs(1) - 1

    @pl.when(layer == 0)
    def _():
        acc_ref[...] = x_ref[...]          # embedded input, loaded once per batch tile

    x = acc_ref[...]                        # (B, S, D) f32, resident across layers
    B, S, D = x.shape
    H = num_heads
    dk = D // H
    R = B * S

    x2 = x.reshape(R, D)                    # rows = batch * seq
    xb = x2.astype(jnp.bfloat16)

    vecs = vecs_ref[...]                    # (8, D): [bo, g1, be1, b2, g2, be2, pad, pad]
    bo, g1, be1 = vecs[0:1], vecs[1:2], vecs[2:3]
    b2, g2, be2 = vecs[3:4], vecs[4:5], vecs[5:6]

    # --- fused QKV projection: one full-width MXU matmul, f32 accumulation ---
    # (1/sqrt(dk) is folded host-side into the Q columns of wqkv.)
    qkv = jnp.dot(xb, wqkv_ref[...],
                  preferred_element_type=jnp.float32) + bqkv_ref[...]     # (R, 3D)

    # --- self-attention per (batch, head); heads are static lane slices of qkv ---
    # TODO(synk): for long sequences convert to KV-tiled online softmax (flash pattern)
    # instead of materializing the (S, S) score tile per head.
    dn_qk = (((1,), (1,)), ((), ()))        # contract last dim of both (q @ k^T, no copy)
    ctx_rows = []
    for b in range(B):
        r0 = b * S
        heads = []
        for h in range(H):
            c0 = h * dk
            q = qkv[r0:r0 + S, c0:c0 + dk].astype(jnp.bfloat16)           # (S, dk)
            k = qkv[r0:r0 + S, D + c0:D + c0 + dk].astype(jnp.bfloat16)   # (S, dk)
            v = qkv[r0:r0 + S, 2 * D + c0:2 * D + c0 + dk].astype(jnp.bfloat16)
            s = jax.lax.dot_general(q, k, dn_qk,
                                    preferred_element_type=jnp.float32)   # (S, S)
            s = s - jnp.max(s, axis=-1, keepdims=True)
            e = jnp.exp(s)
            p = e / jnp.sum(e, axis=-1, keepdims=True)
            heads.append(jnp.dot(p.astype(jnp.bfloat16), v,
                                 preferred_element_type=jnp.float32))     # (S, dk)
        ctx_rows.append(jnp.concatenate(heads, axis=-1))                  # (S, D)
    ctx = jnp.concatenate(ctx_rows, axis=0).astype(jnp.bfloat16)          # (R, D)

    # --- fused output projection: full-depth contraction, no cross-head VPU sum ---
    attn = jnp.dot(ctx, wo_ref[...],
                   preferred_element_type=jnp.float32) + bo               # (R, D)

    # dropout == identity (eval mode)
    x1 = _layernorm(x2 + attn, g1, be1)

    # --- feed-forward ---
    h1 = jnp.maximum(
        jnp.dot(x1.astype(jnp.bfloat16), w1_ref[...],
                preferred_element_type=jnp.float32) + b1_ref[...], 0.0)   # (R, F)
    ff = jnp.dot(h1.astype(jnp.bfloat16), w2_ref[...],
                 preferred_element_type=jnp.float32) + b2                 # (R, D)

    y = _layernorm(x1 + ff, g2, be2)                                      # (R, D) f32
    acc_ref[...] = y.reshape(B, S, D)

    @pl.when(layer == last)
    def _():
        o_ref[...] = y.reshape(B, S, D).astype(o_ref.dtype)               # bf16 writeback


_PARAM_ORDER = ('wqkv', 'bqkv', 'wo', 'w1', 'b1', 'w2', 'vecs')


def transformer_stack(x, p, num_heads):
    """Runs all L layers of one stack inside a single pallas_call. Output is bf16."""
    B, S, D = x.shape
    L = p['wqkv'].shape[0]
    b_tile = B           # whole batch in one block at demo size; weights stream once/layer.
                         # For large B pick a smaller (even, for v7x megacore) batch tile.

    def wspec(arr):
        nd = arr.ndim
        # per-layer weight slab: block covers everything except the leading layer axis
        return pl.BlockSpec((None,) + tuple(arr.shape[1:]),
                            lambda b, l: (l,) + (0,) * (nd - 1))

    in_specs = [pl.BlockSpec((b_tile, S, D), lambda b, l: (b, 0, 0))]
    in_specs += [wspec(p[k]) for k in _PARAM_ORDER]

    return pl.pallas_call(
        functools.partial(transformer_stack_kernel, num_heads=num_heads),
        out_shape=jax.ShapeDtypeStruct((B, S, D), jnp.bfloat16),
        grid=(B // b_tile, L),
        in_specs=in_specs,
        out_specs=pl.BlockSpec((b_tile, S, D), lambda b, l: (b, 0, 0)),
        scratch_shapes=[pltpu.VMEM((b_tile, S, D), jnp.float32)],
        compiler_params=pltpu.CompilerParams(
            dimension_semantics=("parallel", "arbitrary"),
            vmem_limit_bytes=48 * 1024 * 1024),     # > 16/32 MiB defaults, <= v7x 64 MiB/TC
    )(x, *[p[k] for k in _PARAM_ORDER])


# ----------------------------- final linear kernel ----------------------------

def final_linear_kernel(x_ref, w_ref, b_ref, o_ref):
    o_ref[...] = (jnp.dot(x_ref[...], w_ref[...],
                          preferred_element_type=jnp.float32) + b_ref[...])


def _pick_tile(n, candidates):
    for c in candidates:
        if n % c == 0:
            return c
    return n    # fallback (non-lane-dense V); correct but slower for odd sizes


def final_linear(x, w, b):
    """(B, S, D) @ (D, V) + b; rows flattened, lane-dense tiles as large as divisors allow."""
    B, S, D = x.shape
    V = w.shape[1]
    R = B * S
    x2 = x.reshape(R, D)                          # already bf16 from the stack, no cast

    tile_v = _pick_tile(V, (2048, 1024, 512, 256, 128))
    tile_r = _pick_tile(R, (512, 256, 128, 64, 32, 16, 8))

    out = pl.pallas_call(
        final_linear_kernel,
        out_shape=jax.ShapeDtypeStruct((R, V), jnp.float32),
        grid=(R // tile_r, V // tile_v),
        in_specs=[pl.BlockSpec((tile_r, D), lambda i, j: (i, 0)),
                  pl.BlockSpec((D, tile_v), lambda i, j: (0, j)),
                  pl.BlockSpec((1, tile_v), lambda i, j: (0, j))],
        out_specs=pl.BlockSpec((tile_r, tile_v), lambda i, j: (i, j)),
        compiler_params=pltpu.CompilerParams(
            dimension_semantics=("parallel", "parallel")),
    )(x2, w, b)
    return out.reshape(B, S, V)


# --------------------------------- glue (JAX) ---------------------------------

def positional_encoding_table(max_len, d_model):
    position = jnp.arange(max_len, dtype=jnp.float32)[:, None]
    div_term = jnp.exp(jnp.arange(0, d_model, 2, dtype=jnp.float32)
                       * (-math.log(10000.0) / d_model))
    pe = jnp.zeros((max_len, d_model), dtype=jnp.float32)
    pe = pe.at[:, 0::2].set(jnp.sin(position * div_term))
    pe = pe.at[:, 1::2].set(jnp.cos(position * div_term))
    return pe


def init_block_params(key, d_model, d_ff, num_heads, scale=0.02):
    """One TransformerBlock's parameters, fused-QKV layout with 1/sqrt(dk) folded in."""
    dk = d_model // num_heads
    ks = jax.random.split(key, 6)
    lin = lambda k, fi, fo: jax.random.normal(k, (fi, fo), jnp.float32) * scale
    wq, wk, wv, wo = (lin(ks[i], d_model, d_model) for i in range(4))
    w1 = lin(ks[4], d_model, d_ff)
    w2 = lin(ks[5], d_ff, d_model)

    inv_sqrt_dk = 1.0 / math.sqrt(dk)
    wqkv = jnp.concatenate([wq * inv_sqrt_dk, wk, wv], axis=1)     # (D, 3D)

    # packed small vectors: rows = [bo, gamma1, beta1, b2, gamma2, beta2, pad, pad]
    vecs = jnp.zeros((8, d_model), jnp.float32)
    vecs = vecs.at[1].set(1.0)   # layernorm 1 gain
    vecs = vecs.at[4].set(1.0)   # layernorm 2 gain

    return {
        'wqkv': wqkv.astype(jnp.bfloat16),
        'bqkv': jnp.zeros((1, 3 * d_model), jnp.float32),
        'wo': wo.astype(jnp.bfloat16),
        'w1': w1.astype(jnp.bfloat16),
        'b1': jnp.zeros((1, d_ff), jnp.float32),
        'w2': w2.astype(jnp.bfloat16),
        'vecs': vecs,
    }


def stack_layer_params(blocks):
    """Stack per-layer params on a leading L axis so one kernel can index them by layer."""
    return {k: jnp.stack([blk[k] for blk in blocks], axis=0) for k in blocks[0]}


def init_params(key, src_vocab, tgt_vocab, d_model, num_heads, num_layers, d_ff, max_len):
    k_src, k_tgt, k_enc, k_dec, k_out = jax.random.split(key, 5)
    enc_keys = jax.random.split(k_enc, num_layers)
    dec_keys = jax.random.split(k_dec, num_layers)
    return {
        'src_emb': jax.random.normal(k_src, (src_vocab, d_model), jnp.float32) * 0.02,
        'tgt_emb': jax.random.normal(k_tgt, (tgt_vocab, d_model), jnp.float32) * 0.02,
        'pe': positional_encoding_table(max_len, d_model),
        'enc': stack_layer_params(
            [init_block_params(k, d_model, d_ff, num_heads) for k in enc_keys]),
        'dec': stack_layer_params(
            [init_block_params(k, d_model, d_ff, num_heads) for k in dec_keys]),
        'w_out': (jax.random.normal(k_out, (d_model, tgt_vocab), jnp.float32)
                  * 0.02).astype(jnp.bfloat16),
        'b_out': jnp.zeros((1, tgt_vocab), jnp.float32),
    }


def transformer_forward(src, tgt, params, num_heads):
    pe = params['pe']
    # TODO(synk): srcMask / tgtMask attention masking not implemented (reference defaults are None).
    # Embedding gather + positional encoding stay in plain JAX (gather has no simple
    # rectangular BlockSpec form at this size).
    x = jnp.take(params['src_emb'], src, axis=0) + pe[None, :src.shape[1], :]
    x = transformer_stack(x, params['enc'], num_heads)   # encoder output is unused downstream,
                                                         # exactly as in the reference forward
    y = jnp.take(params['tgt_emb'], tgt, axis=0) + pe[None, :tgt.shape[1], :]
    y = transformer_stack(y, params['dec'], num_heads)   # reference "decoder" = self-attn blocks
    return final_linear(y, params['w_out'], params['b_out'])


# ------------------------------------ main -------------------------------------

if __name__ == "__main__":
    B, S = 2, 16
    D_MODEL, NUM_HEADS, NUM_LAYERS, D_FF = 256, 2, 2, 512   # dk = 128 -> lane-aligned heads
    SRC_VOCAB = TGT_VOCAB = 256

    key = jax.random.PRNGKey(0)
    k_src, k_tgt, k_par = jax.random.split(key, 3)
    src = jax.random.randint(k_src, (B, S), 0, SRC_VOCAB, dtype=jnp.int32)
    tgt = jax.random.randint(k_tgt, (B, S), 0, TGT_VOCAB, dtype=jnp.int32)

    params = init_params(k_par, SRC_VOCAB, TGT_VOCAB, D_MODEL, NUM_HEADS, NUM_LAYERS,
                         D_FF, max_len=64)

    out = transformer_forward(src, tgt, params, NUM_HEADS)
    out = jax.block_until_ready(out)
    assert out.shape == (B, S, TGT_VOCAB)
    assert out.dtype == jnp.float32
    assert bool(jnp.all(jnp.isfinite(out)))
    print("KERNEL_OK")
</pallas_src>

<mosaic_0001>
module attributes {stable_mosaic.version = 11 : i64} {
  func.func @transformer_stack_kernel(%arg0: i32, %arg1: i32, %arg2: memref<2x16x256xf32, #tpu.memory_space<vmem>>, %arg3: memref<1x256x768xbf16, #tpu.memory_space<vmem>>, %arg4: memref<1x1x768xf32, #tpu.memory_space<vmem>>, %arg5: memref<1x256x256xbf16, #tpu.memory_space<vmem>>, %arg6: memref<1x256x512xbf16, #tpu.memory_space<vmem>>, %arg7: memref<1x1x512xf32, #tpu.memory_space<vmem>>, %arg8: memref<1x512x256xbf16, #tpu.memory_space<vmem>>, %arg9: memref<1x8x256xf32, #tpu.memory_space<vmem>>, %arg10: memref<2x16x256xbf16, #tpu.memory_space<vmem>>, %arg11: memref<2x16x256xf32, #tpu.memory_space<vmem>>) attributes {dimension_semantics = [#tpu.dimension_semantics<parallel>, #tpu.dimension_semantics<arbitrary>], iteration_bounds = array<i64: 1, 2>, scalar_prefetch = 0 : i64, scratch_operands = 1 : i64, tpu.core_type = #tpu.core_type<tc>, window_params = [{transform_indices = @transform_0, window_bounds = array<i64: 2, 16, 256>}, {transform_indices = @transform_1, window_bounds = array<i64: 1, 256, 768>}, {transform_indices = @transform_2, window_bounds = array<i64: 1, 1, 768>}, {transform_indices = @transform_3, window_bounds = array<i64: 1, 256, 256>}, {transform_indices = @transform_4, window_bounds = array<i64: 1, 256, 512>}, {transform_indices = @transform_5, window_bounds = array<i64: 1, 1, 512>}, {transform_indices = @transform_6, window_bounds = array<i64: 1, 512, 256>}, {transform_indices = @transform_7, window_bounds = array<i64: 1, 8, 256>}, {transform_indices = @transform_8, window_bounds = array<i64: 2, 16, 256>}]} {
    %c0_i32 = arith.constant 0 : i32
    %0 = arith.cmpi eq, %arg1, %c0_i32 : i32
    %1 = arith.extui %0 : i1 to i32
    %c0_i32_0 = arith.constant 0 : i32
    %2 = arith.cmpi ne, %1, %c0_i32_0 : i32
    scf.if %2 {
      %c0_58 = arith.constant 0 : index
      %c0_59 = arith.constant 0 : index
      %c0_60 = arith.constant 0 : index
      %169 = vector.load %arg2[%c0_58, %c0_59, %c0_60] : memref<2x16x256xf32, #tpu.memory_space<vmem>>, vector<2x16x256xf32>
      %c0_61 = arith.constant 0 : index
      %c0_62 = arith.constant 0 : index
      %c0_63 = arith.constant 0 : index
      %170 = vector.load %arg11[%c0_61, %c0_62, %c0_63] : memref<2x16x256xf32, #tpu.memory_space<vmem>>, vector<2x16x256xf32>
      tpu.vector_store %arg11[%c0_61, %c0_62, %c0_63], %169 {strides = array<i32>} : memref<2x16x256xf32, #tpu.memory_space<vmem>>, vector<2x16x256xf32>,
    } else {
    }
    %c0 = arith.constant 0 : index
    %c0_1 = arith.constant 0 : index
    %c0_2 = arith.constant 0 : index
    %3 = vector.load %arg11[%c0, %c0_1, %c0_2] : memref<2x16x256xf32, #tpu.memory_space<vmem>>, vector<2x16x256xf32>
    %4 = vector.shape_cast %3 : vector<2x16x256xf32> to vector<32x256xf32>
    %5 = arith.truncf %4 : vector<32x256xf32> to vector<32x256xbf16>
    %c0_3 = arith.constant 0 : index
    %c0_4 = arith.constant 0 : index
    %c0_5 = arith.constant 0 : index
    %6 = vector.load %arg9[%c0_3, %c0_4, %c0_5] : memref<1x8x256xf32, #tpu.memory_space<vmem>>, vector<1x8x256xf32>
    %7 = vector.shape_cast %6 : vector<1x8x256xf32> to vector<8x256xf32>
    %8 = vector.extract_strided_slice %7 {offsets = [0, 0], sizes = [1, 256], strides = [1, 1]} : vector<8x256xf32> to vector<1x256xf32>
    %9 = vector.extract_strided_slice %7 {offsets = [1, 0], sizes = [1, 256], strides = [1, 1]} : vector<8x256xf32> to vector<1x256xf32>
    %10 = vector.extract_strided_slice %7 {offsets = [2, 0], sizes = [1, 256], strides = [1, 1]} : vector<8x256xf32> to vector<1x256xf32>
    %11 = vector.extract_strided_slice %7 {offsets = [3, 0], sizes = [1, 256], strides = [1, 1]} : vector<8x256xf32> to vector<1x256xf32>
    %12 = vector.extract_strided_slice %7 {offsets = [4, 0], sizes = [1, 256], strides = [1, 1]} : vector<8x256xf32> to vector<1x256xf32>
    %13 = vector.extract_strided_slice %7 {offsets = [5, 0], sizes = [1, 256], strides = [1, 1]} : vector<8x256xf32> to vector<1x256xf32>
    %c0_6 = arith.constant 0 : index
    %c0_7 = arith.constant 0 : index
    %c0_8 = arith.constant 0 : index
    %14 = vector.load %arg3[%c0_6, %c0_7, %c0_8] : memref<1x256x768xbf16, #tpu.memory_space<vmem>>, vector<1x256x768xbf16>
    %15 = vector.shape_cast %14 : vector<1x256x768xbf16> to vector<256x768xbf16>
    %cst = arith.constant dense<0.000000e+00> : vector<32x768xf32>
    %16 = tpu.matmul %5, %15, %cst {dimension_numbers = #tpu.dot_dimension_numbers<[1], [0], [0], [1], [0, 0, 1, 1], [], []>} : vector<32x256xbf16>, vector<256x768xbf16>, vector<32x768xf32> -> vector<32x768xf32>
    %c0_9 = arith.constant 0 : index
    %c0_10 = arith.constant 0 : index
    %c0_11 = arith.constant 0 : index
    %17 = vector.load %arg4[%c0_9, %c0_10, %c0_11] : memref<1x1x768xf32, #tpu.memory_space<vmem>>, vector<1x1x768xf32>
    %18 = vector.shape_cast %17 : vector<1x1x768xf32> to vector<1x768xf32>
    %19 = vector.broadcast %18 : vector<1x768xf32> to vector<32x768xf32>
    %20 = arith.addf %16, %19 : vector<32x768xf32>
    %21 = vector.extract_strided_slice %20 {offsets = [0, 0], sizes = [16, 128], strides = [1, 1]} : vector<32x768xf32> to vector<16x128xf32>
    %22 = arith.truncf %21 : vector<16x128xf32> to vector<16x128xbf16>
    %23 = vector.extract_strided_slice %20 {offsets = [0, 256], sizes = [16, 128], strides = [1, 1]} : vector<32x768xf32> to vector<16x128xf32>
    %24 = arith.truncf %23 : vector<16x128xf32> to vector<16x128xbf16>
    %25 = vector.extract_strided_slice %20 {offsets = [0, 512], sizes = [16, 128], strides = [1, 1]} : vector<32x768xf32> to vector<16x128xf32>
    %26 = arith.truncf %25 : vector<16x128xf32> to vector<16x128xbf16>
    %cst_12 = arith.constant dense<0.000000e+00> : vector<16x16xf32>
    %27 = tpu.matmul %22, %24, %cst_12 {dimension_numbers = #tpu.dot_dimension_numbers<[1], [1], [0], [0], [0, 0, 1, 0], [], []>} : vector<16x128xbf16>, vector<16x128xbf16>, vector<16x16xf32> -> vector<16x16xf32>
    %cst_13 = arith.constant dense<0xFF800000> : vector<16xf32>
    %28 = vector.multi_reduction <maximumf>, %27, %cst_13 [1] : vector<16x16xf32> to vector<16xf32>
    %29 = vector.shape_cast %28 : vector<16xf32> to vector<16x1xf32>
    %30 = vector.broadcast %29 : vector<16x1xf32> to vector<16x16xf32>
    %31 = arith.subf %27, %30 : vector<16x16xf32>
    %32 = math.exp %31 : vector<16x16xf32>
    %cst_14 = arith.constant dense<0.000000e+00> : vector<16xf32>
    %33 = vector.multi_reduction <add>, %32, %cst_14 [1] : vector<16x16xf32> to vector<16xf32>
    %34 = vector.shape_cast %33 : vector<16xf32> to vector<16x1xf32>
    %35 = vector.broadcast %34 : vector<16x1xf32> to vector<16x16xf32>
    %36 = arith.divf %32, %35 : vector<16x16xf32>
    %37 = arith.truncf %36 : vector<16x16xf32> to vector<16x16xbf16>
    %cst_15 = arith.constant dense<0.000000e+00> : vector<16x128xf32>
    %38 = tpu.matmul %37, %26, %cst_15 {dimension_numbers = #tpu.dot_dimension_numbers<[1], [0], [0], [1], [0, 0, 1, 1], [], []>} : vector<16x16xbf16>, vector<16x128xbf16>, vector<16x128xf32> -> vector<16x128xf32>
    %39 = vector.extract_strided_slice %20 {offsets = [0, 128], sizes = [16, 128], strides = [1, 1]} : vector<32x768xf32> to vector<16x128xf32>
    %40 = arith.truncf %39 : vector<16x128xf32> to vector<16x128xbf16>
    %41 = vector.extract_strided_slice %20 {offsets = [0, 384], sizes = [16, 128], strides = [1, 1]} : vector<32x768xf32> to vector<16x128xf32>
    %42 = arith.truncf %41 : vector<16x128xf32> to vector<16x128xbf16>
    %43 = vector.extract_strided_slice %20 {offsets = [0, 640], sizes = [16, 128], strides = [1, 1]} : vector<32x768xf32> to vector<16x128xf32>
    %44 = arith.truncf %43 : vector<16x128xf32> to vector<16x128xbf16>
    %cst_16 = arith.constant dense<0.000000e+00> : vector<16x16xf32>
    %45 = tpu.matmul %40, %42, %cst_16 {dimension_numbers = #tpu.dot_dimension_numbers<[1], [1], [0], [0], [0, 0, 1, 0], [], []>} : vector<16x128xbf16>, vector<16x128xbf16>, vector<16x16xf32> -> vector<16x16xf32>
    %cst_17 = arith.constant dense<0xFF800000> : vector<16xf32>
    %46 = vector.multi_reduction <maximumf>, %45, %cst_17 [1] : vector<16x16xf32> to vector<16xf32>
    %47 = vector.shape_cast %46 : vector<16xf32> to vector<16x1xf32>
    %48 = vector.broadcast %47 : vector<16x1xf32> to vector<16x16xf32>
    %49 = arith.subf %45, %48 : vector<16x16xf32>
    %50 = math.exp %49 : vector<16x16xf32>
    %cst_18 = arith.constant dense<0.000000e+00> : vector<16xf32>
    %51 = vector.multi_reduction <add>, %50, %cst_18 [1] : vector<16x16xf32> to vector<16xf32>
    %52 = vector.shape_cast %51 : vector<16xf32> to vector<16x1xf32>
    %53 = vector.broadcast %52 : vector<16x1xf32> to vector<16x16xf32>
    %54 = arith.divf %50, %53 : vector<16x16xf32>
    %55 = arith.truncf %54 : vector<16x16xf32> to vector<16x16xbf16>
    %cst_19 = arith.constant dense<0.000000e+00> : vector<16x128xf32>
    %56 = tpu.matmul %55, %44, %cst_19 {dimension_numbers = #tpu.dot_dimension_numbers<[1], [0], [0], [1], [0, 0, 1, 1], [], []>} : vector<16x16xbf16>, vector<16x128xbf16>, vector<16x128xf32> -> vector<16x128xf32>
    %57 = tpu.concatenate %38, %56 in 1 : vector<16x128xf32>, vector<16x128xf32> -> vector<16x256xf32>
    %58 = vector.extract_strided_slice %20 {offsets = [16, 0], sizes = [16, 128], strides = [1, 1]} : vector<32x768xf32> to vector<16x128xf32>
    %59 = arith.truncf %58 : vector<16x128xf32> to vector<16x128xbf16>
    %60 = vector.extract_strided_slice %20 {offsets = [16, 256], sizes = [16, 128], strides = [1, 1]} : vector<32x768xf32> to vector<16x128xf32>
    %61 = arith.truncf %60 : vector<16x128xf32> to vector<16x128xbf16>
    %62 = vector.extract_strided_slice %20 {offsets = [16, 512], sizes = [16, 128], strides = [1, 1]} : vector<32x768xf32> to vector<16x128xf32>
    %63 = arith.truncf %62 : vector<16x128xf32> to vector<16x128xbf16>
    %cst_20 = arith.constant dense<0.000000e+00> : vector<16x16xf32>
    %64 = tpu.matmul %59, %61, %cst_20 {dimension_numbers = #tpu.dot_dimension_numbers<[1], [1], [0], [0], [0, 0, 1, 0], [], []>} : vector<16x128xbf16>, vector<16x128xbf16>, vector<16x16xf32> -> vector<16x16xf32>
    %cst_21 = arith.constant dense<0xFF800000> : vector<16xf32>
    %65 = vector.multi_reduction <maximumf>, %64, %cst_21 [1] : vector<16x16xf32> to vector<16xf32>
    %66 = vector.shape_cast %65 : vector<16xf32> to vector<16x1xf32>
    %67 = vector.broadcast %66 : vector<16x1xf32> to vector<16x16xf32>
    %68 = arith.subf %64, %67 : vector<16x16xf32>
    %69 = math.exp %68 : vector<16x16xf32>
    %cst_22 = arith.constant dense<0.000000e+00> : vector<16xf32>
    %70 = vector.multi_reduction <add>, %69, %cst_22 [1] : vector<16x16xf32> to vector<16xf32>
    %71 = vector.shape_cast %70 : vector<16xf32> to vector<16x1xf32>
    %72 = vector.broadcast %71 : vector<16x1xf32> to vector<16x16xf32>
    %73 = arith.divf %69, %72 : vector<16x16xf32>
    %74 = arith.truncf %73 : vector<16x16xf32> to vector<16x16xbf16>
    %cst_23 = arith.constant dense<0.000000e+00> : vector<16x128xf32>
    %75 = tpu.matmul %74, %63, %cst_23 {dimension_numbers = #tpu.dot_dimension_numbers<[1], [0], [0], [1], [0, 0, 1, 1], [], []>} : vector<16x16xbf16>, vector<16x128xbf16>, vector<16x128xf32> -> vector<16x128xf32>
    %76 = vector.extract_strided_slice %20 {offsets = [16, 128], sizes = [16, 128], strides = [1, 1]} : vector<32x768xf32> to vector<16x128xf32>
    %77 = arith.truncf %76 : vector<16x128xf32> to vector<16x128xbf16>
    %78 = vector.extract_strided_slice %20 {offsets = [16, 384], sizes = [16, 128], strides = [1, 1]} : vector<32x768xf32> to vector<16x128xf32>
    %79 = arith.truncf %78 : vector<16x128xf32> to vector<16x128xbf16>
    %80 = vector.extract_strided_slice %20 {offsets = [16, 640], sizes = [16, 128], strides = [1, 1]} : vector<32x768xf32> to vector<16x128xf32>
    %81 = arith.truncf %80 : vector<16x128xf32> to vector<16x128xbf16>
    %cst_24 = arith.constant dense<0.000000e+00> : vector<16x16xf32>
    %82 = tpu.matmul %77, %79, %cst_24 {dimension_numbers = #tpu.dot_dimension_numbers<[1], [1], [0], [0], [0, 0, 1, 0], [], []>} : vector<16x128xbf16>, vector<16x128xbf16>, vector<16x16xf32> -> vector<16x16xf32>
    %cst_25 = arith.constant dense<0xFF800000> : vector<16xf32>
    %83 = vector.multi_reduction <maximumf>, %82, %cst_25 [1] : vector<16x16xf32> to vector<16xf32>
    %84 = vector.shape_cast %83 : vector<16xf32> to vector<16x1xf32>
    %85 = vector.broadcast %84 : vector<16x1xf32> to vector<16x16xf32>
    %86 = arith.subf %82, %85 : vector<16x16xf32>
    %87 = math.exp %86 : vector<16x16xf32>
    %cst_26 = arith.constant dense<0.000000e+00> : vector<16xf32>
    %88 = vector.multi_reduction <add>, %87, %cst_26 [1] : vector<16x16xf32> to vector<16xf32>
    %89 = vector.shape_cast %88 : vector<16xf32> to vector<16x1xf32>
    %90 = vector.broadcast %89 : vector<16x1xf32> to vector<16x16xf32>
    %91 = arith.divf %87, %90 : vector<16x16xf32>
    %92 = arith.truncf %91 : vector<16x16xf32> to vector<16x16xbf16>
    %cst_27 = arith.constant dense<0.000000e+00> : vector<16x128xf32>
    %93 = tpu.matmul %92, %81, %cst_27 {dimension_numbers = #tpu.dot_dimension_numbers<[1], [0], [0], [1], [0, 0, 1, 1], [], []>} : vector<16x16xbf16>, vector<16x128xbf16>, vector<16x128xf32> -> vector<16x128xf32>
    %94 = tpu.concatenate %75, %93 in 1 : vector<16x128xf32>, vector<16x128xf32> -> vector<16x256xf32>
    %95 = tpu.concatenate %57, %94 in 0 : vector<16x256xf32>, vector<16x256xf32> -> vector<32x256xf32>
    %96 = arith.truncf %95 : vector<32x256xf32> to vector<32x256xbf16>
    %c0_28 = arith.constant 0 : index
    %c0_29 = arith.constant 0 : index
    %c0_30 = arith.constant 0 : index
    %97 = vector.load %arg5[%c0_28, %c0_29, %c0_30] : memref<1x256x256xbf16, #tpu.memory_space<vmem>>, vector<1x256x256xbf16>
    %98 = vector.shape_cast %97 : vector<1x256x256xbf16> to vector<256x256xbf16>
    %cst_31 = arith.constant dense<0.000000e+00> : vector<32x256xf32>
    %99 = tpu.matmul %96, %98, %cst_31 {dimension_numbers = #tpu.dot_dimension_numbers<[1], [0], [0], [1], [0, 0, 1, 1], [], []>} : vector<32x256xbf16>, vector<256x256xbf16>, vector<32x256xf32> -> vector<32x256xf32>
    %100 = vector.broadcast %8 : vector<1x256xf32> to vector<32x256xf32>
    %101 = arith.addf %99, %100 : vector<32x256xf32>
    %102 = arith.addf %4, %101 : vector<32x256xf32>
    %cst_32 = arith.constant dense<0.000000e+00> : vector<32xf32>
    %103 = vector.multi_reduction <add>, %102, %cst_32 [1] : vector<32x256xf32> to vector<32xf32>
    %104 = vector.shape_cast %103 : vector<32xf32> to vector<32x1xf32>
    %cst_33 = arith.constant 2.560000e+02 : f32
    %105 = vector.broadcast %cst_33 : f32 to vector<32x1xf32>
    %106 = arith.divf %104, %105 : vector<32x1xf32>
    %107 = vector.broadcast %106 : vector<32x1xf32> to vector<32x256xf32>
    %108 = arith.subf %102, %107 : vector<32x256xf32>
    %109 = arith.mulf %108, %108 : vector<32x256xf32>
    %cst_34 = arith.constant dense<0.000000e+00> : vector<32xf32>
    %110 = vector.multi_reduction <add>, %109, %cst_34 [1] : vector<32x256xf32> to vector<32xf32>
    %111 = vector.shape_cast %110 : vector<32xf32> to vector<32x1xf32>
    %cst_35 = arith.constant 2.560000e+02 : f32
    %112 = vector.broadcast %cst_35 : f32 to vector<32x1xf32>
    %113 = arith.divf %111, %112 : vector<32x1xf32>
    %114 = vector.broadcast %106 : vector<32x1xf32> to vector<32x256xf32>
    %115 = arith.subf %102, %114 : vector<32x256xf32>
    %cst_36 = arith.constant 9.99999974E-6 : f32
    %116 = vector.broadcast %cst_36 : f32 to vector<32x1xf32>
    %117 = arith.addf %113, %116 : vector<32x1xf32>
    %118 = math.rsqrt %117 : vector<32x1xf32>
    %119 = vector.broadcast %118 : vector<32x1xf32> to vector<32x256xf32>
    %120 = arith.mulf %115, %119 : vector<32x256xf32>
    %121 = vector.broadcast %9 : vector<1x256xf32> to vector<32x256xf32>
    %122 = arith.mulf %120, %121 : vector<32x256xf32>
    %123 = vector.broadcast %10 : vector<1x256xf32> to vector<32x256xf32>
    %124 = arith.addf %122, %123 : vector<32x256xf32>
    %125 = arith.truncf %124 : vector<32x256xf32> to vector<32x256xbf16>
    %c0_37 = arith.constant 0 : index
    %c0_38 = arith.constant 0 : index
    %c0_39 = arith.constant 0 : index
    %126 = vector.load %arg6[%c0_37, %c0_38, %c0_39] : memref<1x256x512xbf16, #tpu.memory_space<vmem>>, vector<1x256x512xbf16>
    %127 = vector.shape_cast %126 : vector<1x256x512xbf16> to vector<256x512xbf16>
    %cst_40 = arith.constant dense<0.000000e+00> : vector<32x512xf32>
    %128 = tpu.matmul %125, %127, %cst_40 {dimension_numbers = #tpu.dot_dimension_numbers<[1], [0], [0], [1], [0, 0, 1, 1], [], []>} : vector<32x256xbf16>, vector<256x512xbf16>, vector<32x512xf32> -> vector<32x512xf32>
    %c0_41 = arith.constant 0 : index
    %c0_42 = arith.constant 0 : index
    %c0_43 = arith.constant 0 : index
    %129 = vector.load %arg7[%c0_41, %c0_42, %c0_43] : memref<1x1x512xf32, #tpu.memory_space<vmem>>, vector<1x1x512xf32>
    %130 = vector.shape_cast %129 : vector<1x1x512xf32> to vector<1x512xf32>
    %131 = vector.broadcast %130 : vector<1x512xf32> to vector<32x512xf32>
    %132 = arith.addf %128, %131 : vector<32x512xf32>
    %cst_44 = arith.constant 0.000000e+00 : f32
    %133 = vector.broadcast %cst_44 : f32 to vector<32x512xf32>
    %134 = arith.maximumf %132, %133 : vector<32x512xf32>
    %135 = arith.truncf %134 : vector<32x512xf32> to vector<32x512xbf16>
    %c0_45 = arith.constant 0 : index
    %c0_46 = arith.constant 0 : index
    %c0_47 = arith.constant 0 : index
    %136 = vector.load %arg8[%c0_45, %c0_46, %c0_47] : memref<1x512x256xbf16, #tpu.memory_space<vmem>>, vector<1x512x256xbf16>
    %137 = vector.shape_cast %136 : vector<1x512x256xbf16> to vector<512x256xbf16>
    %cst_48 = arith.constant dense<0.000000e+00> : vector<32x256xf32>
    %138 = tpu.matmul %135, %137, %cst_48 {dimension_numbers = #tpu.dot_dimension_numbers<[1], [0], [0], [1], [0, 0, 1, 1], [], []>} : vector<32x512xbf16>, vector<512x256xbf16>, vector<32x256xf32> -> vector<32x256xf32>
    %139 = vector.broadcast %11 : vector<1x256xf32> to vector<32x256xf32>
    %140 = arith.addf %138, %139 : vector<32x256xf32>
    %141 = arith.addf %124, %140 : vector<32x256xf32>
    %cst_49 = arith.constant dense<0.000000e+00> : vector<32xf32>
    %142 = vector.multi_reduction <add>, %141, %cst_49 [1] : vector<32x256xf32> to vector<32xf32>
    %143 = vector.shape_cast %142 : vector<32xf32> to vector<32x1xf32>
    %cst_50 = arith.constant 2.560000e+02 : f32
    %144 = vector.broadcast %cst_50 : f32 to vector<32x1xf32>
    %145 = arith.divf %143, %144 : vector<32x1xf32>
    %146 = vector.broadcast %145 : vector<32x1xf32> to vector<32x256xf32>
    %147 = arith.subf %141, %146 : vector<32x256xf32>
    %148 = arith.mulf %147, %147 : vector<32x256xf32>
    %cst_51 = arith.constant dense<0.000000e+00> : vector<32xf32>
    %149 = vector.multi_reduction <add>, %148, %cst_51 [1] : vector<32x256xf32> to vector<32xf32>
    %150 = vector.shape_cast %149 : vector<32xf32> to vector<32x1xf32>
    %cst_52 = arith.constant 2.560000e+02 : f32
    %151 = vector.broadcast %cst_52 : f32 to vector<32x1xf32>
    %152 = arith.divf %150, %151 : vector<32x1xf32>
    %153 = vector.broadcast %145 : vector<32x1xf32> to vector<32x256xf32>
    %154 = arith.subf %141, %153 : vector<32x256xf32>
    %cst_53 = arith.constant 9.99999974E-6 : f32
    %155 = vector.broadcast %cst_53 : f32 to vector<32x1xf32>
    %156 = arith.addf %152, %155 : vector<32x1xf32>
    %157 = math.rsqrt %156 : vector<32x1xf32>
    %158 = vector.broadcast %157 : vector<32x1xf32> to vector<32x256xf32>
    %159 = arith.mulf %154, %158 : vector<32x256xf32>
    %160 = vector.broadcast %12 : vector<1x256xf32> to vector<32x256xf32>
    %161 = arith.mulf %159, %160 : vector<32x256xf32>
    %162 = vector.broadcast %13 : vector<1x256xf32> to vector<32x256xf32>
    %163 = arith.addf %161, %162 : vector<32x256xf32>
    %164 = vector.shape_cast %163 : vector<32x256xf32> to vector<2x16x256xf32>
    %c0_54 = arith.constant 0 : index
    %c0_55 = arith.constant 0 : index
    %c0_56 = arith.constant 0 : index
    %165 = vector.load %arg11[%c0_54, %c0_55, %c0_56] : memref<2x16x256xf32, #tpu.memory_space<vmem>>, vector<2x16x256xf32>
    tpu.vector_store %arg11[%c0_54, %c0_55, %c0_56], %164 {strides = array<i32>} : memref<2x16x256xf32, #tpu.memory_space<vmem>>, vector<2x16x256xf32>,
    %c1_i32 = arith.constant 1 : i32
    %166 = arith.cmpi eq, %arg1, %c1_i32 : i32
    %167 = arith.extui %166 : i1 to i32
    %c0_i32_57 = arith.constant 0 : i32
    %168 = arith.cmpi ne, %167, %c0_i32_57 : i32
    scf.if %168 {
      %169 = vector.shape_cast %163 : vector<32x256xf32> to vector<2x16x256xf32>
      %170 = arith.truncf %169 : vector<2x16x256xf32> to vector<2x16x256xbf16>
      %c0_58 = arith.constant 0 : index
      %c0_59 = arith.constant 0 : index
      %c0_60 = arith.constant 0 : index
      %171 = vector.load %arg10[%c0_58, %c0_59, %c0_60] : memref<2x16x256xbf16, #tpu.memory_space<vmem>>, vector<2x16x256xbf16>
      tpu.vector_store %arg10[%c0_58, %c0_59, %c0_60], %170 {strides = array<i32>} : memref<2x16x256xbf16, #tpu.memory_space<vmem>>, vector<2x16x256xbf16>,
    } else {
    }
    return
  }
  func.func @transform_0(%arg0: i32, %arg1: i32) -> (i32, i32, i32) {
    %c0_i32 = arith.constant 0 : i32
    %c0_i32_0 = arith.constant 0 : i32
    %c0_i32_1 = arith.constant 0 : i32
    return %arg0, %c0_i32, %c0_i32_0 : i32, i32, i32
  }
  func.func @transform_1(%arg0: i32, %arg1: i32) -> (i32, i32, i32) {
    %c0_i32 = arith.constant 0 : i32
    %c0_i32_0 = arith.constant 0 : i32
    %c0_i32_1 = arith.constant 0 : i32
    return %arg1, %c0_i32, %c0_i32_0 : i32, i32, i32
  }
  func.func @transform_2(%arg0: i32, %arg1: i32) -> (i32, i32, i32) {
    %c0_i32 = arith.constant 0 : i32
    %c0_i32_0 = arith.constant 0 : i32
    %c0_i32_1 = arith.constant 0 : i32
    return %arg1, %c0_i32, %c0_i32_0 : i32, i32, i32
  }
  func.func @transform_3(%arg0: i32, %arg1: i32) -> (i32, i32, i32) {
    %c0_i32 = arith.constant 0 : i32
    %c0_i32_0 = arith.constant 0 : i32
    %c0_i32_1 = arith.constant 0 : i32
    return %arg1, %c0_i32, %c0_i32_0 : i32, i32, i32
  }
  func.func @transform_4(%arg0: i32, %arg1: i32) -> (i32, i32, i32) {
    %c0_i32 = arith.constant 0 : i32
    %c0_i32_0 = arith.constant 0 : i32
    %c0_i32_1 = arith.constant 0 : i32
    return %arg1, %c0_i32, %c0_i32_0 : i32, i32, i32
  }
  func.func @transform_5(%arg0: i32, %arg1: i32) -> (i32, i32, i32) {
    %c0_i32 = arith.constant 0 : i32
    %c0_i32_0 = arith.constant 0 : i32
    %c0_i32_1 = arith.constant 0 : i32
    return %arg1, %c0_i32, %c0_i32_0 : i32, i32, i32
  }
  func.func @transform_6(%arg0: i32, %arg1: i32) -> (i32, i32, i32) {
    %c0_i32 = arith.constant 0 : i32
    %c0_i32_0 = arith.constant 0 : i32
    %c0_i32_1 = arith.constant 0 : i32
    return %arg1, %c0_i32, %c0_i32_0 : i32, i32, i32
  }
  func.func @transform_7(%arg0: i32, %arg1: i32) -> (i32, i32, i32) {
    %c0_i32 = arith.constant 0 : i32
    %c0_i32_0 = arith.constant 0 : i32
    %c0_i32_1 = arith.constant 0 : i32
    return %arg1, %c0_i32, %c0_i32_0 : i32, i32, i32
  }
  func.func @transform_8(%arg0: i32, %arg1: i32) -> (i32, i32, i32) {
    %c0_i32 = arith.constant 0 : i32
    %c0_i32_0 = arith.constant 0 : i32
    %c0_i32_1 = arith.constant 0 : i32
    return %arg0, %c0_i32, %c0_i32_0 : i32, i32, i32
  }
}

</mosaic_0001>

<llo_original>
// kernel: tpu_custom_call.1
$region0: #{tpu_custom_call.1}
  #allocation0 [shape = 'u32[]', space=smem, size = 0x4, offset = 0x4, fixed_abs, tag = 'smem constant byte address 0x4 - core index']
  #allocation1 [shape = 'u32[144,128]{1,0:T(1,128)}', space=vmem, size = 0x12000, scoped, tag = 'internal scratch']
  #allocation2 [shape = 'f32[2,16,256]{2,1,0:T(8,128)}', space=vmem, size = 0x8000, scoped, tag = 'scratch operand']
  %s0 = inlined_call_operand.hbm [shape: f32[2,16,256], index: 0, kind: input, shape index: {}]
  %s1 = inlined_call_operand.hbm [shape: bf16[2,256,768], index: 1, kind: input, shape index: {}]
  %s2 = inlined_call_operand.hbm [shape: f32[2,1,768], index: 2, kind: input, shape index: {}]
  %s3 = inlined_call_operand.hbm [shape: bf16[2,256,256], index: 3, kind: input, shape index: {}]
  %s4 = inlined_call_operand.hbm [shape: bf16[2,256,512], index: 4, kind: input, shape index: {}]
  %s5 = inlined_call_operand.vmem [shape: f32[2,1,512], index: 5, kind: input, shape index: {}]
  %s6 = inlined_call_operand.hbm [shape: bf16[2,512,256], index: 6, kind: input, shape index: {}]
  %s7 = inlined_call_operand.hbm [shape: f32[2,8,256], index: 7, kind: input, shape index: {}]
  %s8 = inlined_call_operand.hbm [shape: bf16[2,16,256], index: 8, kind: output, shape index: {}]
  %s9 = sld [smem:[#allocation0]]
  $region101: #{tpu_custom_call.1} parent=0
    _
  %s11 = ssub.s32 1, %s9
  %s12 = scalar_select 0, %s11, %s9
  $region1: #{tpu_custom_call.1} parent=0
    #allocation3 [shape = 'u8[32768]{0}', space=vmem, size = 0x8000, scoped, tag = 'input window, operand 0, single buffered']
    #allocation4 [shape = 's32[2]{0}', space=sflag, size = 0x8, scoped, tag = 'scoped memory for tpu_custom_call.1']
    #allocation5 [shape = 's32[2]{0}', space=sflag, size = 0x8, scoped, tag = 'scoped memory for tpu_custom_call.1']
    #allocation6 [shape = 'u8[786432]{0}', space=vmem, size = 0xc0000, scoped, tag = 'input window, operand 1']
    #allocation7 [shape = 's32[2]{0}', space=sflag, size = 0x8, scoped, tag = 'scoped memory for tpu_custom_call.1']
    #allocation8 [shape = 'u8[6144]{0}', space=vmem, size = 0x1800, scoped, tag = 'input window, operand 2']
    #allocation9 [shape = 'u8[262144]{0}', space=vmem, size = 0x40000, scoped, tag = 'input window, operand 3']
    #allocation10 [shape = 's32[2]{0}', space=sflag, size = 0x8, scoped, tag = 'scoped memory for tpu_custom_call.1']
    #allocation11 [shape = 'u8[524288]{0}', space=vmem, size = 0x80000, scoped, tag = 'input window, operand 4']
    #allocation12 [shape = 'u8[524288]{0}', space=vmem, size = 0x80000, scoped, tag = 'input window, operand 6']
    #allocation13 [shape = 's32[2]{0}', space=sflag, size = 0x8, scoped, tag = 'scoped memory for tpu_custom_call.1']
    #allocation14 [shape = 'u8[16384]{0}', space=vmem, size = 0x4000, scoped, tag = 'input window, operand 7']
    #allocation15 [shape = 'u8[16384]{0}', space=vmem, size = 0x4000, scoped, tag = 'output window, operand 0, single buffered']
    %13 = vsyncpa [#allocation4], 0
    %14 = vsyncpa [#allocation7], 0
    %s15 = scalar_lea.sflag [#allocation7], 1
    %16 = vsyncpa %s15, 0
    %17 = vsyncpa [#allocation10], 0
    %s18 = scalar_lea.sflag [#allocation10], 1
    %19 = vsyncpa %s18, 0
    %20 = vsyncpa [#allocation13], 0
    %s21 = scalar_lea.sflag [#allocation13], 1
    %22 = vsyncpa %s21, 0
    %23 = vsyncpa [#allocation5], 0
    loop: start=0, step=1, limit=4
    $region2: #{tpu_custom_call.1} parent=1 // loop_pre_header
      _
    $region3: #{tpu_custom_call.1} parent=1 // loop_header
      %s25 = sphi 0, %s29
      %p26 = scmp.ge.s32.totalorder %s25, 4
      %s32 = sphi 0, %s44
      %s33 = sphi 0, %s40
      %s34 = sphi 0, %s32
      %s35 = sphi 0, %s33
      %s36 = sphi 0, %s34
      %s37 = sphi 0, %s35
      %s47 = sphi 0, %s49
      %s50 = sphi 0, %s47
      %s51 = sphi 0, %s50
      %s67 = sphi 0, %s51
      %s73 = sphi 0, %s75
      %s76 = sphi 0, %s73
      %s77 = sphi 0, %s76
      %s93 = sphi 0, %s77
      %s99 = sphi 0, %s101
      %s102 = sphi 0, %s99
      %s103 = sphi 0, %s102
      %s119 = sphi 0, %s103
      %s125 = sphi 0, %s127
      %s128 = sphi 0, %s125
      %s129 = sphi 0, %s128
      %s145 = sphi 0, %s129
      %s151 = sphi 0, %s153
      %s154 = sphi 0, %s151
      %s155 = sphi 0, %s154
      %s171 = sphi 0, %s155
      %s177 = sphi 0, %s179
      %s180 = sphi 0, %s177
      %s181 = sphi 0, %s180
      %s197 = sphi 0, %s181
      %s203 = sphi 0, %s205
      %s206 = sphi 0, %s203
      %s207 = sphi 0, %s206
      %s223 = sphi 0, %s207
      %s229 = sphi 0, %s231
      %s232 = sphi 0, %s229
      %s233 = sphi 0, %s232
      %s249 = sphi 0, %s233
      %s255 = sphi 0, %s257
      %s258 = sphi 0, %s255
      %s259 = sphi 0, %s258
      %s275 = sphi 0, %s259
    $region4: #{tpu_custom_call.1} parent=1 // loop_header_branch
      %28 = sbr.rel (%p26) target = $region8
    $region5: #{tpu_custom_call.1} parent=1 // loop_body
      %s30 = ssub.s32 %s25, 1
      %s31 = ssub.s32 %s25, 2
      %s38 = sadd.s32 1, %s33
      %p39 = scmp.ge.s32.totalorder %s38, 2
      %s40 = scalar_select %p39, 0, %s38
      %s41 = sadd.s32 1, %s32
      %s42 = scalar_select %p39, %s41, %s32
      %p43 = scmp.ge.s32.totalorder %s42, 1
      %s44 = scalar_select %p43, 0, %s42
      %s45 = ssub.s32 %s32, %s44
      %p46 = scmp.eq.s32.totalorder %s45, 0
      %s48 = sadd.s32 %s47, 1
      %s49 = scalar_select %p46, %s47, %s48
      %p52 = pneg %p46
      %p53 = scmp.eq.s32.totalorder %s25, 1
      %p54 = por %p52, %p53
      %p55 = scmp.ne.s32.totalorder %s47, %s50
      %p56 = scmp.eq.s32.totalorder %s25, 0
      %p57 = por %p55, %p56
      %p58 = scmp.ne.s32.totalorder %s47, %s50
      %p59 = scmp.eq.s32.totalorder %s30, 1
      %p60 = por %p58, %p59
      %p61 = scmp.ne.s32.totalorder %s50, %s51
      %p62 = scmp.eq.s32.totalorder %s30, 0
      %p63 = por %p61, %p62
      %p64 = scmp.ne.s32.totalorder %s50, %s51
      %p65 = scmp.eq.s32.totalorder %s31, 1
      %p66 = por %p64, %p65
      %p68 = scmp.ne.s32.totalorder %s51, %s67
      %p69 = scmp.eq.s32.totalorder %s31, 0
      %p70 = por %p68, %p69
      %s71 = ssub.s32 %s33, %s40
      %p72 = scmp.eq.s32.totalorder %s71, 0
      %s74 = sadd.s32 %s73, 1
      %s75 = scalar_select %p72, %s73, %s74
      %p78 = pneg %p72
      %p79 = scmp.eq.s32.totalorder %s25, 1
      %p80 = por %p78, %p79
      %p81 = scmp.ne.s32.totalorder %s73, %s76
      %p82 = scmp.eq.s32.totalorder %s25, 0
      %p83 = por %p81, %p82
      %p84 = scmp.ne.s32.totalorder %s73, %s76
      %p85 = scmp.eq.s32.totalorder %s30, 1
      %p86 = por %p84, %p85
      %p87 = scmp.ne.s32.totalorder %s76, %s77
      %p88 = scmp.eq.s32.totalorder %s30, 0
      %p89 = por %p87, %p88
      %p90 = scmp.ne.s32.totalorder %s76, %s77
      %p91 = scmp.eq.s32.totalorder %s31, 1
      %p92 = por %p90, %p91
      %p94 = scmp.ne.s32.totalorder %s77, %s93
      %p95 = scmp.eq.s32.totalorder %s31, 0
      %p96 = por %p94, %p95
      %s97 = ssub.s32 %s33, %s40
      %p98 = scmp.eq.s32.totalorder %s97, 0
      %s100 = sadd.s32 %s99, 1
      %s101 = scalar_select %p98, %s99, %s100
      %p104 = pneg %p98
      %p105 = scmp.eq.s32.totalorder %s25, 1
      %p106 = por %p104, %p105
      %p107 = scmp.ne.s32.totalorder %s99, %s102
      %p108 = scmp.eq.s32.totalorder %s25, 0
      %p109 = por %p107, %p108
      %p110 = scmp.ne.s32.totalorder %s99, %s102
      %p111 = scmp.eq.s32.totalorder %s30, 1
      %p112 = por %p110, %p111
      %p113 = scmp.ne.s32.totalorder %s102, %s103
      %p114 = scmp.eq.s32.totalorder %s30, 0
      %p115 = por %p113, %p114
      %p116 = scmp.ne.s32.totalorder %s102, %s103
      %p117 = scmp.eq.s32.totalorder %s31, 1
      %p118 = por %p116, %p117
      %p120 = scmp.ne.s32.totalorder %s103, %s119
      %p121 = scmp.eq.s32.totalorder %s31, 0
      %p122 = por %p120, %p121
      %s123 = ssub.s32 %s33, %s40
      %p124 = scmp.eq.s32.totalorder %s123, 0
      %s126 = sadd.s32 %s125, 1
      %s127 = scalar_select %p124, %s125, %s126
      %p130 = pneg %p124
      %p131 = scmp.eq.s32.totalorder %s25, 1
      %p132 = por %p130, %p131
      %p133 = scmp.ne.s32.totalorder %s125, %s128
      %p134 = scmp.eq.s32.totalorder %s25, 0
      %p135 = por %p133, %p134
      %p136 = scmp.ne.s32.totalorder %s125, %s128
      %p137 = scmp.eq.s32.totalorder %s30, 1
      %p138 = por %p136, %p137
      %p139 = scmp.ne.s32.totalorder %s128, %s129
      %p140 = scmp.eq.s32.totalorder %s30, 0
      %p141 = por %p139, %p140
      %p142 = scmp.ne.s32.totalorder %s128, %s129
      %p143 = scmp.eq.s32.totalorder %s31, 1
      %p144 = por %p142, %p143
      %p146 = scmp.ne.s32.totalorder %s129, %s145
      %p147 = scmp.eq.s32.totalorder %s31, 0
      %p148 = por %p146, %p147
      %s149 = ssub.s32 %s33, %s40
      %p150 = scmp.eq.s32.totalorder %s149, 0
      %s152 = sadd.s32 %s151, 1
      %s153 = scalar_select %p150, %s151, %s152
      %p156 = pneg %p150
      %p157 = scmp.eq.s32.totalorder %s25, 1
      %p158 = por %p156, %p157
      %p159 = scmp.ne.s32.totalorder %s151, %s154
      %p160 = scmp.eq.s32.totalorder %s25, 0
      %p161 = por %p159, %p160
      %p162 = scmp.ne.s32.totalorder %s151, %s154
      %p163 = scmp.eq.s32.totalorder %s30, 1
      %p164 = por %p162, %p163
      %p165 = scmp.ne.s32.totalorder %s154, %s155
      %p166 = scmp.eq.s32.totalorder %s30, 0
      %p167 = por %p165, %p166
      %p168 = scmp.ne.s32.totalorder %s154, %s155
      %p169 = scmp.eq.s32.totalorder %s31, 1
      %p170 = por %p168, %p169
      %p172 = scmp.ne.s32.totalorder %s155, %s171
      %p173 = scmp.eq.s32.totalorder %s31, 0
      %p174 = por %p172, %p173
      %s175 = ssub.s32 %s33, %s40
      %p176 = scmp.eq.s32.totalorder %s175, 0
      %s178 = sadd.s32 %s177, 1
      %s179 = scalar_select %p176, %s177, %s178
      %p182 = pneg %p176
      %p183 = scmp.eq.s32.totalorder %s25, 1
      %p184 = por %p182, %p183
      %p185 = scmp.ne.s32.totalorder %s177, %s180
      %p186 = scmp.eq.s32.totalorder %s25, 0
      %p187 = por %p185, %p186
      %p188 = scmp.ne.s32.totalorder %s177, %s180
      %p189 = scmp.eq.s32.totalorder %s30, 1
      %p190 = por %p188, %p189
      %p191 = scmp.ne.s32.totalorder %s180, %s181
      %p192 = scmp.eq.s32.totalorder %s30, 0
      %p193 = por %p191, %p192
      %p194 = scmp.ne.s32.totalorder %s180, %s181
      %p195 = scmp.eq.s32.totalorder %s31, 1
      %p196 = por %p194, %p195
      %p198 = scmp.ne.s32.totalorder %s181, %s197
      %p199 = scmp.eq.s32.totalorder %s31, 0
      %p200 = por %p198, %p199
      %s201 = ssub.s32 %s33, %s40
      %p202 = scmp.eq.s32.totalorder %s201, 0
      %s204 = sadd.s32 %s203, 1
      %s205 = scalar_select %p202, %s203, %s204
      %p208 = pneg %p202
      %p209 = scmp.eq.s32.totalorder %s25, 1
      %p210 = por %p208, %p209
      %p211 = scmp.ne.s32.totalorder %s203, %s206
      %p212 = scmp.eq.s32.totalorder %s25, 0
      %p213 = por %p211, %p212
      %p214 = scmp.ne.s32.totalorder %s203, %s206
      %p215 = scmp.eq.s32.totalorder %s30, 1
      %p216 = por %p214, %p215
      %p217 = scmp.ne.s32.totalorder %s206, %s207
      %p218 = scmp.eq.s32.totalorder %s30, 0
      %p219 = por %p217, %p218
      %p220 = scmp.ne.s32.totalorder %s206, %s207
      %p221 = scmp.eq.s32.totalorder %s31, 1
      %p222 = por %p220, %p221
      %p224 = scmp.ne.s32.totalorder %s207, %s223
      %p225 = scmp.eq.s32.totalorder %s31, 0
      %p226 = por %p224, %p225
      %s227 = ssub.s32 %s33, %s40
      %p228 = scmp.eq.s32.totalorder %s227, 0
      %s230 = sadd.s32 %s229, 1
      %s231 = scalar_select %p228, %s229, %s230
      %p234 = pneg %p228
      %p235 = scmp.eq.s32.totalorder %s25, 1
      %p236 = por %p234, %p235
      %p237 = scmp.ne.s32.totalorder %s229, %s232
      %p238 = scmp.eq.s32.totalorder %s25, 0
      %p239 = por %p237, %p238
      %p240 = scmp.ne.s32.totalorder %s229, %s232
      %p241 = scmp.eq.s32.totalorder %s30, 1
      %p242 = por %p240, %p241
      %p243 = scmp.ne.s32.totalorder %s232, %s233
      %p244 = scmp.eq.s32.totalorder %s30, 0
      %p245 = por %p243, %p244
      %p246 = scmp.ne.s32.totalorder %s232, %s233
      %p247 = scmp.eq.s32.totalorder %s31, 1
      %p248 = por %p246, %p247
      %p250 = scmp.ne.s32.totalorder %s233, %s249
      %p251 = scmp.eq.s32.totalorder %s31, 0
      %p252 = por %p250, %p251
      %s253 = ssub.s32 %s32, %s44
      %p254 = scmp.eq.s32.totalorder %s253, 0
      %s256 = sadd.s32 %s255, 1
      %s257 = scalar_select %p254, %s255, %s256
      %p260 = pneg %p254
      %p261 = scmp.eq.s32.totalorder %s25, 1
      %p262 = por %p260, %p261
      %p263 = scmp.ne.s32.totalorder %s255, %s258
      %p264 = scmp.eq.s32.totalorder %s25, 0
      %p265 = por %p263, %p264
      %p266 = scmp.ne.s32.totalorder %s255, %s258
      %p267 = scmp.eq.s32.totalorder %s30, 1
      %p268 = por %p266, %p267
      %p269 = scmp.ne.s32.totalorder %s258, %s259
      %p270 = scmp.eq.s32.totalorder %s30, 0
      %p271 = por %p269, %p270
      %p272 = scmp.ne.s32.totalorder %s258, %s259
      %p273 = scmp.eq.s32.totalorder %s31, 1
      %p274 = por %p272, %p273
      %p276 = scmp.ne.s32.totalorder %s259, %s275
      %p277 = scmp.eq.s32.totalorder %s31, 0
      %p278 = por %p276, %p277
      %p279 = scmp.le.s32.totalorder 1, %s25
      %p280 = scmp.lt.s32.totalorder %s25, 3
      %p281 = pnand %p279, %p280
      %p282 = pneg %p281
      // Predicated region
      $region9: #{tpu_custom_call.1} parent=5 // pred_check
        _
      $region10: #{tpu_custom_call.1} parent=5 // pred_check_branch
        %284 = sbr.rel (%p281) target = $region12
      $region11: #{tpu_custom_call.1} parent=5 // pred_region
        %s285 = ssub.s32 %s25, 1
        // Predicated region
        $region13: #{tpu_custom_call.1} parent=11 // pred_check
          %p286 = pneg %p63
        $region14: #{tpu_custom_call.1} parent=11 // pred_check_branch
          %288 = sbr.rel (%p286) target = $region16
        $region15: #{tpu_custom_call.1} parent=11 // pred_region
          %s289 = smul.u32 2, %s34
          %s291 = ssub.s32 1024, 1024
          %292 = vsyncadd [#allocation4], %s291
          %s293 = smul.addr %s289, 4
          %s294 = smul.addr %s293, 128
          %s295 = scalar_lea.hbm %s0, %s294
          %s296 = sshll.u32 [#allocation3], 4
          %s297 = int_to_ptr.vmem [resolvable:$true] %s296
          %302 = dma.hbm_to_vmem [thread:$0]  %s295, 1024, %s297, [#allocation4], 256, 256, 16
        $region16: #{tpu_custom_call.1} parent=11 // pred_fallthru
          _
      $region12: #{tpu_custom_call.1} parent=5 // pred_fallthru
        _
      %p303 = scmp.lt.s32.totalorder %s25, 2
      // Predicated region
      $region17: #{tpu_custom_call.1} parent=5 // pred_check
        %p304 = pneg %p303
      $region18: #{tpu_custom_call.1} parent=5 // pred_check_branch
        %306 = sbr.rel (%p304) target = $region20
      $region19: #{tpu_custom_call.1} parent=5 // pred_region
        // Predicated region
        $region21: #{tpu_custom_call.1} parent=19 // pred_check
          %p307 = pneg %p83
        $region22: #{tpu_custom_call.1} parent=19 // pred_check_branch
          %309 = sbr.rel (%p307) target = $region24
        $region23: #{tpu_custom_call.1} parent=19 // pred_region
          %s310 = sand.u32 %s25, 1
          %s311 = scalar_lea.sflag [#allocation7], %s310
          %s312 = sand.u32 %s73, 1
          %s313 = smul.addr %s312, 768
          %s314 = scalar_lea.vmem [#allocation6], %s313
          %s316 = ssub.s32 12288, 12288
          %317 = vsyncadd %s311, %s316
          %s318 = smul.addr %s33, 192
          %s319 = smul.addr %s318, 64
          %s320 = scalar_lea.hbm %s1, %s319
          %s321 = sshll.u32 %s314, 4
          %s322 = int_to_ptr.vmem [resolvable:$true] %s321
          %327 = dma.hbm_to_vmem [thread:$0]  %s320, 12288, %s322, %s311, 384, 384, 24
        $region24: #{tpu_custom_call.1} parent=19 // pred_fallthru
          _
        // Predicated region
        $region25: #{tpu_custom_call.1} parent=19 // pred_check
          %p328 = pneg %p109
        $region26: #{tpu_custom_call.1} parent=19 // pred_check_branch
          %330 = sbr.rel (%p328) target = $region28
        $region27: #{tpu_custom_call.1} parent=19 // pred_region
          %s331 = sand.u32 %s25, 1
          %s332 = scalar_lea.sflag [#allocation7], %s331
          %s333 = sand.u32 %s99, 1
          %s334 = smul.addr %s333, 6
          %s335 = scalar_lea.vmem [#allocation8], %s334
          %s337 = ssub.s32 96, 96
          %338 = vsyncadd %s332, %s337
          %s339 = smul.addr %s33, 6
          %s340 = smul.addr %s339, 16
          %s341 = scalar_lea.hbm %s2, %s340
          %s343 = sshll.u32 %s335, 4
          %s344 = int_to_ptr.vmem [resolvable:$true] %s343
          %346 = dma.hbm_to_vmem [thread:$0]  %s341, 96, %s344, %s332
        $region28: #{tpu_custom_call.1} parent=19 // pred_fallthru
          _
        // Predicated region
        $region29: #{tpu_custom_call.1} parent=19 // pred_check
          %p347 = pneg %p135
        $region30: #{tpu_custom_call.1} parent=19 // pred_check_branch
          %349 = sbr.rel (%p347) target = $region32
        $region31: #{tpu_custom_call.1} parent=19 // pred_region
          %s350 = sand.u32 %s25, 1
          %s351 = scalar_lea.sflag [#allocation10], %s350
          %s352 = sand.u32 %s125, 1
          %s353 = smul.addr %s352, 256
          %s354 = scalar_lea.vmem [#allocation9], %s353
          %s356 = ssub.s32 4096, 4096
          %357 = vsyncadd %s351, %s356
          %s358 = smul.addr %s33, 64
          %s359 = smul.addr %s358, 64
          %s360 = scalar_lea.hbm %s3, %s359
          %s361 = sshll.u32 %s354, 4
          %s362 = int_to_ptr.vmem [resolvable:$true] %s361
          %367 = dma.hbm_to_vmem [thread:$0]  %s360, 4096, %s362, %s351, 128, 128, 8
        $region32: #{tpu_custom_call.1} parent=19 // pred_fallthru
          _
        // Predicated region
        $region33: #{tpu_custom_call.1} parent=19 // pred_check
          %p368 = pneg %p161
        $region34: #{tpu_custom_call.1} parent=19 // pred_check_branch
          %370 = sbr.rel (%p368) target = $region36
        $region35: #{tpu_custom_call.1} parent=19 // pred_region
          %s371 = sand.u32 %s25, 1
          %s372 = scalar_lea.sflag [#allocation10], %s371
          %s373 = sand.u32 %s151, 1
          %s374 = smul.addr %s373, 512
          %s375 = scalar_lea.vmem [#allocation11], %s374
          %s377 = ssub.s32 8192, 8192
          %378 = vsyncadd %s372, %s377
          %s379 = smul.addr %s33, 128
          %s380 = smul.addr %s379, 64
          %s381 = scalar_lea.hbm %s4, %s380
          %s382 = sshll.u32 %s375, 4
          %s383 = int_to_ptr.vmem [resolvable:$true] %s382
          %388 = dma.hbm_to_vmem [thread:$0]  %s381, 8192, %s383, %s372, 256, 256, 16
        $region36: #{tpu_custom_call.1} parent=19 // pred_fallthru
          _
        // Predicated region
        $region37: #{tpu_custom_call.1} parent=19 // pred_check
          %p389 = pneg %p187
        $region38: #{tpu_custom_call.1} parent=19 // pred_check_branch
          %391 = sbr.rel (%p389) target = $region40
        $region39: #{tpu_custom_call.1} parent=19 // pred_region
          %p392 = scmp.lt.s32.totalorder %s33, 1
          %s393 = scalar_select %p392, %s33, 1
          %s394 = smul.addr %s393, 4
          %s395 = scalar_lea.vmem %s5, %s394
        $region40: #{tpu_custom_call.1} parent=19 // pred_fallthru
          _
        // Predicated region
        $region41: #{tpu_custom_call.1} parent=19 // pred_check
          %p396 = pneg %p213
        $region42: #{tpu_custom_call.1} parent=19 // pred_check_branch
          %398 = sbr.rel (%p396) target = $region44
        $region43: #{tpu_custom_call.1} parent=19 // pred_region
          %s399 = sand.u32 %s25, 1
          %s400 = scalar_lea.sflag [#allocation13], %s399
          %s401 = sand.u32 %s203, 1
          %s402 = smul.addr %s401, 512
          %s403 = scalar_lea.vmem [#allocation12], %s402
          %s405 = ssub.s32 8192, 8192
          %406 = vsyncadd %s400, %s405
          %s407 = smul.addr %s33, 128
          %s408 = smul.addr %s407, 64
          %s409 = scalar_lea.hbm %s6, %s408
          %s410 = sshll.u32 %s403, 4
          %s411 = int_to_ptr.vmem [resolvable:$true] %s410
          %416 = dma.hbm_to_vmem [thread:$0]  %s409, 8192, %s411, %s400, 128, 128, 8
        $region44: #{tpu_custom_call.1} parent=19 // pred_fallthru
          _
        // Predicated region
        $region45: #{tpu_custom_call.1} parent=19 // pred_check
          %p417 = pneg %p239
        $region46: #{tpu_custom_call.1} parent=19 // pred_check_branch
          %419 = sbr.rel (%p417) target = $region48
        $region47: #{tpu_custom_call.1} parent=19 // pred_region
          %s420 = sand.u32 %s25, 1
          %s421 = scalar_lea.sflag [#allocation13], %s420
          %s422 = sand.u32 %s229, 1
          %s423 = smul.addr %s422, 16
          %s424 = scalar_lea.vmem [#allocation14], %s423
          %s426 = ssub.s32 256, 256
          %427 = vsyncadd %s421, %s426
          %s428 = smul.addr %s33, 2
          %s429 = smul.addr %s428, 128
          %s430 = scalar_lea.hbm %s7, %s429
          %s432 = sshll.u32 %s424, 4
          %s433 = int_to_ptr.vmem [resolvable:$true] %s432
          %435 = dma.hbm_to_vmem [thread:$0]  %s430, 256, %s433, %s421
        $region48: #{tpu_custom_call.1} parent=19 // pred_fallthru
          _
      $region20: #{tpu_custom_call.1} parent=5 // pred_fallthru
        _
      %p436 = scmp.le.s32.totalorder 1, %s25
      %p437 = scmp.lt.s32.totalorder %s25, 3
      %p438 = pnand %p436, %p437
      %p439 = pneg %p438
      // Predicated region
      $region49: #{tpu_custom_call.1} parent=5 // pred_check
        _
      $region50: #{tpu_custom_call.1} parent=5 // pred_check_branch
        %441 = sbr.rel (%p438) target = $region52
      $region51: #{tpu_custom_call.1} parent=5 // pred_region
        %s442 = ssub.s32 %s25, 1
        // Predicated region
        $region53: #{tpu_custom_call.1} parent=51 // pred_check
          %p443 = pneg %p63
        $region54: #{tpu_custom_call.1} parent=51 // pred_check_branch
          %445 = sbr.rel (%p443) target = $region56
        $region55: #{tpu_custom_call.1} parent=51 // pred_region
          %446 = dma.done [#allocation4], 1024
        $region56: #{tpu_custom_call.1} parent=51 // pred_fallthru
          _
        %s447 = sand.u32 %s30, 1
        %s448 = scalar_lea.sflag [#allocation7], %s447
        %s449 = sand.u32 %s76, 1
        %s450 = smul.addr %s449, 768
        %s451 = scalar_lea.vmem [#allocation6], %s450
        // Predicated region
        $region57: #{tpu_custom_call.1} parent=51 // pred_check
          %p452 = pneg %p89
        $region58: #{tpu_custom_call.1} parent=51 // pred_check_branch
          %454 = sbr.rel (%p452) target = $region60
        $region59: #{tpu_custom_call.1} parent=51 // pred_region
          %455 = dma.done %s448, 12288
        $region60: #{tpu_custom_call.1} parent=51 // pred_fallthru
          _
        %s456 = sand.u32 %s30, 1
        %s457 = scalar_lea.sflag [#allocation7], %s456
        %s458 = sand.u32 %s102, 1
        %s459 = smul.addr %s458, 6
        %s460 = scalar_lea.vmem [#allocation8], %s459
        // Predicated region
        $region61: #{tpu_custom_call.1} parent=51 // pred_check
          %p461 = pneg %p115
        $region62: #{tpu_custom_call.1} parent=51 // pred_check_branch
          %463 = sbr.rel (%p461) target = $region64
        $region63: #{tpu_custom_call.1} parent=51 // pred_region
          %464 = dma.done %s457, 96
        $region64: #{tpu_custom_call.1} parent=51 // pred_fallthru
          _
        %s465 = sand.u32 %s30, 1
        %s466 = scalar_lea.sflag [#allocation10], %s465
        %s467 = sand.u32 %s128, 1
        %s468 = smul.addr %s467, 256
        %s469 = scalar_lea.vmem [#allocation9], %s468
        // Predicated region
        $region65: #{tpu_custom_call.1} parent=51 // pred_check
          %p470 = pneg %p141
        $region66: #{tpu_custom_call.1} parent=51 // pred_check_branch
          %472 = sbr.rel (%p470) target = $region68
        $region67: #{tpu_custom_call.1} parent=51 // pred_region
          %473 = dma.done %s466, 4096
        $region68: #{tpu_custom_call.1} parent=51 // pred_fallthru
          _
        %s474 = sand.u32 %s30, 1
        %s475 = scalar_lea.sflag [#allocation10], %s474
        %s476 = sand.u32 %s154, 1
        %s477 = smul.addr %s476, 512
        %s478 = scalar_lea.vmem [#allocation11], %s477
        // Predicated region
        $region69: #{tpu_custom_call.1} parent=51 // pred_check
          %p479 = pneg %p167
        $region70: #{tpu_custom_call.1} parent=51 // pred_check_branch
          %481 = sbr.rel (%p479) target = $region72
        $region71: #{tpu_custom_call.1} parent=51 // pred_region
          %482 = dma.done %s475, 8192
        $region72: #{tpu_custom_call.1} parent=51 // pred_fallthru
          _
        %s483 = sand.u32 %s30, 1
        %s484 = scalar_lea.sflag [#allocation13], %s483
        %s485 = sand.u32 %s206, 1
        %s486 = smul.addr %s485, 512
        %s487 = scalar_lea.vmem [#allocation12], %s486
        // Predicated region
        $region73: #{tpu_custom_call.1} parent=51 // pred_check
          %p488 = pneg %p219
        $region74: #{tpu_custom_call.1} parent=51 // pred_check_branch
          %490 = sbr.rel (%p488) target = $region76
        $region75: #{tpu_custom_call.1} parent=51 // pred_region
          %491 = dma.done %s484, 8192
        $region76: #{tpu_custom_call.1} parent=51 // pred_fallthru
          _
        %s492 = sand.u32 %s30, 1
        %s493 = scalar_lea.sflag [#allocation13], %s492
        %s494 = sand.u32 %s232, 1
        %s495 = smul.addr %s494, 16
        %s496 = scalar_lea.vmem [#allocation14], %s495
        // Predicated region
        $region77: #{tpu_custom_call.1} parent=51 // pred_check
          %p497 = pneg %p245
        $region78: #{tpu_custom_call.1} parent=51 // pred_check_branch
          %499 = sbr.rel (%p497) target = $region80
        $region79: #{tpu_custom_call.1} parent=51 // pred_region
          %500 = dma.done %s493, 256
        $region80: #{tpu_custom_call.1} parent=51 // pred_fallthru
          _
        %p501 = pneg %p63
        %p502 = pneg %p60
        %s503 = sand.u32 %s30, 1
        %s504 = scalar_lea.sflag [#allocation7], %s503
        %s505 = sand.u32 %s76, 1
        %s506 = smul.addr %s505, 768
        %s507 = scalar_lea.vmem [#allocation6], %s506
        %p508 = pneg %p89
        %p509 = pneg %p86
        %s510 = sand.u32 %s30, 1
        %s511 = scalar_lea.sflag [#allocation7], %s510
        %s512 = sand.u32 %s102, 1
        %s513 = smul.addr %s512, 6
        %s514 = scalar_lea.vmem [#allocation8], %s513
        %p515 = pneg %p115
        %p516 = pneg %p112
        %s517 = sand.u32 %s30, 1
        %s518 = scalar_lea.sflag [#allocation10], %s517
        %s519 = sand.u32 %s128, 1
        %s520 = smul.addr %s519, 256
        %s521 = scalar_lea.vmem [#allocation9], %s520
        %p522 = pneg %p141
        %p523 = pneg %p138
        %s524 = sand.u32 %s30, 1
        %s525 = scalar_lea.sflag [#allocation10], %s524
        %s526 = sand.u32 %s154, 1
        %s527 = smul.addr %s526, 512
        %s528 = scalar_lea.vmem [#allocation11], %s527
        %p529 = pneg %p167
        %p530 = pneg %p164
        %p531 = scmp.lt.s32.totalorder %s35, 1
        %s532 = scalar_select %p531, %s35, 1
        %s533 = smul.addr %s532, 4
        %s534 = scalar_lea.vmem %s5, %s533
        %p535 = pneg %p193
        %p536 = pneg %p190
        %s537 = sand.u32 %s30, 1
        %s538 = scalar_lea.sflag [#allocation13], %s537
        %s539 = sand.u32 %s206, 1
        %s540 = smul.addr %s539, 512
        %s541 = scalar_lea.vmem [#allocation12], %s540
        %p542 = pneg %p219
        %p543 = pneg %p216
        %s544 = sand.u32 %s30, 1
        %s545 = scalar_lea.sflag [#allocation13], %s544
        %s546 = sand.u32 %s232, 1
        %s547 = smul.addr %s546, 16
        %s548 = scalar_lea.vmem [#allocation14], %s547
        %p549 = pneg %p245
        %p550 = pneg %p242
        %p551 = pneg %p271
        %p552 = pneg %p268
        %s553 = smul.u32 2, %s34
        %p554 = scmp.lt.s32.totalorder %s35, 1
        %s555 = scalar_select %p554, %s35, 1
        %s556 = smul.addr %s555, 4
        %s557 = scalar_lea.vmem %s5, %s556
        %s558 = smul.u32 2, %s34
        %p560 = scmp.eq.s32.totalorder %s35, 0
        // Predicated region
        $region81: #{tpu_custom_call.1} parent=51 // pred_check
          %p561 = pneg %p560
        $region82: #{tpu_custom_call.1} parent=51 // pred_check_branch
          %563 = sbr.rel (%p561) target = $region84
        $region83: #{tpu_custom_call.1} parent=51 // pred_region
          %v564 = vld [vmem:[#allocation3] sm:$0xff]
          %v565 = vld [vmem:[#allocation3 + $0x8] sm:$0xff]
          %v566 = vld [vmem:[#allocation3 + $0x10] sm:$0xff]
          %v567 = vld [vmem:[#allocation3 + $0x18] sm:$0xff]
          %v568 = vld [vmem:[#allocation3 + $0x20] sm:$0xff]
          %v569 = vld [vmem:[#allocation3 + $0x28] sm:$0xff]
          %v570 = vld [vmem:[#allocation3 + $0x30] sm:$0xff]
          %v571 = vld [vmem:[#allocation3 + $0x38] sm:$0xff]
          %572 = vst [vmem:[#allocation2] sm:$0xff] %v564
          %573 = vst [vmem:[#allocation2 + $0x8] sm:$0xff] %v565
          %574 = vst [vmem:[#allocation2 + $0x10] sm:$0xff] %v566
          %575 = vst [vmem:[#allocation2 + $0x18] sm:$0xff] %v567
          %576 = vst [vmem:[#allocation2 + $0x20] sm:$0xff] %v568
          %577 = vst [vmem:[#allocation2 + $0x28] sm:$0xff] %v569
          %578 = vst [vmem:[#allocation2 + $0x30] sm:$0xff] %v570
          %579 = vst [vmem:[#allocation2 + $0x38] sm:$0xff] %v571
        $region84: #{tpu_custom_call.1} parent=51 // pred_fallthru
          _
        %v580 = vld [vmem:[#allocation2] sm:$0xff]
        %v581 = vld [vmem:[#allocation2 + $0x8] sm:$0xff]
        %v582 = vld [vmem:[#allocation2 + $0x10] sm:$0xff]
        %v583 = vld [vmem:[#allocation2 + $0x18] sm:$0xff]
        %v584 = vld [vmem:[#allocation2 + $0x20] sm:$0xff]
        %v585 = vld [vmem:[#allocation2 + $0x28] sm:$0xff]
        %v586 = vld [vmem:[#allocation2 + $0x30] sm:$0xff]
        %v587 = vld [vmem:[#allocation2 + $0x38] sm:$0xff]
        %v588 = vpack.c.bf16 %v582, %v580
        %v589 = vpack.c.bf16 %v583, %v581
        %v590 = vpack.c.bf16 %v586, %v584
        %v591 = vpack.c.bf16 %v587, %v585
        %v592 = vld [vmem:[%s496] sm:$0xff]
        %v593 = vld [vmem:[%s496 + $0x8] sm:$0xff]
        %v594 = vld [vmem:[%s451] sm:$0xff]
        %v595 = vld [vmem:[%s451 + $0x8] sm:$0xff]
        %v596 = vld [vmem:[%s451 + $0x10] sm:$0xff]
        %v597 = vld [vmem:[%s451 + $0x18] sm:$0xff]
        %v598 = vld [vmem:[%s451 + $0x20] sm:$0xff]
        %v599 = vld [vmem:[%s451 + $0x28] sm:$0xff]
        %v600 = vld [vmem:[%s451 + $0x30] sm:$0xff]
        %v601 = vld [vmem:[%s451 + $0x38] sm:$0xff]
        %v602 = vld [vmem:[%s451 + $0x40] sm:$0xff]
        %v603 = vld [vmem:[%s451 + $0x48] sm:$0xff]
        %v604 = vld [vmem:[%s451 + $0x50] sm:$0xff]
        %v605 = vld [vmem:[%s451 + $0x58] sm:$0xff]
        %v606 = vld [vmem:[%s451 + $0x60] sm:$0xff]
        %v607 = vld [vmem:[%s451 + $0x68] sm:$0xff]
        %v608 = vld [vmem:[%s451 + $0x70] sm:$0xff]
        %v609 = vld [vmem:[%s451 + $0x78] sm:$0xff]
        %v610 = vld [vmem:[%s451 + $0x80] sm:$0xff]
        %v611 = vld [vmem:[%s451 + $0x88] sm:$0xff]
        %v612 = vld [vmem:[%s451 + $0x90] sm:$0xff]
        %v613 = vld [vmem:[%s451 + $0x98] sm:$0xff]
        %v614 = vld [vmem:[%s451 + $0xa0] sm:$0xff]
        %v615 = vld [vmem:[%s451 + $0xa8] sm:$0xff]
        %v616 = vld [vmem:[%s451 + $0xb0] sm:$0xff]
        %v617 = vld [vmem:[%s451 + $0xb8] sm:$0xff]
        %v618 = vld [vmem:[%s451 + $0xc0] sm:$0xff]
        %v619 = vld [vmem:[%s451 + $0xc8] sm:$0xff]
        %v620 = vld [vmem:[%s451 + $0xd0] sm:$0xff]
        %v621 = vld [vmem:[%s451 + $0xd8] sm:$0xff]
        %v622 = vld [vmem:[%s451 + $0xe0] sm:$0xff]
        %v623 = vld [vmem:[%s451 + $0xe8] sm:$0xff]
        %v624 = vld [vmem:[%s451 + $0xf0] sm:$0xff]
        %v625 = vld [vmem:[%s451 + $0xf8] sm:$0xff]
        %v626 = vld [vmem:[%s451 + $0x100] sm:$0xff]
        %v627 = vld [vmem:[%s451 + $0x108] sm:$0xff]
        %v628 = vld [vmem:[%s451 + $0x110] sm:$0xff]
        %v629 = vld [vmem:[%s451 + $0x118] sm:$0xff]
        %v630 = vld [vmem:[%s451 + $0x120] sm:$0xff]
        %v631 = vld [vmem:[%s451 + $0x128] sm:$0xff]
        %v632 = vld [vmem:[%s451 + $0x130] sm:$0xff]
        %v633 = vld [vmem:[%s451 + $0x138] sm:$0xff]
        %v634 = vld [vmem:[%s451 + $0x140] sm:$0xff]
        %v635 = vld [vmem:[%s451 + $0x148] sm:$0xff]
        %v636 = vld [vmem:[%s451 + $0x150] sm:$0xff]
        %v637 = vld [vmem:[%s451 + $0x158] sm:$0xff]
        %v638 = vld [vmem:[%s451 + $0x160] sm:$0xff]
        %v639 = vld [vmem:[%s451 + $0x168] sm:$0xff]
        %v640 = vld [vmem:[%s451 + $0x170] sm:$0xff]
        %v641 = vld [vmem:[%s451 + $0x178] sm:$0xff]
        %v642 = vld [vmem:[%s451 + $0x180] sm:$0xff]
        %v643 = vld [vmem:[%s451 + $0x188] sm:$0xff]
        %v644 = vld [vmem:[%s451 + $0x190] sm:$0xff]
        %v645 = vld [vmem:[%s451 + $0x198] sm:$0xff]
        %v646 = vld [vmem:[%s451 + $0x1a0] sm:$0xff]
        %v647 = vld [vmem:[%s451 + $0x1a8] sm:$0xff]
        %v648 = vld [vmem:[%s451 + $0x1b0] sm:$0xff]
        %v649 = vld [vmem:[%s451 + $0x1b8] sm:$0xff]
        %v650 = vld [vmem:[%s451 + $0x1c0] sm:$0xff]
        %v651 = vld [vmem:[%s451 + $0x1c8] sm:$0xff]
        %v652 = vld [vmem:[%s451 + $0x1d0] sm:$0xff]
        %v653 = vld [vmem:[%s451 + $0x1d8] sm:$0xff]
        %v654 = vld [vmem:[%s451 + $0x1e0] sm:$0xff]
        %v655 = vld [vmem:[%s451 + $0x1e8] sm:$0xff]
        %v656 = vld [vmem:[%s451 + $0x1f0] sm:$0xff]
        %v657 = vld [vmem:[%s451 + $0x1f8] sm:$0xff]
        %v658 = vld [vmem:[%s451 + $0x200] sm:$0xff]
        %v659 = vld [vmem:[%s451 + $0x208] sm:$0xff]
        %v660 = vld [vmem:[%s451 + $0x210] sm:$0xff]
        %v661 = vld [vmem:[%s451 + $0x218] sm:$0xff]
        %v662 = vld [vmem:[%s451 + $0x220] sm:$0xff]
        %v663 = vld [vmem:[%s451 + $0x228] sm:$0xff]
        %v664 = vld [vmem:[%s451 + $0x230] sm:$0xff]
        %v665 = vld [vmem:[%s451 + $0x238] sm:$0xff]
        %v666 = vld [vmem:[%s451 + $0x240] sm:$0xff]
        %v667 = vld [vmem:[%s451 + $0x248] sm:$0xff]
        %v668 = vld [vmem:[%s451 + $0x250] sm:$0xff]
        %v669 = vld [vmem:[%s451 + $0x258] sm:$0xff]
        %v670 = vld [vmem:[%s451 + $0x260] sm:$0xff]
        %v671 = vld [vmem:[%s451 + $0x268] sm:$0xff]
        %v672 = vld [vmem:[%s451 + $0x270] sm:$0xff]
        %v673 = vld [vmem:[%s451 + $0x278] sm:$0xff]
        %v674 = vld [vmem:[%s451 + $0x280] sm:$0xff]
        %v675 = vld [vmem:[%s451 + $0x288] sm:$0xff]
        %v676 = vld [vmem:[%s451 + $0x290] sm:$0xff]
        %v677 = vld [vmem:[%s451 + $0x298] sm:$0xff]
        %v678 = vld [vmem:[%s451 + $0x2a0] sm:$0xff]
        %v679 = vld [vmem:[%s451 + $0x2a8] sm:$0xff]
        %v680 = vld [vmem:[%s451 + $0x2b0] sm:$0xff]
        %v681 = vld [vmem:[%s451 + $0x2b8] sm:$0xff]
        %v682 = vld [vmem:[%s451 + $0x2c0] sm:$0xff]
        %v683 = vld [vmem:[%s451 + $0x2c8] sm:$0xff]
        %v684 = vld [vmem:[%s451 + $0x2d0] sm:$0xff]
        %v685 = vld [vmem:[%s451 + $0x2d8] sm:$0xff]
        %v686 = vld [vmem:[%s451 + $0x2e0] sm:$0xff]
        %v687 = vld [vmem:[%s451 + $0x2e8] sm:$0xff]
        %v688 = vld [vmem:[%s451 + $0x2f0] sm:$0xff]
        %v689 = vld [vmem:[%s451 + $0x2f8] sm:$0xff]
        %v690 = vld [vmem:[%s460] sm:$0x3f]
        %v692 = vlaneseq
        %v693 = vshrl.u32 %v692, 7
        %v694 = vsub.s32 0, %v693
        %v695 = vrot.slane %v690, %v694
        %v696 = vlaneseq
        %v697 = vshrl.u32 %v696, 7
        %v698 = vsub.s32 1, %v697
        %v699 = vrot.slane %v690, %v698
        %v700 = vlaneseq
        %v701 = vshrl.u32 %v700, 7
        %v702 = vsub.s32 2, %v701
        %v703 = vrot.slane %v690, %v702
        %v704 = vlaneseq
        %v705 = vshrl.u32 %v704, 7
        %v706 = vsub.s32 3, %v705
        %v707 = vrot.slane %v690, %v706
        %v708 = vlaneseq
        %v709 = vshrl.u32 %v708, 7
        %v710 = vsub.s32 4, %v709
        %v711 = vrot.slane %v690, %v710
        %v712 = vlaneseq
        %v713 = vshrl.u32 %v712, 7
        %v714 = vsub.s32 5, %v713
        %v715 = vrot.slane %v690, %v714
        %v818 = vunpack.c.l.b16 %v594
        %v819 = vunpack.c.h.b16 %v594
        %v820 = vunpack.c.l.b16 %v595
        %v821 = vunpack.c.h.b16 %v595
        %v822 = vunpack.c.l.b16 %v596
        %v823 = vunpack.c.h.b16 %v596
        %v824 = vunpack.c.l.b16 %v597
        %v825 = vunpack.c.h.b16 %v597
        %v826 = vunpack.c.l.b16 %v598
        %v827 = vunpack.c.h.b16 %v598
        %v828 = vunpack.c.l.b16 %v599
        %v829 = vunpack.c.h.b16 %v599
        %v830 = vunpack.c.l.b16 %v600
        %v831 = vunpack.c.h.b16 %v600
        %v832 = vunpack.c.l.b16 %v601
        %v833 = vunpack.c.h.b16 %v601
        %v834 = vunpack.c.l.b16 %v602
        %v835 = vunpack.c.h.b16 %v602
        %v836 = vunpack.c.l.b16 %v603
        %v837 = vunpack.c.h.b16 %v603
        %v838 = vunpack.c.l.b16 %v604
        %v839 = vunpack.c.h.b16 %v604
        %v840 = vunpack.c.l.b16 %v605
        %v841 = vunpack.c.h.b16 %v605
        %v842 = vunpack.c.l.b16 %v606
        %v843 = vunpack.c.h.b16 %v606
        %v844 = vunpack.c.l.b16 %v607
        %v845 = vunpack.c.h.b16 %v607
        %v846 = vunpack.c.l.b16 %v608
        %v847 = vunpack.c.h.b16 %v608
        %v848 = vunpack.c.l.b16 %v609
        %v849 = vunpack.c.h.b16 %v609
        %v850 = vunpack.c.l.b16 %v610
        %v851 = vunpack.c.h.b16 %v610
        %v852 = vunpack.c.l.b16 %v611
        %v853 = vunpack.c.h.b16 %v611
        %v854 = vunpack.c.l.b16 %v612
        %v855 = vunpack.c.h.b16 %v612
        %v856 = vunpack.c.l.b16 %v613
        %v857 = vunpack.c.h.b16 %v613
        %v858 = vunpack.c.l.b16 %v614
        %v859 = vunpack.c.h.b16 %v614
        %v860 = vunpack.c.l.b16 %v615
        %v861 = vunpack.c.h.b16 %v615
        %v862 = vunpack.c.l.b16 %v616
        %v863 = vunpack.c.h.b16 %v616
        %v864 = vunpack.c.l.b16 %v617
        %v865 = vunpack.c.h.b16 %v617
        %v866 = vunpack.c.l.b16 %v618
        %v867 = vunpack.c.h.b16 %v618
        %v868 = vunpack.c.l.b16 %v619
        %v869 = vunpack.c.h.b16 %v619
        %v870 = vunpack.c.l.b16 %v620
        %v871 = vunpack.c.h.b16 %v620
        %v872 = vunpack.c.l.b16 %v621
        %v873 = vunpack.c.h.b16 %v621
        %v874 = vunpack.c.l.b16 %v622
        %v875 = vunpack.c.h.b16 %v622
        %v876 = vunpack.c.l.b16 %v623
        %v877 = vunpack.c.h.b16 %v623
        %v878 = vunpack.c.l.b16 %v624
        %v879 = vunpack.c.h.b16 %v624
        %v880 = vunpack.c.l.b16 %v625
        %v881 = vunpack.c.h.b16 %v625
        %v882 = vunpack.c.l.b16 %v626
        %v883 = vunpack.c.h.b16 %v626
        %v884 = vunpack.c.l.b16 %v627
        %v885 = vunpack.c.h.b16 %v627
        %v886 = vunpack.c.l.b16 %v628
        %v887 = vunpack.c.h.b16 %v628
        %v888 = vunpack.c.l.b16 %v629
        %v889 = vunpack.c.h.b16 %v629
        %v890 = vunpack.c.l.b16 %v630
        %v891 = vunpack.c.h.b16 %v630
        %v892 = vunpack.c.l.b16 %v631
        %v893 = vunpack.c.h.b16 %v631
        %v894 = vunpack.c.l.b16 %v632
        %v895 = vunpack.c.h.b16 %v632
        %v896 = vunpack.c.l.b16 %v633
        %v897 = vunpack.c.h.b16 %v633
        %v898 = vunpack.c.l.b16 %v634
        %v899 = vunpack.c.h.b16 %v634
        %v900 = vunpack.c.l.b16 %v635
        %v901 = vunpack.c.h.b16 %v635
        %v902 = vunpack.c.l.b16 %v636
        %v903 = vunpack.c.h.b16 %v636
        %v904 = vunpack.c.l.b16 %v637
        %v905 = vunpack.c.h.b16 %v637
        %v906 = vunpack.c.l.b16 %v638
        %v907 = vunpack.c.h.b16 %v638
        %v908 = vunpack.c.l.b16 %v639
        %v909 = vunpack.c.h.b16 %v639
        %v910 = vunpack.c.l.b16 %v640
        %v911 = vunpack.c.h.b16 %v640
        %v912 = vunpack.c.l.b16 %v641
        %v913 = vunpack.c.h.b16 %v641
        %v914 = vunpack.c.l.b16 %v642
        %v915 = vunpack.c.h.b16 %v642
        %v916 = vunpack.c.l.b16 %v643
        %v917 = vunpack.c.h.b16 %v643
        %v918 = vunpack.c.l.b16 %v644
        %v919 = vunpack.c.h.b16 %v644
        %v920 = vunpack.c.l.b16 %v645
        %v921 = vunpack.c.h.b16 %v645
        %v922 = vunpack.c.l.b16 %v646
        %v923 = vunpack.c.h.b16 %v646
        %v924 = vunpack.c.l.b16 %v647
        %v925 = vunpack.c.h.b16 %v647
        %v926 = vunpack.c.l.b16 %v648
        %v927 = vunpack.c.h.b16 %v648
        %v928 = vunpack.c.l.b16 %v649
        %v929 = vunpack.c.h.b16 %v649
        %v930 = vunpack.c.l.b16 %v650
        %v931 = vunpack.c.h.b16 %v650
        %v932 = vunpack.c.l.b16 %v651
        %v933 = vunpack.c.h.b16 %v651
        %v934 = vunpack.c.l.b16 %v652
        %v935 = vunpack.c.h.b16 %v652
        %v936 = vunpack.c.l.b16 %v653
        %v937 = vunpack.c.h.b16 %v653
        %v938 = vunpack.c.l.b16 %v654
        %v939 = vunpack.c.h.b16 %v654
        %v940 = vunpack.c.l.b16 %v655
        %v941 = vunpack.c.h.b16 %v655
        %v942 = vunpack.c.l.b16 %v656
        %v943 = vunpack.c.h.b16 %v656
        %v944 = vunpack.c.l.b16 %v657
        %v945 = vunpack.c.h.b16 %v657
        %v946 = vunpack.c.l.b16 %v658
        %v947 = vunpack.c.h.b16 %v658
        %v948 = vunpack.c.l.b16 %v659
        %v949 = vunpack.c.h.b16 %v659
        %v950 = vunpack.c.l.b16 %v660
        %v951 = vunpack.c.h.b16 %v660
        %v952 = vunpack.c.l.b16 %v661
        %v953 = vunpack.c.h.b16 %v661
        %v954 = vunpack.c.l.b16 %v662
        %v955 = vunpack.c.h.b16 %v662
        %v956 = vunpack.c.l.b16 %v663
        %v957 = vunpack.c.h.b16 %v663
        %v958 = vunpack.c.l.b16 %v664
        %v959 = vunpack.c.h.b16 %v664
        %v960 = vunpack.c.l.b16 %v665
        %v961 = vunpack.c.h.b16 %v665
        %v962 = vunpack.c.l.b16 %v666
        %v963 = vunpack.c.h.b16 %v666
        %v964 = vunpack.c.l.b16 %v667
        %v965 = vunpack.c.h.b16 %v667
        %v966 = vunpack.c.l.b16 %v668
        %v967 = vunpack.c.h.b16 %v668
        %v968 = vunpack.c.l.b16 %v669
        %v969 = vunpack.c.h.b16 %v669
        %v970 = vunpack.c.l.b16 %v670
        %v971 = vunpack.c.h.b16 %v670
        %v972 = vunpack.c.l.b16 %v671
        %v973 = vunpack.c.h.b16 %v671
        %v974 = vunpack.c.l.b16 %v672
        %v975 = vunpack.c.h.b16 %v672
        %v976 = vunpack.c.l.b16 %v673
        %v977 = vunpack.c.h.b16 %v673
        %v978 = vunpack.c.l.b16 %v674
        %v979 = vunpack.c.h.b16 %v674
        %v980 = vunpack.c.l.b16 %v675
        %v981 = vunpack.c.h.b16 %v675
        %v982 = vunpack.c.l.b16 %v676
        %v983 = vunpack.c.h.b16 %v676
        %v984 = vunpack.c.l.b16 %v677
        %v985 = vunpack.c.h.b16 %v677
        %v986 = vunpack.c.l.b16 %v678
        %v987 = vunpack.c.h.b16 %v678
        %v988 = vunpack.c.l.b16 %v679
        %v989 = vunpack.c.h.b16 %v679
        %v990 = vunpack.c.l.b16 %v680
        %v991 = vunpack.c.h.b16 %v680
        %v992 = vunpack.c.l.b16 %v681
        %v993 = vunpack.c.h.b16 %v681
        %v994 = vunpack.c.l.b16 %v682
        %v995 = vunpack.c.h.b16 %v682
        %v996 = vunpack.c.l.b16 %v683
        %v997 = vunpack.c.h.b16 %v683
        %v998 = vunpack.c.l.b16 %v684
        %v999 = vunpack.c.h.b16 %v684
        %v1000 = vunpack.c.l.b16 %v685
        %v1001 = vunpack.c.h.b16 %v685
        %v1002 = vunpack.c.l.b16 %v686
        %v1003 = vunpack.c.h.b16 %v686
        %v1004 = vunpack.c.l.b16 %v687
        %v1005 = vunpack.c.h.b16 %v687
        %v1006 = vunpack.c.l.b16 %v688
        %v1007 = vunpack.c.h.b16 %v688
        %v1008 = vunpack.c.l.b16 %v689
        %v1009 = vunpack.c.h.b16 %v689
        %v1010 = vpack.c.b16 %v824, %v818
        %v1011 = vpack.c.b16 %v825, %v819
        %v1012 = vpack.c.b16 %v826, %v820
        %v1013 = vpack.c.b16 %v827, %v821
        %v1014 = vpack.c.b16 %v828, %v822
        %v1015 = vpack.c.b16 %v829, %v823
        %v1016 = vpack.c.b16 %v836, %v830
        %v1017 = vpack.c.b16 %v837, %v831
        %v1018 = vpack.c.b16 %v838, %v832
        %v1019 = vpack.c.b16 %v839, %v833
        %v1020 = vpack.c.b16 %v840, %v834
        %v1021 = vpack.c.b16 %v841, %v835
        %v1022 = vpack.c.b16 %v848, %v842
        %v1023 = vpack.c.b16 %v849, %v843
        %v1024 = vpack.c.b16 %v850, %v844
        %v1025 = vpack.c.b16 %v851, %v845
        %v1026 = vpack.c.b16 %v852, %v846
        %v1027 = vpack.c.b16 %v853, %v847
        %v1028 = vpack.c.b16 %v860, %v854
        %v1029 = vpack.c.b16 %v861, %v855
        %v1030 = vpack.c.b16 %v862, %v856
        %v1031 = vpack.c.b16 %v863, %v857
        %v1032 = vpack.c.b16 %v864, %v858
        %v1033 = vpack.c.b16 %v865, %v859
        %v1034 = vpack.c.b16 %v872, %v866
        %v1035 = vpack.c.b16 %v873, %v867
        %v1036 = vpack.c.b16 %v874, %v868
        %v1037 = vpack.c.b16 %v875, %v869
        %v1038 = vpack.c.b16 %v876, %v870
        %v1039 = vpack.c.b16 %v877, %v871
        %v1040 = vpack.c.b16 %v884, %v878
        %v1041 = vpack.c.b16 %v885, %v879
        %v1042 = vpack.c.b16 %v886, %v880
        %v1043 = vpack.c.b16 %v887, %v881
        %v1044 = vpack.c.b16 %v888, %v882
        %v1045 = vpack.c.b16 %v889, %v883
        %v1046 = vpack.c.b16 %v896, %v890
        %v1047 = vpack.c.b16 %v897, %v891
        %v1048 = vpack.c.b16 %v898, %v892
        %v1049 = vpack.c.b16 %v899, %v893
        %v1050 = vpack.c.b16 %v900, %v894
        %v1051 = vpack.c.b16 %v901, %v895
        %v1052 = vpack.c.b16 %v908, %v902
        %v1053 = vpack.c.b16 %v909, %v903
        %v1054 = vpack.c.b16 %v910, %v904
        %v1055 = vpack.c.b16 %v911, %v905
        %v1056 = vpack.c.b16 %v912, %v906
        %v1057 = vpack.c.b16 %v913, %v907
        %v1058 = vpack.c.b16 %v920, %v914
        %v1059 = vpack.c.b16 %v921, %v915
        %v1060 = vpack.c.b16 %v922, %v916
        %v1061 = vpack.c.b16 %v923, %v917
        %v1062 = vpack.c.b16 %v924, %v918
        %v1063 = vpack.c.b16 %v925, %v919
        %v1064 = vpack.c.b16 %v932, %v926
        %v1065 = vpack.c.b16 %v933, %v927
        %v1066 = vpack.c.b16 %v934, %v928
        %v1067 = vpack.c.b16 %v935, %v929
        %v1068 = vpack.c.b16 %v936, %v930
        %v1069 = vpack.c.b16 %v937, %v931
        %v1070 = vpack.c.b16 %v944, %v938
        %v1071 = vpack.c.b16 %v945, %v939
        %v1072 = vpack.c.b16 %v946, %v940
        %v1073 = vpack.c.b16 %v947, %v941
        %v1074 = vpack.c.b16 %v948, %v942
        %v1075 = vpack.c.b16 %v949, %v943
        %v1076 = vpack.c.b16 %v956, %v950
        %v1077 = vpack.c.b16 %v957, %v951
        %v1078 = vpack.c.b16 %v958, %v952
        %v1079 = vpack.c.b16 %v959, %v953
        %v1080 = vpack.c.b16 %v960, %v954
        %v1081 = vpack.c.b16 %v961, %v955
        %v1082 = vpack.c.b16 %v968, %v962
        %v1083 = vpack.c.b16 %v969, %v963
        %v1084 = vpack.c.b16 %v970, %v964
        %v1085 = vpack.c.b16 %v971, %v965
        %v1086 = vpack.c.b16 %v972, %v966
        %v1087 = vpack.c.b16 %v973, %v967
        %v1088 = vpack.c.b16 %v980, %v974
        %v1089 = vpack.c.b16 %v981, %v975
        %v1090 = vpack.c.b16 %v982, %v976
        %v1091 = vpack.c.b16 %v983, %v977
        %v1092 = vpack.c.b16 %v984, %v978
        %v1093 = vpack.c.b16 %v985, %v979
        %v1094 = vpack.c.b16 %v992, %v986
        %v1095 = vpack.c.b16 %v993, %v987
        %v1096 = vpack.c.b16 %v994, %v988
        %v1097 = vpack.c.b16 %v995, %v989
        %v1098 = vpack.c.b16 %v996, %v990
        %v1099 = vpack.c.b16 %v997, %v991
        %v1100 = vpack.c.b16 %v1004, %v998
        %v1101 = vpack.c.b16 %v1005, %v999
        %v1102 = vpack.c.b16 %v1006, %v1000
        %v1103 = vpack.c.b16 %v1007, %v1001
        %v1104 = vpack.c.b16 %v1008, %v1002
        %v1105 = vpack.c.b16 %v1009, %v1003
        %1202 = vmatprep.subr.bf16.mxu0 %v1011
        %1203 = vmatpush1.bf16.msra.mxu0 %v1010
        %1204 = vmatprep.subr.bf16.mxu0 %v1017
        %1205 = vmatpush1.bf16.msra.mxu0 %v1016
        %1206 = vmatprep.subr.bf16.mxu0 %v1023
        %1207 = vmatpush1.bf16.msra.mxu0 %v1022
        %1208 = vmatprep.subr.bf16.mxu0 %v1029
        %1209 = vmatpush1.bf16.msra.mxu0 %v1028
        %1210 = vmatprep.subr.bf16.mxu0 %v1035
        %1211 = vmatpush1.bf16.msra.mxu0 %v1034
        %1212 = vmatprep.subr.bf16.mxu0 %v1041
        %1213 = vmatpush1.bf16.msra.mxu0 %v1040
        %1214 = vmatprep.subr.bf16.mxu0 %v1047
        %1215 = vmatpush1.bf16.msra.mxu0 %v1046
        %1216 = vmatprep.subr.bf16.mxu0 %v1053
        %1217 = vmatpush1.bf16.msra.mxu0 %v1052
        %1218 = vmatprep.subr.bf16.mxu0 %v1059
        %1219 = vmatpush1.bf16.msra.mxu0 %v1058
        %1220 = vmatprep.subr.bf16.mxu0 %v1065
        %1221 = vmatpush1.bf16.msra.mxu0 %v1064
        %1222 = vmatprep.subr.bf16.mxu0 %v1071
        %1223 = vmatpush1.bf16.msra.mxu0 %v1070
        %1224 = vmatprep.subr.bf16.mxu0 %v1077
        %1225 = vmatpush1.bf16.msra.mxu0 %v1076
        %1226 = vmatprep.subr.bf16.mxu0 %v1083
        %1227 = vmatpush1.bf16.msra.mxu0 %v1082
        %1228 = vmatprep.subr.bf16.mxu0 %v1089
        %1229 = vmatpush1.bf16.msra.mxu0 %v1088
        %1230 = vmatprep.subr.bf16.mxu0 %v1095
        %1231 = vmatpush1.bf16.msra.mxu0 %v1094
        %1232 = vmatprep.subr.bf16.mxu0 %v1101
        %1233 = vmatpush1.bf16.msra.mxu0 %v1100
        %1234 = vmatprep.mubr.bf16.mxu0 %v589
        %1235 = vmatmul.mubr.bf16.gmra.mrb[0].mxu0 %v588
        %v1236 = vpop.f32.mrb[0].mxu0
        %v1237 = vadd.f32 %v695, %v1236
        %v1238 = vpop.f32.mrb[0].mxu0
        %v1239 = vadd.f32 %v699, %v1238
        %v1240 = vpop.f32.mrb[0].mxu0
        %v1241 = vadd.f32 %v695, %v1240
        %v1242 = vpop.f32.mrb[0].mxu0
        %v1243 = vadd.f32 %v699, %v1242
        %1244 = vmatprep.mubr.bf16.mxu0 %v591
        %1245 = vmatmul.mubr.bf16.gmra.mrb[0].mxu0 %v590
        %v1246 = vpop.f32.mrb[0].mxu0
        %v1247 = vadd.f32 %v695, %v1246
        %v1248 = vpop.f32.mrb[0].mxu0
        %v1249 = vadd.f32 %v699, %v1248
        %v1250 = vpop.f32.mrb[0].mxu0
        %v1251 = vadd.f32 %v695, %v1250
        %v1252 = vpop.f32.mrb[0].mxu0
        %v1253 = vadd.f32 %v699, %v1252
        %1254 = vdwg.mxu0
        %1255 = vmatprep.subr.bf16.mxu0 %v1013
        %1256 = vmatpush1.bf16.msra.mxu0 %v1012
        %1257 = vmatprep.subr.bf16.mxu0 %v1019
        %1258 = vmatpush1.bf16.msra.mxu0 %v1018
        %1259 = vmatprep.subr.bf16.mxu0 %v1025
        %1260 = vmatpush1.bf16.msra.mxu0 %v1024
        %1261 = vmatprep.subr.bf16.mxu0 %v1031
        %1262 = vmatpush1.bf16.msra.mxu0 %v1030
        %1263 = vmatprep.subr.bf16.mxu0 %v1037
        %1264 = vmatpush1.bf16.msra.mxu0 %v1036
        %1265 = vmatprep.subr.bf16.mxu0 %v1043
        %1266 = vmatpush1.bf16.msra.mxu0 %v1042
        %1267 = vmatprep.subr.bf16.mxu0 %v1049
        %1268 = vmatpush1.bf16.msra.mxu0 %v1048
        %1269 = vmatprep.subr.bf16.mxu0 %v1055
        %1270 = vmatpush1.bf16.msra.mxu0 %v1054
        %1271 = vmatprep.subr.bf16.mxu0 %v1061
        %1272 = vmatpush1.bf16.msra.mxu0 %v1060
        %1273 = vmatprep.subr.bf16.mxu0 %v1067
        %1274 = vmatpush1.bf16.msra.mxu0 %v1066
        %1275 = vmatprep.subr.bf16.mxu0 %v1073
        %1276 = vmatpush1.bf16.msra.mxu0 %v1072
        %1277 = vmatprep.subr.bf16.mxu0 %v1079
        %1278 = vmatpush1.bf16.msra.mxu0 %v1078
        %1279 = vmatprep.subr.bf16.mxu0 %v1085
        %1280 = vmatpush1.bf16.msra.mxu0 %v1084
        %1281 = vmatprep.subr.bf16.mxu0 %v1091
        %1282 = vmatpush1.bf16.msra.mxu0 %v1090
        %1283 = vmatprep.subr.bf16.mxu0 %v1097
        %1284 = vmatpush1.bf16.msra.mxu0 %v1096
        %1285 = vmatprep.subr.bf16.mxu0 %v1103
        %1286 = vmatpush1.bf16.msra.mxu0 %v1102
        %1287 = vmatprep.mubr.bf16.mxu0 %v589
        %1288 = vmatmul.mubr.bf16.gmra.mrb[0].mxu0 %v588
        %v1289 = vpop.f32.mrb[0].mxu0
        %v1290 = vadd.f32 %v703, %v1289
        %v1291 = vpop.f32.mrb[0].mxu0
        %v1292 = vadd.f32 %v707, %v1291
        %v1293 = vpop.f32.mrb[0].mxu0
        %v1294 = vadd.f32 %v703, %v1293
        %v1295 = vpop.f32.mrb[0].mxu0
        %v1296 = vadd.f32 %v707, %v1295
        %1297 = vmatprep.mubr.bf16.mxu0 %v591
        %1298 = vmatmul.mubr.bf16.gmra.mrb[0].mxu0 %v590
        %v1299 = vpop.f32.mrb[0].mxu0
        %v1300 = vadd.f32 %v703, %v1299
        %v1301 = vpop.f32.mrb[0].mxu0
        %v1302 = vadd.f32 %v707, %v1301
        %v1303 = vpop.f32.mrb[0].mxu0
        %v1304 = vadd.f32 %v703, %v1303
        %v1305 = vpop.f32.mrb[0].mxu0
        %v1306 = vadd.f32 %v707, %v1305
        %1307 = vdwg.mxu0
        %1308 = vmatprep.subr.bf16.mxu0 %v1015
        %1309 = vmatpush1.bf16.msra.mxu0 %v1014
        %1310 = vmatprep.subr.bf16.mxu0 %v1021
        %1311 = vmatpush1.bf16.msra.mxu0 %v1020
        %1312 = vmatprep.subr.bf16.mxu0 %v1027
        %1313 = vmatpush1.bf16.msra.mxu0 %v1026
        %1314 = vmatprep.subr.bf16.mxu0 %v1033
        %1315 = vmatpush1.bf16.msra.mxu0 %v1032
        %1316 = vmatprep.subr.bf16.mxu0 %v1039
        %1317 = vmatpush1.bf16.msra.mxu0 %v1038
        %1318 = vmatprep.subr.bf16.mxu0 %v1045
        %1319 = vmatpush1.bf16.msra.mxu0 %v1044
        %1320 = vmatprep.subr.bf16.mxu0 %v1051
        %1321 = vmatpush1.bf16.msra.mxu0 %v1050
        %1322 = vmatprep.subr.bf16.mxu0 %v1057
        %1323 = vmatpush1.bf16.msra.mxu0 %v1056
        %1324 = vmatprep.subr.bf16.mxu0 %v1063
        %1325 = vmatpush1.bf16.msra.mxu0 %v1062
        %1326 = vmatprep.subr.bf16.mxu0 %v1069
        %1327 = vmatpush1.bf16.msra.mxu0 %v1068
        %1328 = vmatprep.subr.bf16.mxu0 %v1075
        %1329 = vmatpush1.bf16.msra.mxu0 %v1074
        %1330 = vmatprep.subr.bf16.mxu0 %v1081
        %1331 = vmatpush1.bf16.msra.mxu0 %v1080
        %1332 = vmatprep.subr.bf16.mxu0 %v1087
        %1333 = vmatpush1.bf16.msra.mxu0 %v1086
        %1334 = vmatprep.subr.bf16.mxu0 %v1093
        %1335 = vmatpush1.bf16.msra.mxu0 %v1092
        %1336 = vmatprep.subr.bf16.mxu0 %v1099
        %1337 = vmatpush1.bf16.msra.mxu0 %v1098
        %1338 = vmatprep.subr.bf16.mxu0 %v1105
        %1339 = vmatpush1.bf16.msra.mxu0 %v1104
        %1340 = vmatprep.mubr.bf16.mxu0 %v589
        %1341 = vmatmul.mubr.bf16.gmra.mrb[0].mxu0 %v588
        %v1342 = vpop.f32.mrb[0].mxu0
        %v1343 = vadd.f32 %v711, %v1342
        %v1344 = vpop.f32.mrb[0].mxu0
        %v1345 = vadd.f32 %v715, %v1344
        %v1346 = vpop.f32.mrb[0].mxu0
        %v1347 = vadd.f32 %v711, %v1346
        %v1348 = vpop.f32.mrb[0].mxu0
        %v1349 = vadd.f32 %v715, %v1348
        %1350 = vmatprep.mubr.bf16.mxu0 %v591
        %1351 = vmatmul.mubr.bf16.gmra.mrb[0].mxu0 %v590
        %v1352 = vpop.f32.mrb[0].mxu0
        %v1353 = vadd.f32 %v711, %v1352
        %v1354 = vpop.f32.mrb[0].mxu0
        %v1355 = vadd.f32 %v715, %v1354
        %v1356 = vpop.f32.mrb[0].mxu0
        %v1357 = vadd.f32 %v711, %v1356
        %v1358 = vpop.f32.mrb[0].mxu0
        %v1359 = vadd.f32 %v715, %v1358
        %1360 = vdwg.mxu0
        %v1361 = vpack.c.bf16 %v1241, %v1237
        %v1362 = vpack.c.bf16 %v1294, %v1290
        %v1363 = vpack.c.bf16 %v1347, %v1343
        %1364 = vmatprep.subr.bf16.mxu0 0
        %1365 = vmatpush1.bf16.xpose.msra.mxu0 %v1362
        %1366 = vmatprep.subr.bf16.mxu0 0
        %1367 = vmatpush1.bf16.xpose.msra.mxu0 0
        %1368 = vmatprep.subr.bf16.mxu0 0
        %1369 = vmatpush1.bf16.xpose.msra.mxu0 0
        %1370 = vmatprep.subr.bf16.mxu0 0
        %1371 = vmatpush1.bf16.xpose.msra.mxu0 0
        %1372 = vmatprep.subr.bf16.mxu0 0
        %1373 = vmatpush1.bf16.xpose.msra.mxu0 0
        %1374 = vmatprep.subr.bf16.mxu0 0
        %1375 = vmatpush1.bf16.xpose.msra.mxu0 0
        %1376 = vmatprep.subr.bf16.mxu0 0
        %1377 = vmatpush1.bf16.xpose.msra.mxu0 0
        %1378 = vmatprep.subr.bf16.mxu0 0
        %1379 = vmatpush1.bf16.xpose.msra.mxu0 0
        %1380 = vmatprep.subr.bf16.mxu0 0
        %1381 = vmatpush1.bf16.xpose.msra.mxu0 0
        %1382 = vmatprep.subr.bf16.mxu0 0
        %1383 = vmatpush1.bf16.xpose.msra.mxu0 0
        %1384 = vmatprep.subr.bf16.mxu0 0
        %1385 = vmatpush1.bf16.xpose.msra.mxu0 0
        %1386 = vmatprep.subr.bf16.mxu0 0
        %1387 = vmatpush1.bf16.xpose.msra.mxu0 0
        %1388 = vmatprep.subr.bf16.mxu0 0
        %1389 = vmatpush1.bf16.xpose.msra.mxu0 0
        %1390 = vmatprep.subr.bf16.mxu0 0
        %1391 = vmatpush1.bf16.xpose.msra.mxu0 0
        %1392 = vmatprep.subr.bf16.mxu0 0
        %1393 = vmatpush1.bf16.xpose.msra.mxu0 0
        %1394 = vmatprep.subr.bf16.mxu0 0
        %1395 = vmatpush1.bf16.xpose.msra.mxu0 0
        %1396 = vmatprep.mubr.bf16.mxu0 0
        %1397 = vmatmul.mubr.bf16.gmra.mrb[0].mxu0 %v1361
        %v1398 = vpop.f32.mrb[0].mxu0
        %v1399 = vadd.f32 0.0, %v1398
        %v1400 = vpop.f32.mrb[0].mxu0
        %v1401 = vpop.f32.mrb[0].mxu0
        %v1402 = vadd.f32 0.0, %v1401
        %v1403 = vpop.f32.mrb[0].mxu0
        %1404 = vdwg.mxu0
        %vm1405 = vcmask 130048
        %v1406 = vsel %vm1405, %v1399, -inf
        %1407 = vmax.xlane.f32.xlu0 %v1406
        %v1408 = vpop.xlane.xlu0 %1407
        %v1409 = vsel %vm1405, %v1402, -inf
        %1410 = vmax.xlane.f32.xlu0 %v1409
        %v1411 = vpop.xlane.xlu0 %1410
        %v1412 = vsub.f32 %v1399, %v1408
        %v1413 = vsub.f32 %v1402, %v1411
        %v1414 = vmul.f32 %v1412, 1.442695
        %v1415 = vpow.pop %v1414
        %v1416 = vmul.f32 %v1413, 1.442695
        %v1417 = vpow.pop %v1416
        %v1418 = vsel %vm1405, %v1415, 0.0
        %1419 = vadd.xlane.f32.xlu0 %v1418
        %v1420 = vpop.xlane.xlu0 %1419
        %v1421 = vsel %vm1405, %v1417, 0.0
        %1422 = vadd.xlane.f32.xlu0 %v1421
        %v1423 = vpop.xlane.xlu0 %1422
        %v1424 = vrcp.pop %v1420
        %v1425 = vmul.f32 %v1415, %v1424
        %v1426 = vrcp.pop %v1423
        %v1427 = vmul.f32 %v1417, %v1426
        %v1428 = vpack.c.bf16 %v1427, %v1425
        %v1430 = vsel %vm1405, %v1428, 0
        %1432 = vmatprep.subr.bf16.mxu0 0
        %1433 = vmatpush1.bf16.msra.mxu0 %v1363
        %1434 = vmatprep.subr.bf16.mxu0 0
        %1435 = vmatpush1.bf16.msra.mxu0 0
        %1436 = vmatprep.subr.bf16.mxu0 0
        %1437 = vmatpush1.bf16.msra.mxu0 0
        %1438 = vmatprep.subr.bf16.mxu0 0
        %1439 = vmatpush1.bf16.msra.mxu0 0
        %1440 = vmatprep.subr.bf16.mxu0 0
        %1441 = vmatpush1.bf16.msra.mxu0 0
        %1442 = vmatprep.subr.bf16.mxu0 0
        %1443 = vmatpush1.bf16.msra.mxu0 0
        %1444 = vmatprep.subr.bf16.mxu0 0
        %1445 = vmatpush1.bf16.msra.mxu0 0
        %1446 = vmatprep.subr.bf16.mxu0 0
        %1447 = vmatpush1.bf16.msra.mxu0 0
        %1448 = vmatprep.subr.bf16.mxu0 0
        %1449 = vmatpush1.bf16.msra.mxu0 0
        %1450 = vmatprep.subr.bf16.mxu0 0
        %1451 = vmatpush1.bf16.msra.mxu0 0
        %1452 = vmatprep.subr.bf16.mxu0 0
        %1453 = vmatpush1.bf16.msra.mxu0 0
        %1454 = vmatprep.subr.bf16.mxu0 0
        %1455 = vmatpush1.bf16.msra.mxu0 0
        %1456 = vmatprep.subr.bf16.mxu0 0
        %1457 = vmatpush1.bf16.msra.mxu0 0
        %1458 = vmatprep.subr.bf16.mxu0 0
        %1459 = vmatpush1.bf16.msra.mxu0 0
        %1460 = vmatprep.subr.bf16.mxu0 0
        %1461 = vmatpush1.bf16.msra.mxu0 0
        %1462 = vmatprep.subr.bf16.mxu0 0
        %1463 = vmatpush1.bf16.msra.mxu0 0
        %1464 = vmatprep.mubr.bf16.mxu0 0
        %1465 = vmatmul.mubr.bf16.gmra.mrb[0].mxu0 %v1430
        %v1466 = vpop.f32.mrb[0].mxu0
        %v1467 = vadd.f32 0.0, %v1466
        %v1468 = vpop.f32.mrb[0].mxu0
        %v1469 = vpop.f32.mrb[0].mxu0
        %v1470 = vadd.f32 0.0, %v1469
        %v1471 = vpop.f32.mrb[0].mxu0
        %1472 = vdwg.mxu0
        %v1473 = vpack.c.bf16 %v1243, %v1239
        %v1474 = vpack.c.bf16 %v1296, %v1292
        %v1475 = vpack.c.bf16 %v1349, %v1345
        %1476 = vmatprep.subr.bf16.mxu0 0
        %1477 = vmatpush1.bf16.xpose.msra.mxu0 %v1474
        %1478 = vmatprep.subr.bf16.mxu0 0
        %1479 = vmatpush1.bf16.xpose.msra.mxu0 0
        %1480 = vmatprep.subr.bf16.mxu0 0
        %1481 = vmatpush1.bf16.xpose.msra.mxu0 0
        %1482 = vmatprep.subr.bf16.mxu0 0
        %1483 = vmatpush1.bf16.xpose.msra.mxu0 0
        %1484 = vmatprep.subr.bf16.mxu0 0
        %1485 = vmatpush1.bf16.xpose.msra.mxu0 0
        %1486 = vmatprep.subr.bf16.mxu0 0
        %1487 = vmatpush1.bf16.xpose.msra.mxu0 0
        %1488 = vmatprep.subr.bf16.mxu0 0
        %1489 = vmatpush1.bf16.xpose.msra.mxu0 0
        %1490 = vmatprep.subr.bf16.mxu0 0
        %1491 = vmatpush1.bf16.xpose.msra.mxu0 0
        %1492 = vmatprep.subr.bf16.mxu0 0
        %1493 = vmatpush1.bf16.xpose.msra.mxu0 0
        %1494 = vmatprep.subr.bf16.mxu0 0
        %1495 = vmatpush1.bf16.xpose.msra.mxu0 0
        %1496 = vmatprep.subr.bf16.mxu0 0
        %1497 = vmatpush1.bf16.xpose.msra.mxu0 0
        %1498 = vmatprep.subr.bf16.mxu0 0
        %1499 = vmatpush1.bf16.xpose.msra.mxu0 0
        %1500 = vmatprep.subr.bf16.mxu0 0
        %1501 = vmatpush1.bf16.xpose.msra.mxu0 0
        %1502 = vmatprep.subr.bf16.mxu0 0
        %1503 = vmatpush1.bf16.xpose.msra.mxu0 0
        %1504 = vmatprep.subr.bf16.mxu0 0
        %1505 = vmatpush1.bf16.xpose.msra.mxu0 0
        %1506 = vmatprep.subr.bf16.mxu0 0
        %1507 = vmatpush1.bf16.xpose.msra.mxu0 0
        %1508 = vmatprep.mubr.bf16.mxu0 0
        %1509 = vmatmul.mubr.bf16.gmra.mrb[0].mxu0 %v1473
        %v1510 = vpop.f32.mrb[0].mxu0
        %v1511 = vadd.f32 0.0, %v1510
        %v1512 = vpop.f32.mrb[0].mxu0
        %v1513 = vpop.f32.mrb[0].mxu0
        %v1514 = vadd.f32 0.0, %v1513
        %v1515 = vpop.f32.mrb[0].mxu0
        %1516 = vdwg.mxu0
        %v1517 = vsel %vm1405, %v1511, -inf
        %1518 = vmax.xlane.f32.xlu0 %v1517
        %v1519 = vpop.xlane.xlu0 %1518
        %v1520 = vsel %vm1405, %v1514, -inf
        %1521 = vmax.xlane.f32.xlu0 %v1520
        %v1522 = vpop.xlane.xlu0 %1521
        %v1523 = vsub.f32 %v1511, %v1519
        %v1524 = vsub.f32 %v1514, %v1522
        %v1525 = vmul.f32 %v1523, 1.442695
        %v1526 = vpow.pop %v1525
        %v1527 = vmul.f32 %v1524, 1.442695
        %v1528 = vpow.pop %v1527
        %v1529 = vsel %vm1405, %v1526, 0.0
        %1530 = vadd.xlane.f32.xlu0 %v1529
        %v1531 = vpop.xlane.xlu0 %1530
        %v1532 = vsel %vm1405, %v1528, 0.0
        %1533 = vadd.xlane.f32.xlu0 %v1532
        %v1534 = vpop.xlane.xlu0 %1533
        %v1535 = vrcp.pop %v1531
        %v1536 = vmul.f32 %v1526, %v1535
        %v1537 = vrcp.pop %v1534
        %v1538 = vmul.f32 %v1528, %v1537
        %v1539 = vpack.c.bf16 %v1538, %v1536
        %v1541 = vsel %vm1405, %v1539, 0
        %1543 = vmatprep.subr.bf16.mxu0 0
        %1544 = vmatpush1.bf16.msra.mxu0 %v1475
        %1545 = vmatprep.subr.bf16.mxu0 0
        %1546 = vmatpush1.bf16.msra.mxu0 0
        %1547 = vmatprep.subr.bf16.mxu0 0
        %1548 = vmatpush1.bf16.msra.mxu0 0
        %1549 = vmatprep.subr.bf16.mxu0 0
        %1550 = vmatpush1.bf16.msra.mxu0 0
        %1551 = vmatprep.subr.bf16.mxu0 0
        %1552 = vmatpush1.bf16.msra.mxu0 0
        %1553 = vmatprep.subr.bf16.mxu0 0
        %1554 = vmatpush1.bf16.msra.mxu0 0
        %1555 = vmatprep.subr.bf16.mxu0 0
        %1556 = vmatpush1.bf16.msra.mxu0 0
        %1557 = vmatprep.subr.bf16.mxu0 0
        %1558 = vmatpush1.bf16.msra.mxu0 0
        %1559 = vmatprep.subr.bf16.mxu0 0
        %1560 = vmatpush1.bf16.msra.mxu0 0
        %1561 = vmatprep.subr.bf16.mxu0 0
        %1562 = vmatpush1.bf16.msra.mxu0 0
        %1563 = vmatprep.subr.bf16.mxu0 0
        %1564 = vmatpush1.bf16.msra.mxu0 0
        %1565 = vmatprep.subr.bf16.mxu0 0
        %1566 = vmatpush1.bf16.msra.mxu0 0
        %1567 = vmatprep.subr.bf16.mxu0 0
        %1568 = vmatpush1.bf16.msra.mxu0 0
        %1569 = vmatprep.subr.bf16.mxu0 0
        %1570 = vmatpush1.bf16.msra.mxu0 0
        %1571 = vmatprep.subr.bf16.mxu0 0
        %1572 = vmatpush1.bf16.msra.mxu0 0
        %1573 = vmatprep.subr.bf16.mxu0 0
        %1574 = vmatpush1.bf16.msra.mxu0 0
        %1575 = vmatprep.mubr.bf16.mxu0 0
        %1576 = vmatmul.mubr.bf16.gmra.mrb[0].mxu0 %v1541
        %v1577 = vpop.f32.mrb[0].mxu0
        %v1578 = vadd.f32 0.0, %v1577
        %v1579 = vpop.f32.mrb[0].mxu0
        %v1580 = vpop.f32.mrb[0].mxu0
        %v1581 = vadd.f32 0.0, %v1580
        %v1582 = vpop.f32.mrb[0].mxu0
        %1583 = vdwg.mxu0
        %v1584 = vpack.c.bf16 %v1251, %v1247
        %v1585 = vpack.c.bf16 %v1304, %v1300
        %v1586 = vpack.c.bf16 %v1357, %v1353
        %1587 = vmatprep.subr.bf16.mxu0 0
        %1588 = vmatpush1.bf16.xpose.msra.mxu0 %v1585
        %1589 = vmatprep.subr.bf16.mxu0 0
        %1590 = vmatpush1.bf16.xpose.msra.mxu0 0
        %1591 = vmatprep.subr.bf16.mxu0 0
        %1592 = vmatpush1.bf16.xpose.msra.mxu0 0
        %1593 = vmatprep.subr.bf16.mxu0 0
        %1594 = vmatpush1.bf16.xpose.msra.mxu0 0
        %1595 = vmatprep.subr.bf16.mxu0 0
        %1596 = vmatpush1.bf16.xpose.msra.mxu0 0
        %1597 = vmatprep.subr.bf16.mxu0 0
        %1598 = vmatpush1.bf16.xpose.msra.mxu0 0
        %1599 = vmatprep.subr.bf16.mxu0 0
        %1600 = vmatpush1.bf16.xpose.msra.mxu0 0
        %1601 = vmatprep.subr.bf16.mxu0 0
        %1602 = vmatpush1.bf16.xpose.msra.mxu0 0
        %1603 = vmatprep.subr.bf16.mxu0 0
        %1604 = vmatpush1.bf16.xpose.msra.mxu0 0
        %1605 = vmatprep.subr.bf16.mxu0 0
        %1606 = vmatpush1.bf16.xpose.msra.mxu0 0
        %1607 = vmatprep.subr.bf16.mxu0 0
        %1608 = vmatpush1.bf16.xpose.msra.mxu0 0
        %1609 = vmatprep.subr.bf16.mxu0 0
        %1610 = vmatpush1.bf16.xpose.msra.mxu0 0
        %1611 = vmatprep.subr.bf16.mxu0 0
        %1612 = vmatpush1.bf16.xpose.msra.mxu0 0
        %1613 = vmatprep.subr.bf16.mxu0 0
        %1614 = vmatpush1.bf16.xpose.msra.mxu0 0
        %1615 = vmatprep.subr.bf16.mxu0 0
        %1616 = vmatpush1.bf16.xpose.msra.mxu0 0
        %1617 = vmatprep.subr.bf16.mxu0 0
        %1618 = vmatpush1.bf16.xpose.msra.mxu0 0
        %1619 = vmatprep.mubr.bf16.mxu0 0
        %1620 = vmatmul.mubr.bf16.gmra.mrb[0].mxu0 %v1584
        %v1621 = vpop.f32.mrb[0].mxu0
        %v1622 = vadd.f32 0.0, %v1621
        %v1623 = vpop.f32.mrb[0].mxu0
        %v1624 = vpop.f32.mrb[0].mxu0
        %v1625 = vadd.f32 0.0, %v1624
        %v1626 = vpop.f32.mrb[0].mxu0
        %1627 = vdwg.mxu0
        %v1628 = vsel %vm1405, %v1622, -inf
        %1629 = vmax.xlane.f32.xlu0 %v1628
        %v1630 = vpop.xlane.xlu0 %1629
        %v1631 = vsel %vm1405, %v1625, -inf
        %1632 = vmax.xlane.f32.xlu0 %v1631
        %v1633 = vpop.xlane.xlu0 %1632
        %v1634 = vsub.f32 %v1622, %v1630
        %v1635 = vsub.f32 %v1625, %v1633
        %v1636 = vmul.f32 %v1634, 1.442695
        %v1637 = vpow.pop %v1636
        %v1638 = vmul.f32 %v1635, 1.442695
        %v1639 = vpow.pop %v1638
        %v1640 = vsel %vm1405, %v1637, 0.0
        %1641 = vadd.xlane.f32.xlu0 %v1640
        %v1642 = vpop.xlane.xlu0 %1641
        %v1643 = vsel %vm1405, %v1639, 0.0
        %1644 = vadd.xlane.f32.xlu0 %v1643
        %v1645 = vpop.xlane.xlu0 %1644
        %v1646 = vrcp.pop %v1642
        %v1647 = vmul.f32 %v1637, %v1646
        %v1648 = vrcp.pop %v1645
        %v1649 = vmul.f32 %v1639, %v1648
        %v1650 = vpack.c.bf16 %v1649, %v1647
        %v1652 = vsel %vm1405, %v1650, 0
        %1654 = vmatprep.subr.bf16.mxu0 0
        %1655 = vmatpush1.bf16.msra.mxu0 %v1586
        %1656 = vmatprep.subr.bf16.mxu0 0
        %1657 = vmatpush1.bf16.msra.mxu0 0
        %1658 = vmatprep.subr.bf16.mxu0 0
        %1659 = vmatpush1.bf16.msra.mxu0 0
        %1660 = vmatprep.subr.bf16.mxu0 0
        %1661 = vmatpush1.bf16.msra.mxu0 0
        %1662 = vmatprep.subr.bf16.mxu0 0
        %1663 = vmatpush1.bf16.msra.mxu0 0
        %1664 = vmatprep.subr.bf16.mxu0 0
        %1665 = vmatpush1.bf16.msra.mxu0 0
        %1666 = vmatprep.subr.bf16.mxu0 0
        %1667 = vmatpush1.bf16.msra.mxu0 0
        %1668 = vmatprep.subr.bf16.mxu0 0
        %1669 = vmatpush1.bf16.msra.mxu0 0
        %1670 = vmatprep.subr.bf16.mxu0 0
        %1671 = vmatpush1.bf16.msra.mxu0 0
        %1672 = vmatprep.subr.bf16.mxu0 0
        %1673 = vmatpush1.bf16.msra.mxu0 0
        %1674 = vmatprep.subr.bf16.mxu0 0
        %1675 = vmatpush1.bf16.msra.mxu0 0
        %1676 = vmatprep.subr.bf16.mxu0 0
        %1677 = vmatpush1.bf16.msra.mxu0 0
        %1678 = vmatprep.subr.bf16.mxu0 0
        %1679 = vmatpush1.bf16.msra.mxu0 0
        %1680 = vmatprep.subr.bf16.mxu0 0
        %1681 = vmatpush1.bf16.msra.mxu0 0
        %1682 = vmatprep.subr.bf16.mxu0 0
        %1683 = vmatpush1.bf16.msra.mxu0 0
        %1684 = vmatprep.subr.bf16.mxu0 0
        %1685 = vmatpush1.bf16.msra.mxu0 0
        %1686 = vmatprep.mubr.bf16.mxu0 0
        %1687 = vmatmul.mubr.bf16.gmra.mrb[0].mxu0 %v1652
        %v1688 = vpop.f32.mrb[0].mxu0
        %v1689 = vadd.f32 0.0, %v1688
        %v1690 = vpop.f32.mrb[0].mxu0
        %v1691 = vpop.f32.mrb[0].mxu0
        %v1692 = vadd.f32 0.0, %v1691
        %v1693 = vpop.f32.mrb[0].mxu0
        %1694 = vdwg.mxu0
        %v1695 = vpack.c.bf16 %v1253, %v1249
        %v1696 = vpack.c.bf16 %v1306, %v1302
        %v1697 = vpack.c.bf16 %v1359, %v1355
        %1698 = vmatprep.subr.bf16.mxu0 0
        %1699 = vmatpush1.bf16.xpose.msra.mxu0 %v1696
        %1700 = vmatprep.subr.bf16.mxu0 0
        %1701 = vmatpush1.bf16.xpose.msra.mxu0 0
        %1702 = vmatprep.subr.bf16.mxu0 0
        %1703 = vmatpush1.bf16.xpose.msra.mxu0 0
        %1704 = vmatprep.subr.bf16.mxu0 0
        %1705 = vmatpush1.bf16.xpose.msra.mxu0 0
        %1706 = vmatprep.subr.bf16.mxu0 0
        %1707 = vmatpush1.bf16.xpose.msra.mxu0 0
        %1708 = vmatprep.subr.bf16.mxu0 0
        %1709 = vmatpush1.bf16.xpose.msra.mxu0 0
        %1710 = vmatprep.subr.bf16.mxu0 0
        %1711 = vmatpush1.bf16.xpose.msra.mxu0 0
        %1712 = vmatprep.subr.bf16.mxu0 0
        %1713 = vmatpush1.bf16.xpose.msra.mxu0 0
        %1714 = vmatprep.subr.bf16.mxu0 0
        %1715 = vmatpush1.bf16.xpose.msra.mxu0 0
        %1716 = vmatprep.subr.bf16.mxu0 0
        %1717 = vmatpush1.bf16.xpose.msra.mxu0 0
        %1718 = vmatprep.subr.bf16.mxu0 0
        %1719 = vmatpush1.bf16.xpose.msra.mxu0 0
        %1720 = vmatprep.subr.bf16.mxu0 0
        %1721 = vmatpush1.bf16.xpose.msra.mxu0 0
        %1722 = vmatprep.subr.bf16.mxu0 0
        %1723 = vmatpush1.bf16.xpose.msra.mxu0 0
        %1724 = vmatprep.subr.bf16.mxu0 0
        %1725 = vmatpush1.bf16.xpose.msra.mxu0 0
        %1726 = vmatprep.subr.bf16.mxu0 0
        %1727 = vmatpush1.bf16.xpose.msra.mxu0 0
        %1728 = vmatprep.subr.bf16.mxu0 0
        %1729 = vmatpush1.bf16.xpose.msra.mxu0 0
        %1730 = vmatprep.mubr.bf16.mxu0 0
        %1731 = vmatmul.mubr.bf16.gmra.mrb[0].mxu0 %v1695
        %v1732 = vpop.f32.mrb[0].mxu0
        %v1733 = vadd.f32 0.0, %v1732
        %v1734 = vpop.f32.mrb[0].mxu0
        %v1735 = vpop.f32.mrb[0].mxu0
        %v1736 = vadd.f32 0.0, %v1735
        %v1737 = vpop.f32.mrb[0].mxu0
        %1738 = vdwg.mxu0
        %v1739 = vsel %vm1405, %v1733, -inf
        %1740 = vmax.xlane.f32.xlu0 %v1739
        %v1741 = vpop.xlane.xlu0 %1740
        %v1742 = vsel %vm1405, %v1736, -inf
        %1743 = vmax.xlane.f32.xlu0 %v1742
        %v1744 = vpop.xlane.xlu0 %1743
        %v1745 = vsub.f32 %v1733, %v1741
        %v1746 = vsub.f32 %v1736, %v1744
        %v1747 = vmul.f32 %v1745, 1.442695
        %v1748 = vpow.pop %v1747
        %v1749 = vmul.f32 %v1746, 1.442695
        %v1750 = vpow.pop %v1749
        %v1751 = vsel %vm1405, %v1748, 0.0
        %1752 = vadd.xlane.f32.xlu0 %v1751
        %v1753 = vpop.xlane.xlu0 %1752
        %v1754 = vsel %vm1405, %v1750, 0.0
        %1755 = vadd.xlane.f32.xlu0 %v1754
        %v1756 = vpop.xlane.xlu0 %1755
        %v1757 = vrcp.pop %v1753
        %v1758 = vmul.f32 %v1748, %v1757
        %v1759 = vrcp.pop %v1756
        %v1760 = vmul.f32 %v1750, %v1759
        %v1761 = vpack.c.bf16 %v1760, %v1758
        %v1763 = vsel %vm1405, %v1761, 0
        %1765 = vmatprep.subr.bf16.mxu0 0
        %1766 = vmatpush1.bf16.msra.mxu0 %v1697
        %1767 = vmatprep.subr.bf16.mxu0 0
        %1768 = vmatpush1.bf16.msra.mxu0 0
        %1769 = vmatprep.subr.bf16.mxu0 0
        %1770 = vmatpush1.bf16.msra.mxu0 0
        %1771 = vmatprep.subr.bf16.mxu0 0
        %1772 = vmatpush1.bf16.msra.mxu0 0
        %1773 = vmatprep.subr.bf16.mxu0 0
        %1774 = vmatpush1.bf16.msra.mxu0 0
        %1775 = vmatprep.subr.bf16.mxu0 0
        %1776 = vmatpush1.bf16.msra.mxu0 0
        %1777 = vmatprep.subr.bf16.mxu0 0
        %1778 = vmatpush1.bf16.msra.mxu0 0
        %1779 = vmatprep.subr.bf16.mxu0 0
        %1780 = vmatpush1.bf16.msra.mxu0 0
        %1781 = vmatprep.subr.bf16.mxu0 0
        %1782 = vmatpush1.bf16.msra.mxu0 0
        %1783 = vmatprep.subr.bf16.mxu0 0
        %1784 = vmatpush1.bf16.msra.mxu0 0
        %1785 = vmatprep.subr.bf16.mxu0 0
        %1786 = vmatpush1.bf16.msra.mxu0 0
        %1787 = vmatprep.subr.bf16.mxu0 0
        %1788 = vmatpush1.bf16.msra.mxu0 0
        %1789 = vmatprep.subr.bf16.mxu0 0
        %1790 = vmatpush1.bf16.msra.mxu0 0
        %1791 = vmatprep.subr.bf16.mxu0 0
        %1792 = vmatpush1.bf16.msra.mxu0 0
        %1793 = vmatprep.subr.bf16.mxu0 0
        %1794 = vmatpush1.bf16.msra.mxu0 0
        %1795 = vmatprep.subr.bf16.mxu0 0
        %1796 = vmatpush1.bf16.msra.mxu0 0
        %1797 = vmatprep.mubr.bf16.mxu0 0
        %1798 = vmatmul.mubr.bf16.gmra.mrb[0].mxu0 %v1763
        %v1799 = vpop.f32.mrb[0].mxu0
        %v1800 = vadd.f32 0.0, %v1799
        %v1801 = vpop.f32.mrb[0].mxu0
        %v1802 = vpop.f32.mrb[0].mxu0
        %v1803 = vadd.f32 0.0, %v1802
        %v1804 = vpop.f32.mrb[0].mxu0
        %1805 = vdwg.mxu0
        %v1806 = vpack.c.bf16 %v1470, %v1467
        %v1807 = vpack.c.bf16 %v1581, %v1578
        %v1808 = vpack.c.bf16 %v1692, %v1689
        %v1809 = vpack.c.bf16 %v1803, %v1800
        %v1810 = vld [vmem:[%s469] sm:$0xff]
        %v1811 = vld [vmem:[%s469 + $0x8] sm:$0xff]
        %v1812 = vld [vmem:[%s469 + $0x10] sm:$0xff]
        %v1813 = vld [vmem:[%s469 + $0x18] sm:$0xff]
        %v1814 = vld [vmem:[%s469 + $0x20] sm:$0xff]
        %v1815 = vld [vmem:[%s469 + $0x28] sm:$0xff]
        %v1816 = vld [vmem:[%s469 + $0x30] sm:$0xff]
        %v1817 = vld [vmem:[%s469 + $0x38] sm:$0xff]
        %v1818 = vld [vmem:[%s469 + $0x40] sm:$0xff]
        %v1819 = vld [vmem:[%s469 + $0x48] sm:$0xff]
        %v1820 = vld [vmem:[%s469 + $0x50] sm:$0xff]
        %v1821 = vld [vmem:[%s469 + $0x58] sm:$0xff]
        %v1822 = vld [vmem:[%s469 + $0x60] sm:$0xff]
        %v1823 = vld [vmem:[%s469 + $0x68] sm:$0xff]
        %v1824 = vld [vmem:[%s469 + $0x70] sm:$0xff]
        %v1825 = vld [vmem:[%s469 + $0x78] sm:$0xff]
        %v1826 = vld [vmem:[%s469 + $0x80] sm:$0xff]
        %v1827 = vld [vmem:[%s469 + $0x88] sm:$0xff]
        %v1828 = vld [vmem:[%s469 + $0x90] sm:$0xff]
        %v1829 = vld [vmem:[%s469 + $0x98] sm:$0xff]
        %v1830 = vld [vmem:[%s469 + $0xa0] sm:$0xff]
        %v1831 = vld [vmem:[%s469 + $0xa8] sm:$0xff]
        %v1832 = vld [vmem:[%s469 + $0xb0] sm:$0xff]
        %v1833 = vld [vmem:[%s469 + $0xb8] sm:$0xff]
        %v1834 = vld [vmem:[%s469 + $0xc0] sm:$0xff]
        %v1835 = vld [vmem:[%s469 + $0xc8] sm:$0xff]
        %v1836 = vld [vmem:[%s469 + $0xd0] sm:$0xff]
        %v1837 = vld [vmem:[%s469 + $0xd8] sm:$0xff]
        %v1838 = vld [vmem:[%s469 + $0xe0] sm:$0xff]
        %v1839 = vld [vmem:[%s469 + $0xe8] sm:$0xff]
        %v1840 = vld [vmem:[%s469 + $0xf0] sm:$0xff]
        %v1841 = vld [vmem:[%s469 + $0xf8] sm:$0xff]
        %v1842 = vlaneseq
        %v1843 = vshrl.u32 %v1842, 7
        %v1844 = vsub.s32 0, %v1843
        %v1845 = vrot.slane %v592, %v1844
        %v1846 = vlaneseq
        %v1847 = vshrl.u32 %v1846, 7
        %v1848 = vsub.s32 0, %v1847
        %v1849 = vrot.slane %v593, %v1848
        %v1882 = vunpack.c.l.b16 %v1810
        %v1883 = vunpack.c.h.b16 %v1810
        %v1884 = vunpack.c.l.b16 %v1811
        %v1885 = vunpack.c.h.b16 %v1811
        %v1886 = vunpack.c.l.b16 %v1812
        %v1887 = vunpack.c.h.b16 %v1812
        %v1888 = vunpack.c.l.b16 %v1813
        %v1889 = vunpack.c.h.b16 %v1813
        %v1890 = vunpack.c.l.b16 %v1814
        %v1891 = vunpack.c.h.b16 %v1814
        %v1892 = vunpack.c.l.b16 %v1815
        %v1893 = vunpack.c.h.b16 %v1815
        %v1894 = vunpack.c.l.b16 %v1816
        %v1895 = vunpack.c.h.b16 %v1816
        %v1896 = vunpack.c.l.b16 %v1817
        %v1897 = vunpack.c.h.b16 %v1817
        %v1898 = vunpack.c.l.b16 %v1818
        %v1899 = vunpack.c.h.b16 %v1818
        %v1900 = vunpack.c.l.b16 %v1819
        %v1901 = vunpack.c.h.b16 %v1819
        %v1902 = vunpack.c.l.b16 %v1820
        %v1903 = vunpack.c.h.b16 %v1820
        %v1904 = vunpack.c.l.b16 %v1821
        %v1905 = vunpack.c.h.b16 %v1821
        %v1906 = vunpack.c.l.b16 %v1822
        %v1907 = vunpack.c.h.b16 %v1822
        %v1908 = vunpack.c.l.b16 %v1823
        %v1909 = vunpack.c.h.b16 %v1823
        %v1910 = vunpack.c.l.b16 %v1824
        %v1911 = vunpack.c.h.b16 %v1824
        %v1912 = vunpack.c.l.b16 %v1825
        %v1913 = vunpack.c.h.b16 %v1825
        %v1914 = vunpack.c.l.b16 %v1826
        %v1915 = vunpack.c.h.b16 %v1826
        %v1916 = vunpack.c.l.b16 %v1827
        %v1917 = vunpack.c.h.b16 %v1827
        %v1918 = vunpack.c.l.b16 %v1828
        %v1919 = vunpack.c.h.b16 %v1828
        %v1920 = vunpack.c.l.b16 %v1829
        %v1921 = vunpack.c.h.b16 %v1829
        %v1922 = vunpack.c.l.b16 %v1830
        %v1923 = vunpack.c.h.b16 %v1830
        %v1924 = vunpack.c.l.b16 %v1831
        %v1925 = vunpack.c.h.b16 %v1831
        %v1926 = vunpack.c.l.b16 %v1832
        %v1927 = vunpack.c.h.b16 %v1832
        %v1928 = vunpack.c.l.b16 %v1833
        %v1929 = vunpack.c.h.b16 %v1833
        %v1930 = vunpack.c.l.b16 %v1834
        %v1931 = vunpack.c.h.b16 %v1834
        %v1932 = vunpack.c.l.b16 %v1835
        %v1933 = vunpack.c.h.b16 %v1835
        %v1934 = vunpack.c.l.b16 %v1836
        %v1935 = vunpack.c.h.b16 %v1836
        %v1936 = vunpack.c.l.b16 %v1837
        %v1937 = vunpack.c.h.b16 %v1837
        %v1938 = vunpack.c.l.b16 %v1838
        %v1939 = vunpack.c.h.b16 %v1838
        %v1940 = vunpack.c.l.b16 %v1839
        %v1941 = vunpack.c.h.b16 %v1839
        %v1942 = vunpack.c.l.b16 %v1840
        %v1943 = vunpack.c.h.b16 %v1840
        %v1944 = vunpack.c.l.b16 %v1841
        %v1945 = vunpack.c.h.b16 %v1841
        %v1946 = vpack.c.b16 %v1884, %v1882
        %v1947 = vpack.c.b16 %v1885, %v1883
        %v1948 = vpack.c.b16 %v1888, %v1886
        %v1949 = vpack.c.b16 %v1889, %v1887
        %v1950 = vpack.c.b16 %v1892, %v1890
        %v1951 = vpack.c.b16 %v1893, %v1891
        %v1952 = vpack.c.b16 %v1896, %v1894
        %v1953 = vpack.c.b16 %v1897, %v1895
        %v1954 = vpack.c.b16 %v1900, %v1898
        %v1955 = vpack.c.b16 %v1901, %v1899
        %v1956 = vpack.c.b16 %v1904, %v1902
        %v1957 = vpack.c.b16 %v1905, %v1903
        %v1958 = vpack.c.b16 %v1908, %v1906
        %v1959 = vpack.c.b16 %v1909, %v1907
        %v1960 = vpack.c.b16 %v1912, %v1910
        %v1961 = vpack.c.b16 %v1913, %v1911
        %v1962 = vpack.c.b16 %v1916, %v1914
        %v1963 = vpack.c.b16 %v1917, %v1915
        %v1964 = vpack.c.b16 %v1920, %v1918
        %v1965 = vpack.c.b16 %v1921, %v1919
        %v1966 = vpack.c.b16 %v1924, %v1922
        %v1967 = vpack.c.b16 %v1925, %v1923
        %v1968 = vpack.c.b16 %v1928, %v1926
        %v1969 = vpack.c.b16 %v1929, %v1927
        %v1970 = vpack.c.b16 %v1932, %v1930
        %v1971 = vpack.c.b16 %v1933, %v1931
        %v1972 = vpack.c.b16 %v1936, %v1934
        %v1973 = vpack.c.b16 %v1937, %v1935
        %v1974 = vpack.c.b16 %v1940, %v1938
        %v1975 = vpack.c.b16 %v1941, %v1939
        %v1976 = vpack.c.b16 %v1944, %v1942
        %v1977 = vpack.c.b16 %v1945, %v1943
        %2010 = vmatprep.subr.bf16.mxu0 %v1947
        %2011 = vmatpush1.bf16.msra.mxu0 %v1946
        %2012 = vmatprep.subr.bf16.mxu0 %v1949
        %2013 = vmatpush1.bf16.msra.mxu0 %v1948
        %2014 = vmatprep.subr.bf16.mxu0 %v1951
        %2015 = vmatpush1.bf16.msra.mxu0 %v1950
        %2016 = vmatprep.subr.bf16.mxu0 %v1953
        %2017 = vmatpush1.bf16.msra.mxu0 %v1952
        %2018 = vmatprep.subr.bf16.mxu0 %v1955
        %2019 = vmatpush1.bf16.msra.mxu0 %v1954
        %2020 = vmatprep.subr.bf16.mxu0 %v1957
        %2021 = vmatpush1.bf16.msra.mxu0 %v1956
        %2022 = vmatprep.subr.bf16.mxu0 %v1959
        %2023 = vmatpush1.bf16.msra.mxu0 %v1958
        %2024 = vmatprep.subr.bf16.mxu0 %v1961
        %2025 = vmatpush1.bf16.msra.mxu0 %v1960
        %2026 = vmatprep.subr.bf16.mxu0 %v1963
        %2027 = vmatpush1.bf16.msra.mxu0 %v1962
        %2028 = vmatprep.subr.bf16.mxu0 %v1965
        %2029 = vmatpush1.bf16.msra.mxu0 %v1964
        %2030 = vmatprep.subr.bf16.mxu0 %v1967
        %2031 = vmatpush1.bf16.msra.mxu0 %v1966
        %2032 = vmatprep.subr.bf16.mxu0 %v1969
        %2033 = vmatpush1.bf16.msra.mxu0 %v1968
        %2034 = vmatprep.subr.bf16.mxu0 %v1971
        %2035 = vmatpush1.bf16.msra.mxu0 %v1970
        %2036 = vmatprep.subr.bf16.mxu0 %v1973
        %2037 = vmatpush1.bf16.msra.mxu0 %v1972
        %2038 = vmatprep.subr.bf16.mxu0 %v1975
        %2039 = vmatpush1.bf16.msra.mxu0 %v1974
        %2040 = vmatprep.subr.bf16.mxu0 %v1977
        %2041 = vmatpush1.bf16.msra.mxu0 %v1976
        %2042 = vmatprep.mubr.bf16.mxu0 %v1807
        %2043 = vmatmul.mubr.bf16.gmra.mrb[0].mxu0 %v1806
        %v2044 = vpop.f32.mrb[0].mxu0
        %v2045 = vadd.f32 %v1845, %v2044
        %v2046 = vpop.f32.mrb[0].mxu0
        %v2047 = vadd.f32 %v1849, %v2046
        %v2048 = vpop.f32.mrb[0].mxu0
        %v2049 = vadd.f32 %v1845, %v2048
        %v2050 = vpop.f32.mrb[0].mxu0
        %v2051 = vadd.f32 %v1849, %v2050
        %2052 = vmatprep.mubr.bf16.mxu0 %v1809
        %2053 = vmatmul.mubr.bf16.gmra.mrb[0].mxu0 %v1808
        %v2054 = vpop.f32.mrb[0].mxu0
        %v2055 = vadd.f32 %v1845, %v2054
        %v2056 = vpop.f32.mrb[0].mxu0
        %v2057 = vadd.f32 %v1849, %v2056
        %v2058 = vpop.f32.mrb[0].mxu0
        %v2059 = vadd.f32 %v1845, %v2058
        %v2060 = vpop.f32.mrb[0].mxu0
        %v2061 = vadd.f32 %v1849, %v2060
        %2062 = vdwg.mxu0
        %v2063 = vadd.f32 %v580, %v2045
        %v2064 = vadd.f32 %v581, %v2047
        %v2065 = vadd.f32 %v582, %v2049
        %v2066 = vadd.f32 %v583, %v2051
        %v2067 = vadd.f32 %v584, %v2055
        %v2068 = vadd.f32 %v585, %v2057
        %v2069 = vadd.f32 %v586, %v2059
        %v2070 = vadd.f32 %v587, %v2061
        %v2071 = vadd.f32 %v2063, %v2064
        %2072 = vadd.xlane.f32.xlu0 %v2071
        %v2073 = vpop.xlane.xlu0 %2072
        %v2074 = vadd.f32 %v2065, %v2066
        %2075 = vadd.xlane.f32.xlu0 %v2074
        %v2076 = vpop.xlane.xlu0 %2075
        %v2077 = vadd.f32 %v2067, %v2068
        %2078 = vadd.xlane.f32.xlu0 %v2077
        %v2079 = vpop.xlane.xlu0 %2078
        %v2080 = vadd.f32 %v2069, %v2070
        %2081 = vadd.xlane.f32.xlu0 %v2080
        %v2082 = vpop.xlane.xlu0 %2081
        %v2083 = vrcp.pop 256.0
        %v2084 = vmul.f32 %v2073, %v2083
        %v2085 = vmul.f32 %v2076, %v2083
        %v2086 = vmul.f32 %v2079, %v2083
        %v2087 = vmul.f32 %v2082, %v2083
        %v2088 = vsub.f32 %v2063, %v2084
        %v2089 = vsub.f32 %v2064, %v2084
        %v2090 = vsub.f32 %v2065, %v2085
        %v2091 = vsub.f32 %v2066, %v2085
        %v2092 = vsub.f32 %v2067, %v2086
        %v2093 = vsub.f32 %v2068, %v2086
        %v2094 = vsub.f32 %v2069, %v2087
        %v2095 = vsub.f32 %v2070, %v2087
        %v2096 = vmul.f32 %v2088, %v2088
        %v2097 = vmul.f32 %v2089, %v2089
        %v2098 = vmul.f32 %v2090, %v2090
        %v2099 = vmul.f32 %v2091, %v2091
        %v2100 = vmul.f32 %v2092, %v2092
        %v2101 = vmul.f32 %v2093, %v2093
        %v2102 = vmul.f32 %v2094, %v2094
        %v2103 = vmul.f32 %v2095, %v2095
        %v2104 = vadd.f32 %v2096, %v2097
        %2105 = vadd.xlane.f32.xlu0 %v2104
        %v2106 = vpop.xlane.xlu0 %2105
        %v2107 = vadd.f32 %v2098, %v2099
        %2108 = vadd.xlane.f32.xlu0 %v2107
        %v2109 = vpop.xlane.xlu0 %2108
        %v2110 = vadd.f32 %v2100, %v2101
        %2111 = vadd.xlane.f32.xlu0 %v2110
        %v2112 = vpop.xlane.xlu0 %2111
        %v2113 = vadd.f32 %v2102, %v2103
        %2114 = vadd.xlane.f32.xlu0 %v2113
        %v2115 = vpop.xlane.xlu0 %2114
        %v2116 = vmul.f32 %v2106, %v2083
        %v2117 = vmul.f32 %v2109, %v2083
        %v2118 = vmul.f32 %v2112, %v2083
        %v2119 = vmul.f32 %v2115, %v2083
        %v2120 = vadd.f32 %v2116, 1e-05
        %v2121 = vadd.f32 %v2117, 1e-05
        %v2122 = vadd.f32 %v2118, 1e-05
        %v2123 = vadd.f32 %v2119, 1e-05
        %v2124 = vrsqrt.pop %v2120
        %v2125 = vrsqrt.pop %v2121
        %v2126 = vrsqrt.pop %v2122
        %v2127 = vrsqrt.pop %v2123
        %v2128 = vmul.f32 %v2088, %v2124
        %v2129 = vmul.f32 %v2089, %v2124
        %v2130 = vmul.f32 %v2090, %v2125
        %v2131 = vmul.f32 %v2091, %v2125
        %v2132 = vmul.f32 %v2092, %v2126
        %v2133 = vmul.f32 %v2093, %v2126
        %v2134 = vmul.f32 %v2094, %v2127
        %v2135 = vmul.f32 %v2095, %v2127
        %v2136 = vlaneseq
        %v2137 = vshrl.u32 %v2136, 7
        %v2138 = vsub.s32 1, %v2137
        %v2139 = vrot.slane %v592, %v2138
        %v2140 = vlaneseq
        %v2141 = vshrl.u32 %v2140, 7
        %v2142 = vsub.s32 1, %v2141
        %v2143 = vrot.slane %v593, %v2142
        %v2144 = vmul.f32 %v2128, %v2139
        %v2145 = vmul.f32 %v2129, %v2143
        %v2146 = vmul.f32 %v2130, %v2139
        %v2147 = vmul.f32 %v2131, %v2143
        %v2148 = vmul.f32 %v2132, %v2139
        %v2149 = vmul.f32 %v2133, %v2143
        %v2150 = vmul.f32 %v2134, %v2139
        %v2151 = vmul.f32 %v2135, %v2143
        %v2152 = vlaneseq
        %v2153 = vshrl.u32 %v2152, 7
        %v2154 = vsub.s32 2, %v2153
        %v2155 = vrot.slane %v592, %v2154
        %v2156 = vlaneseq
        %v2157 = vshrl.u32 %v2156, 7
        %v2158 = vsub.s32 2, %v2157
        %v2159 = vrot.slane %v593, %v2158
        %v2160 = vadd.f32 %v2144, %v2155
        %v2161 = vadd.f32 %v2145, %v2159
        %v2162 = vadd.f32 %v2146, %v2155
        %v2163 = vadd.f32 %v2147, %v2159
        %v2164 = vadd.f32 %v2148, %v2155
        %v2165 = vadd.f32 %v2149, %v2159
        %v2166 = vadd.f32 %v2150, %v2155
        %v2167 = vadd.f32 %v2151, %v2159
        %v2168 = vpack.c.bf16 %v2162, %v2160
        %v2169 = vpack.c.bf16 %v2163, %v2161
        %v2170 = vpack.c.bf16 %v2166, %v2164
        %v2171 = vpack.c.bf16 %v2167, %v2165
        %v2172 = vld [vmem:[%s478] sm:$0xff]
        %v2173 = vld [vmem:[%s478 + $0x8] sm:$0xff]
        %v2174 = vld [vmem:[%s478 + $0x10] sm:$0xff]
        %v2175 = vld [vmem:[%s478 + $0x18] sm:$0xff]
        %v2176 = vld [vmem:[%s478 + $0x20] sm:$0xff]
        %v2177 = vld [vmem:[%s478 + $0x28] sm:$0xff]
        %v2178 = vld [vmem:[%s478 + $0x30] sm:$0xff]
        %v2179 = vld [vmem:[%s478 + $0x38] sm:$0xff]
        %v2180 = vld [vmem:[%s478 + $0x40] sm:$0xff]
        %v2181 = vld [vmem:[%s478 + $0x48] sm:$0xff]
        %v2182 = vld [vmem:[%s478 + $0x50] sm:$0xff]
        %v2183 = vld [vmem:[%s478 + $0x58] sm:$0xff]
        %v2184 = vld [vmem:[%s478 + $0x60] sm:$0xff]
        %v2185 = vld [vmem:[%s478 + $0x68] sm:$0xff]
        %v2186 = vld [vmem:[%s478 + $0x70] sm:$0xff]
        %v2187 = vld [vmem:[%s478 + $0x78] sm:$0xff]
        %v2188 = vld [vmem:[%s478 + $0x80] sm:$0xff]
        %v2189 = vld [vmem:[%s478 + $0x88] sm:$0xff]
        %v2190 = vld [vmem:[%s478 + $0x90] sm:$0xff]
        %v2191 = vld [vmem:[%s478 + $0x98] sm:$0xff]
        %v2192 = vld [vmem:[%s478 + $0xa0] sm:$0xff]
        %v2193 = vld [vmem:[%s478 + $0xa8] sm:$0xff]
        %v2194 = vld [vmem:[%s478 + $0xb0] sm:$0xff]
        %v2195 = vld [vmem:[%s478 + $0xb8] sm:$0xff]
        %v2196 = vld [vmem:[%s478 + $0xc0] sm:$0xff]
        %v2197 = vld [vmem:[%s478 + $0xc8] sm:$0xff]
        %v2198 = vld [vmem:[%s478 + $0xd0] sm:$0xff]
        %v2199 = vld [vmem:[%s478 + $0xd8] sm:$0xff]
        %v2200 = vld [vmem:[%s478 + $0xe0] sm:$0xff]
        %v2201 = vld [vmem:[%s478 + $0xe8] sm:$0xff]
        %v2202 = vld [vmem:[%s478 + $0xf0] sm:$0xff]
        %v2203 = vld [vmem:[%s478 + $0xf8] sm:$0xff]
        %v2204 = vld [vmem:[%s478 + $0x100] sm:$0xff]
        %v2205 = vld [vmem:[%s478 + $0x108] sm:$0xff]
        %v2206 = vld [vmem:[%s478 + $0x110] sm:$0xff]
        %v2207 = vld [vmem:[%s478 + $0x118] sm:$0xff]
        %v2208 = vld [vmem:[%s478 + $0x120] sm:$0xff]
        %v2209 = vld [vmem:[%s478 + $0x128] sm:$0xff]
        %v2210 = vld [vmem:[%s478 + $0x130] sm:$0xff]
        %v2211 = vld [vmem:[%s478 + $0x138] sm:$0xff]
        %v2212 = vld [vmem:[%s478 + $0x140] sm:$0xff]
        %v2213 = vld [vmem:[%s478 + $0x148] sm:$0xff]
        %v2214 = vld [vmem:[%s478 + $0x150] sm:$0xff]
        %v2215 = vld [vmem:[%s478 + $0x158] sm:$0xff]
        %v2216 = vld [vmem:[%s478 + $0x160] sm:$0xff]
        %v2217 = vld [vmem:[%s478 + $0x168] sm:$0xff]
        %v2218 = vld [vmem:[%s478 + $0x170] sm:$0xff]
        %v2219 = vld [vmem:[%s478 + $0x178] sm:$0xff]
        %v2220 = vld [vmem:[%s478 + $0x180] sm:$0xff]
        %v2221 = vld [vmem:[%s478 + $0x188] sm:$0xff]
        %v2222 = vld [vmem:[%s478 + $0x190] sm:$0xff]
        %v2223 = vld [vmem:[%s478 + $0x198] sm:$0xff]
        %v2224 = vld [vmem:[%s478 + $0x1a0] sm:$0xff]
        %v2225 = vld [vmem:[%s478 + $0x1a8] sm:$0xff]
        %v2226 = vld [vmem:[%s478 + $0x1b0] sm:$0xff]
        %v2227 = vld [vmem:[%s478 + $0x1b8] sm:$0xff]
        %v2228 = vld [vmem:[%s478 + $0x1c0] sm:$0xff]
        %v2229 = vld [vmem:[%s478 + $0x1c8] sm:$0xff]
        %v2230 = vld [vmem:[%s478 + $0x1d0] sm:$0xff]
        %v2231 = vld [vmem:[%s478 + $0x1d8] sm:$0xff]
        %v2232 = vld [vmem:[%s478 + $0x1e0] sm:$0xff]
        %v2233 = vld [vmem:[%s478 + $0x1e8] sm:$0xff]
        %v2234 = vld [vmem:[%s478 + $0x1f0] sm:$0xff]
        %v2235 = vld [vmem:[%s478 + $0x1f8] sm:$0xff]
        %v2236 = vld [vmem:[%s557] sm:$0xf]
        %v2238 = vlaneseq
        %v2239 = vshrl.u32 %v2238, 7
        %v2240 = vsub.s32 0, %v2239
        %v2241 = vrot.slane %v2236, %v2240
        %v2242 = vlaneseq
        %v2243 = vshrl.u32 %v2242, 7
        %v2244 = vsub.s32 1, %v2243
        %v2245 = vrot.slane %v2236, %v2244
        %v2246 = vlaneseq
        %v2247 = vshrl.u32 %v2246, 7
        %v2248 = vsub.s32 2, %v2247
        %v2249 = vrot.slane %v2236, %v2248
        %v2250 = vlaneseq
        %v2251 = vshrl.u32 %v2250, 7
        %v2252 = vsub.s32 3, %v2251
        %v2253 = vrot.slane %v2236, %v2252
        %v2322 = vunpack.c.l.b16 %v2172
        %v2323 = vunpack.c.h.b16 %v2172
        %v2324 = vunpack.c.l.b16 %v2173
        %v2325 = vunpack.c.h.b16 %v2173
        %v2326 = vunpack.c.l.b16 %v2174
        %v2327 = vunpack.c.h.b16 %v2174
        %v2328 = vunpack.c.l.b16 %v2175
        %v2329 = vunpack.c.h.b16 %v2175
        %v2330 = vunpack.c.l.b16 %v2176
        %v2331 = vunpack.c.h.b16 %v2176
        %v2332 = vunpack.c.l.b16 %v2177
        %v2333 = vunpack.c.h.b16 %v2177
        %v2334 = vunpack.c.l.b16 %v2178
        %v2335 = vunpack.c.h.b16 %v2178
        %v2336 = vunpack.c.l.b16 %v2179
        %v2337 = vunpack.c.h.b16 %v2179
        %v2338 = vunpack.c.l.b16 %v2180
        %v2339 = vunpack.c.h.b16 %v2180
        %v2340 = vunpack.c.l.b16 %v2181
        %v2341 = vunpack.c.h.b16 %v2181
        %v2342 = vunpack.c.l.b16 %v2182
        %v2343 = vunpack.c.h.b16 %v2182
        %v2344 = vunpack.c.l.b16 %v2183
        %v2345 = vunpack.c.h.b16 %v2183
        %v2346 = vunpack.c.l.b16 %v2184
        %v2347 = vunpack.c.h.b16 %v2184
        %v2348 = vunpack.c.l.b16 %v2185
        %v2349 = vunpack.c.h.b16 %v2185
        %v2350 = vunpack.c.l.b16 %v2186
        %v2351 = vunpack.c.h.b16 %v2186
        %v2352 = vunpack.c.l.b16 %v2187
        %v2353 = vunpack.c.h.b16 %v2187
        %v2354 = vunpack.c.l.b16 %v2188
        %v2355 = vunpack.c.h.b16 %v2188
        %v2356 = vunpack.c.l.b16 %v2189
        %v2357 = vunpack.c.h.b16 %v2189
        %v2358 = vunpack.c.l.b16 %v2190
        %v2359 = vunpack.c.h.b16 %v2190
        %v2360 = vunpack.c.l.b16 %v2191
        %v2361 = vunpack.c.h.b16 %v2191
        %v2362 = vunpack.c.l.b16 %v2192
        %v2363 = vunpack.c.h.b16 %v2192
        %v2364 = vunpack.c.l.b16 %v2193
        %v2365 = vunpack.c.h.b16 %v2193
        %v2366 = vunpack.c.l.b16 %v2194
        %v2367 = vunpack.c.h.b16 %v2194
        %v2368 = vunpack.c.l.b16 %v2195
        %v2369 = vunpack.c.h.b16 %v2195
        %v2370 = vunpack.c.l.b16 %v2196
        %v2371 = vunpack.c.h.b16 %v2196
        %v2372 = vunpack.c.l.b16 %v2197
        %v2373 = vunpack.c.h.b16 %v2197
        %v2374 = vunpack.c.l.b16 %v2198
        %v2375 = vunpack.c.h.b16 %v2198
        %v2376 = vunpack.c.l.b16 %v2199
        %v2377 = vunpack.c.h.b16 %v2199
        %v2378 = vunpack.c.l.b16 %v2200
        %v2379 = vunpack.c.h.b16 %v2200
        %v2380 = vunpack.c.l.b16 %v2201
        %v2381 = vunpack.c.h.b16 %v2201
        %v2382 = vunpack.c.l.b16 %v2202
        %v2383 = vunpack.c.h.b16 %v2202
        %v2384 = vunpack.c.l.b16 %v2203
        %v2385 = vunpack.c.h.b16 %v2203
        %v2386 = vunpack.c.l.b16 %v2204
        %v2387 = vunpack.c.h.b16 %v2204
        %v2388 = vunpack.c.l.b16 %v2205
        %v2389 = vunpack.c.h.b16 %v2205
        %v2390 = vunpack.c.l.b16 %v2206
        %v2391 = vunpack.c.h.b16 %v2206
        %v2392 = vunpack.c.l.b16 %v2207
        %v2393 = vunpack.c.h.b16 %v2207
        %v2394 = vunpack.c.l.b16 %v2208
        %v2395 = vunpack.c.h.b16 %v2208
        %v2396 = vunpack.c.l.b16 %v2209
        %v2397 = vunpack.c.h.b16 %v2209
        %v2398 = vunpack.c.l.b16 %v2210
        %v2399 = vunpack.c.h.b16 %v2210
        %v2400 = vunpack.c.l.b16 %v2211
        %v2401 = vunpack.c.h.b16 %v2211
        %v2402 = vunpack.c.l.b16 %v2212
        %v2403 = vunpack.c.h.b16 %v2212
        %v2404 = vunpack.c.l.b16 %v2213
        %v2405 = vunpack.c.h.b16 %v2213
        %v2406 = vunpack.c.l.b16 %v2214
        %v2407 = vunpack.c.h.b16 %v2214
        %v2408 = vunpack.c.l.b16 %v2215
        %v2409 = vunpack.c.h.b16 %v2215
        %v2410 = vunpack.c.l.b16 %v2216
        %v2411 = vunpack.c.h.b16 %v2216
        %v2412 = vunpack.c.l.b16 %v2217
        %v2413 = vunpack.c.h.b16 %v2217
        %v2414 = vunpack.c.l.b16 %v2218
        %v2415 = vunpack.c.h.b16 %v2218
        %v2416 = vunpack.c.l.b16 %v2219
        %v2417 = vunpack.c.h.b16 %v2219
        %v2418 = vunpack.c.l.b16 %v2220
        %v2419 = vunpack.c.h.b16 %v2220
        %v2420 = vunpack.c.l.b16 %v2221
        %v2421 = vunpack.c.h.b16 %v2221
        %v2422 = vunpack.c.l.b16 %v2222
        %v2423 = vunpack.c.h.b16 %v2222
        %v2424 = vunpack.c.l.b16 %v2223
        %v2425 = vunpack.c.h.b16 %v2223
        %v2426 = vunpack.c.l.b16 %v2224
        %v2427 = vunpack.c.h.b16 %v2224
        %v2428 = vunpack.c.l.b16 %v2225
        %v2429 = vunpack.c.h.b16 %v2225
        %v2430 = vunpack.c.l.b16 %v2226
        %v2431 = vunpack.c.h.b16 %v2226
        %v2432 = vunpack.c.l.b16 %v2227
        %v2433 = vunpack.c.h.b16 %v2227
        %v2434 = vunpack.c.l.b16 %v2228
        %v2435 = vunpack.c.h.b16 %v2228
        %v2436 = vunpack.c.l.b16 %v2229
        %v2437 = vunpack.c.h.b16 %v2229
        %v2438 = vunpack.c.l.b16 %v2230
        %v2439 = vunpack.c.h.b16 %v2230
        %v2440 = vunpack.c.l.b16 %v2231
        %v2441 = vunpack.c.h.b16 %v2231
        %v2442 = vunpack.c.l.b16 %v2232
        %v2443 = vunpack.c.h.b16 %v2232
        %v2444 = vunpack.c.l.b16 %v2233
        %v2445 = vunpack.c.h.b16 %v2233
        %v2446 = vunpack.c.l.b16 %v2234
        %v2447 = vunpack.c.h.b16 %v2234
        %v2448 = vunpack.c.l.b16 %v2235
        %v2449 = vunpack.c.h.b16 %v2235
        %v2450 = vpack.c.b16 %v2326, %v2322
        %v2451 = vpack.c.b16 %v2327, %v2323
        %v2452 = vpack.c.b16 %v2328, %v2324
        %v2453 = vpack.c.b16 %v2329, %v2325
        %v2454 = vpack.c.b16 %v2334, %v2330
        %v2455 = vpack.c.b16 %v2335, %v2331
        %v2456 = vpack.c.b16 %v2336, %v2332
        %v2457 = vpack.c.b16 %v2337, %v2333
        %v2458 = vpack.c.b16 %v2342, %v2338
        %v2459 = vpack.c.b16 %v2343, %v2339
        %v2460 = vpack.c.b16 %v2344, %v2340
        %v2461 = vpack.c.b16 %v2345, %v2341
        %v2462 = vpack.c.b16 %v2350, %v2346
        %v2463 = vpack.c.b16 %v2351, %v2347
        %v2464 = vpack.c.b16 %v2352, %v2348
        %v2465 = vpack.c.b16 %v2353, %v2349
        %v2466 = vpack.c.b16 %v2358, %v2354
        %v2467 = vpack.c.b16 %v2359, %v2355
        %v2468 = vpack.c.b16 %v2360, %v2356
        %v2469 = vpack.c.b16 %v2361, %v2357
        %v2470 = vpack.c.b16 %v2366, %v2362
        %v2471 = vpack.c.b16 %v2367, %v2363
        %v2472 = vpack.c.b16 %v2368, %v2364
        %v2473 = vpack.c.b16 %v2369, %v2365
        %v2474 = vpack.c.b16 %v2374, %v2370
        %v2475 = vpack.c.b16 %v2375, %v2371
        %v2476 = vpack.c.b16 %v2376, %v2372
        %v2477 = vpack.c.b16 %v2377, %v2373
        %v2478 = vpack.c.b16 %v2382, %v2378
        %v2479 = vpack.c.b16 %v2383, %v2379
        %v2480 = vpack.c.b16 %v2384, %v2380
        %v2481 = vpack.c.b16 %v2385, %v2381
        %v2482 = vpack.c.b16 %v2390, %v2386
        %v2483 = vpack.c.b16 %v2391, %v2387
        %v2484 = vpack.c.b16 %v2392, %v2388
        %v2485 = vpack.c.b16 %v2393, %v2389
        %v2486 = vpack.c.b16 %v2398, %v2394
        %v2487 = vpack.c.b16 %v2399, %v2395
        %v2488 = vpack.c.b16 %v2400, %v2396
        %v2489 = vpack.c.b16 %v2401, %v2397
        %v2490 = vpack.c.b16 %v2406, %v2402
        %v2491 = vpack.c.b16 %v2407, %v2403
        %v2492 = vpack.c.b16 %v2408, %v2404
        %v2493 = vpack.c.b16 %v2409, %v2405
        %v2494 = vpack.c.b16 %v2414, %v2410
        %v2495 = vpack.c.b16 %v2415, %v2411
        %v2496 = vpack.c.b16 %v2416, %v2412
        %v2497 = vpack.c.b16 %v2417, %v2413
        %v2498 = vpack.c.b16 %v2422, %v2418
        %v2499 = vpack.c.b16 %v2423, %v2419
        %v2500 = vpack.c.b16 %v2424, %v2420
        %v2501 = vpack.c.b16 %v2425, %v2421
        %v2502 = vpack.c.b16 %v2430, %v2426
        %v2503 = vpack.c.b16 %v2431, %v2427
        %v2504 = vpack.c.b16 %v2432, %v2428
        %v2505 = vpack.c.b16 %v2433, %v2429
        %v2506 = vpack.c.b16 %v2438, %v2434
        %v2507 = vpack.c.b16 %v2439, %v2435
        %v2508 = vpack.c.b16 %v2440, %v2436
        %v2509 = vpack.c.b16 %v2441, %v2437
        %v2510 = vpack.c.b16 %v2446, %v2442
        %v2511 = vpack.c.b16 %v2447, %v2443
        %v2512 = vpack.c.b16 %v2448, %v2444
        %v2513 = vpack.c.b16 %v2449, %v2445
        %2578 = vmatprep.subr.bf16.mxu0 %v2451
        %2579 = vmatpush1.bf16.msra.mxu0 %v2450
        %2580 = vmatprep.subr.bf16.mxu0 %v2455
        %2581 = vmatpush1.bf16.msra.mxu0 %v2454
        %2582 = vmatprep.subr.bf16.mxu0 %v2459
        %2583 = vmatpush1.bf16.msra.mxu0 %v2458
        %2584 = vmatprep.subr.bf16.mxu0 %v2463
        %2585 = vmatpush1.bf16.msra.mxu0 %v2462
        %2586 = vmatprep.subr.bf16.mxu0 %v2467
        %2587 = vmatpush1.bf16.msra.mxu0 %v2466
        %2588 = vmatprep.subr.bf16.mxu0 %v2471
        %2589 = vmatpush1.bf16.msra.mxu0 %v2470
        %2590 = vmatprep.subr.bf16.mxu0 %v2475
        %2591 = vmatpush1.bf16.msra.mxu0 %v2474
        %2592 = vmatprep.subr.bf16.mxu0 %v2479
        %2593 = vmatpush1.bf16.msra.mxu0 %v2478
        %2594 = vmatprep.subr.bf16.mxu0 %v2483
        %2595 = vmatpush1.bf16.msra.mxu0 %v2482
        %2596 = vmatprep.subr.bf16.mxu0 %v2487
        %2597 = vmatpush1.bf16.msra.mxu0 %v2486
        %2598 = vmatprep.subr.bf16.mxu0 %v2491
        %2599 = vmatpush1.bf16.msra.mxu0 %v2490
        %2600 = vmatprep.subr.bf16.mxu0 %v2495
        %2601 = vmatpush1.bf16.msra.mxu0 %v2494
        %2602 = vmatprep.subr.bf16.mxu0 %v2499
        %2603 = vmatpush1.bf16.msra.mxu0 %v2498
        %2604 = vmatprep.subr.bf16.mxu0 %v2503
        %2605 = vmatpush1.bf16.msra.mxu0 %v2502
        %2606 = vmatprep.subr.bf16.mxu0 %v2507
        %2607 = vmatpush1.bf16.msra.mxu0 %v2506
        %2608 = vmatprep.subr.bf16.mxu0 %v2511
        %2609 = vmatpush1.bf16.msra.mxu0 %v2510
        %2610 = vmatprep.mubr.bf16.mxu0 %v2169
        %2611 = vmatmul.mubr.bf16.gmra.mrb[0].mxu0 %v2168
        %v2612 = vpop.f32.mrb[0].mxu0
        %v2613 = vadd.f32 %v2241, %v2612
        %v2614 = vpop.f32.mrb[0].mxu0
        %v2615 = vadd.f32 %v2245, %v2614
        %v2616 = vpop.f32.mrb[0].mxu0
        %v2617 = vadd.f32 %v2241, %v2616
        %v2618 = vpop.f32.mrb[0].mxu0
        %v2619 = vadd.f32 %v2245, %v2618
        %2620 = vmatprep.mubr.bf16.mxu0 %v2171
        %2621 = vmatmul.mubr.bf16.gmra.mrb[0].mxu0 %v2170
        %v2622 = vpop.f32.mrb[0].mxu0
        %v2623 = vadd.f32 %v2241, %v2622
        %v2624 = vpop.f32.mrb[0].mxu0
        %v2625 = vadd.f32 %v2245, %v2624
        %v2626 = vpop.f32.mrb[0].mxu0
        %v2627 = vadd.f32 %v2241, %v2626
        %v2628 = vpop.f32.mrb[0].mxu0
        %v2629 = vadd.f32 %v2245, %v2628
        %2630 = vdwg.mxu0
        %2631 = vmatprep.subr.bf16.mxu0 %v2453
        %2632 = vmatpush1.bf16.msra.mxu0 %v2452
        %2633 = vmatprep.subr.bf16.mxu0 %v2457
        %2634 = vmatpush1.bf16.msra.mxu0 %v2456
        %2635 = vmatprep.subr.bf16.mxu0 %v2461
        %2636 = vmatpush1.bf16.msra.mxu0 %v2460
        %2637 = vmatprep.subr.bf16.mxu0 %v2465
        %2638 = vmatpush1.bf16.msra.mxu0 %v2464
        %2639 = vmatprep.subr.bf16.mxu0 %v2469
        %2640 = vmatpush1.bf16.msra.mxu0 %v2468
        %2641 = vmatprep.subr.bf16.mxu0 %v2473
        %2642 = vmatpush1.bf16.msra.mxu0 %v2472
        %2643 = vmatprep.subr.bf16.mxu0 %v2477
        %2644 = vmatpush1.bf16.msra.mxu0 %v2476
        %2645 = vmatprep.subr.bf16.mxu0 %v2481
        %2646 = vmatpush1.bf16.msra.mxu0 %v2480
        %2647 = vmatprep.subr.bf16.mxu0 %v2485
        %2648 = vmatpush1.bf16.msra.mxu0 %v2484
        %2649 = vmatprep.subr.bf16.mxu0 %v2489
        %2650 = vmatpush1.bf16.msra.mxu0 %v2488
        %2651 = vmatprep.subr.bf16.mxu0 %v2493
        %2652 = vmatpush1.bf16.msra.mxu0 %v2492
        %2653 = vmatprep.subr.bf16.mxu0 %v2497
        %2654 = vmatpush1.bf16.msra.mxu0 %v2496
        %2655 = vmatprep.subr.bf16.mxu0 %v2501
        %2656 = vmatpush1.bf16.msra.mxu0 %v2500
        %2657 = vmatprep.subr.bf16.mxu0 %v2505
        %2658 = vmatpush1.bf16.msra.mxu0 %v2504
        %2659 = vmatprep.subr.bf16.mxu0 %v2509
        %2660 = vmatpush1.bf16.msra.mxu0 %v2508
        %2661 = vmatprep.subr.bf16.mxu0 %v2513
        %2662 = vmatpush1.bf16.msra.mxu0 %v2512
        %2663 = vmatprep.mubr.bf16.mxu0 %v2169
        %2664 = vmatmul.mubr.bf16.gmra.mrb[0].mxu0 %v2168
        %v2665 = vpop.f32.mrb[0].mxu0
        %v2666 = vadd.f32 %v2249, %v2665
        %v2667 = vpop.f32.mrb[0].mxu0
        %v2668 = vadd.f32 %v2253, %v2667
        %v2669 = vpop.f32.mrb[0].mxu0
        %v2670 = vadd.f32 %v2249, %v2669
        %v2671 = vpop.f32.mrb[0].mxu0
        %v2672 = vadd.f32 %v2253, %v2671
        %2673 = vmatprep.mubr.bf16.mxu0 %v2171
        %2674 = vmatmul.mubr.bf16.gmra.mrb[0].mxu0 %v2170
        %v2675 = vpop.f32.mrb[0].mxu0
        %v2676 = vadd.f32 %v2249, %v2675
        %v2677 = vpop.f32.mrb[0].mxu0
        %v2678 = vadd.f32 %v2253, %v2677
        %v2679 = vpop.f32.mrb[0].mxu0
        %v2680 = vadd.f32 %v2249, %v2679
        %v2681 = vpop.f32.mrb[0].mxu0
        %v2682 = vadd.f32 %v2253, %v2681
        %2683 = vdwg.mxu0
        %v2684 = vmax.f32 %v2613, 0.0
        %v2685 = vmax.f32 %v2615, 0.0
        %v2686 = vmax.f32 %v2666, 0.0
        %v2687 = vmax.f32 %v2668, 0.0
        %v2688 = vmax.f32 %v2617, 0.0
        %v2689 = vmax.f32 %v2619, 0.0
        %v2690 = vmax.f32 %v2670, 0.0
        %v2691 = vmax.f32 %v2672, 0.0
        %v2692 = vmax.f32 %v2623, 0.0
        %v2693 = vmax.f32 %v2625, 0.0
        %v2694 = vmax.f32 %v2676, 0.0
        %v2695 = vmax.f32 %v2678, 0.0
        %v2696 = vmax.f32 %v2627, 0.0
        %v2697 = vmax.f32 %v2629, 0.0
        %v2698 = vmax.f32 %v2680, 0.0
        %v2699 = vmax.f32 %v2682, 0.0
        %v2700 = vpack.c.bf16 %v2688, %v2684
        %v2701 = vpack.c.bf16 %v2689, %v2685
        %v2702 = vpack.c.bf16 %v2690, %v2686
        %v2703 = vpack.c.bf16 %v2691, %v2687
        %v2704 = vpack.c.bf16 %v2696, %v2692
        %v2705 = vpack.c.bf16 %v2697, %v2693
        %v2706 = vpack.c.bf16 %v2698, %v2694
        %v2707 = vpack.c.bf16 %v2699, %v2695
        %v2708 = vld [vmem:[%s487] sm:$0xff]
        %v2709 = vld [vmem:[%s487 + $0x8] sm:$0xff]
        %v2710 = vld [vmem:[%s487 + $0x10] sm:$0xff]
        %v2711 = vld [vmem:[%s487 + $0x18] sm:$0xff]
        %v2712 = vld [vmem:[%s487 + $0x20] sm:$0xff]
        %v2713 = vld [vmem:[%s487 + $0x28] sm:$0xff]
        %v2714 = vld [vmem:[%s487 + $0x30] sm:$0xff]
        %v2715 = vld [vmem:[%s487 + $0x38] sm:$0xff]
        %v2716 = vld [vmem:[%s487 + $0x40] sm:$0xff]
        %v2717 = vld [vmem:[%s487 + $0x48] sm:$0xff]
        %v2718 = vld [vmem:[%s487 + $0x50] sm:$0xff]
        %v2719 = vld [vmem:[%s487 + $0x58] sm:$0xff]
        %v2720 = vld [vmem:[%s487 + $0x60] sm:$0xff]
        %v2721 = vld [vmem:[%s487 + $0x68] sm:$0xff]
        %v2722 = vld [vmem:[%s487 + $0x70] sm:$0xff]
        %v2723 = vld [vmem:[%s487 + $0x78] sm:$0xff]
        %v2724 = vld [vmem:[%s487 + $0x80] sm:$0xff]
        %v2725 = vld [vmem:[%s487 + $0x88] sm:$0xff]
        %v2726 = vld [vmem:[%s487 + $0x90] sm:$0xff]
        %v2727 = vld [vmem:[%s487 + $0x98] sm:$0xff]
        %v2728 = vld [vmem:[%s487 + $0xa0] sm:$0xff]
        %v2729 = vld [vmem:[%s487 + $0xa8] sm:$0xff]
        %v2730 = vld [vmem:[%s487 + $0xb0] sm:$0xff]
        %v2731 = vld [vmem:[%s487 + $0xb8] sm:$0xff]
        %v2732 = vld [vmem:[%s487 + $0xc0] sm:$0xff]
        %v2733 = vld [vmem:[%s487 + $0xc8] sm:$0xff]
        %v2734 = vld [vmem:[%s487 + $0xd0] sm:$0xff]
        %v2735 = vld [vmem:[%s487 + $0xd8] sm:$0xff]
        %v2736 = vld [vmem:[%s487 + $0xe0] sm:$0xff]
        %v2737 = vld [vmem:[%s487 + $0xe8] sm:$0xff]
        %v2738 = vld [vmem:[%s487 + $0xf0] sm:$0xff]
        %v2739 = vld [vmem:[%s487 + $0xf8] sm:$0xff]
        %v2740 = vld [vmem:[%s487 + $0x100] sm:$0xff]
        %v2741 = vld [vmem:[%s487 + $0x108] sm:$0xff]
        %v2742 = vld [vmem:[%s487 + $0x110] sm:$0xff]
        %v2743 = vld [vmem:[%s487 + $0x118] sm:$0xff]
        %v2744 = vld [vmem:[%s487 + $0x120] sm:$0xff]
        %v2745 = vld [vmem:[%s487 + $0x128] sm:$0xff]
        %v2746 = vld [vmem:[%s487 + $0x130] sm:$0xff]
        %v2747 = vld [vmem:[%s487 + $0x138] sm:$0xff]
        %v2748 = vld [vmem:[%s487 + $0x140] sm:$0xff]
        %v2749 = vld [vmem:[%s487 + $0x148] sm:$0xff]
        %v2750 = vld [vmem:[%s487 + $0x150] sm:$0xff]
        %v2751 = vld [vmem:[%s487 + $0x158] sm:$0xff]
        %v2752 = vld [vmem:[%s487 + $0x160] sm:$0xff]
        %v2753 = vld [vmem:[%s487 + $0x168] sm:$0xff]
        %v2754 = vld [vmem:[%s487 + $0x170] sm:$0xff]
        %v2755 = vld [vmem:[%s487 + $0x178] sm:$0xff]
        %v2756 = vld [vmem:[%s487 + $0x180] sm:$0xff]
        %v2757 = vld [vmem:[%s487 + $0x188] sm:$0xff]
        %v2758 = vld [vmem:[%s487 + $0x190] sm:$0xff]
        %v2759 = vld [vmem:[%s487 + $0x198] sm:$0xff]
        %v2760 = vld [vmem:[%s487 + $0x1a0] sm:$0xff]
        %v2761 = vld [vmem:[%s487 + $0x1a8] sm:$0xff]
        %v2762 = vld [vmem:[%s487 + $0x1b0] sm:$0xff]
        %v2763 = vld [vmem:[%s487 + $0x1b8] sm:$0xff]
        %v2764 = vld [vmem:[%s487 + $0x1c0] sm:$0xff]
        %v2765 = vld [vmem:[%s487 + $0x1c8] sm:$0xff]
        %v2766 = vld [vmem:[%s487 + $0x1d0] sm:$0xff]
        %v2767 = vld [vmem:[%s487 + $0x1d8] sm:$0xff]
        %v2768 = vld [vmem:[%s487 + $0x1e0] sm:$0xff]
        %v2769 = vld [vmem:[%s487 + $0x1e8] sm:$0xff]
        %v2770 = vld [vmem:[%s487 + $0x1f0] sm:$0xff]
        %v2771 = vld [vmem:[%s487 + $0x1f8] sm:$0xff]
        %v2772 = vlaneseq
        %v2773 = vshrl.u32 %v2772, 7
        %v2774 = vsub.s32 3, %v2773
        %v2775 = vrot.slane %v592, %v2774
        %v2776 = vlaneseq
        %v2777 = vshrl.u32 %v2776, 7
        %v2778 = vsub.s32 3, %v2777
        %v2779 = vrot.slane %v593, %v2778
        %v2844 = vunpack.c.l.b16 %v2708
        %v2845 = vunpack.c.h.b16 %v2708
        %v2846 = vunpack.c.l.b16 %v2709
        %v2847 = vunpack.c.h.b16 %v2709
        %v2848 = vunpack.c.l.b16 %v2710
        %v2849 = vunpack.c.h.b16 %v2710
        %v2850 = vunpack.c.l.b16 %v2711
        %v2851 = vunpack.c.h.b16 %v2711
        %v2852 = vunpack.c.l.b16 %v2712
        %v2853 = vunpack.c.h.b16 %v2712
        %v2854 = vunpack.c.l.b16 %v2713
        %v2855 = vunpack.c.h.b16 %v2713
        %v2856 = vunpack.c.l.b16 %v2714
        %v2857 = vunpack.c.h.b16 %v2714
        %v2858 = vunpack.c.l.b16 %v2715
        %v2859 = vunpack.c.h.b16 %v2715
        %v2860 = vunpack.c.l.b16 %v2716
        %v2861 = vunpack.c.h.b16 %v2716
        %v2862 = vunpack.c.l.b16 %v2717
        %v2863 = vunpack.c.h.b16 %v2717
        %v2864 = vunpack.c.l.b16 %v2718
        %v2865 = vunpack.c.h.b16 %v2718
        %v2866 = vunpack.c.l.b16 %v2719
        %v2867 = vunpack.c.h.b16 %v2719
        %v2868 = vunpack.c.l.b16 %v2720
        %v2869 = vunpack.c.h.b16 %v2720
        %v2870 = vunpack.c.l.b16 %v2721
        %v2871 = vunpack.c.h.b16 %v2721
        %v2872 = vunpack.c.l.b16 %v2722
        %v2873 = vunpack.c.h.b16 %v2722
        %v2874 = vunpack.c.l.b16 %v2723
        %v2875 = vunpack.c.h.b16 %v2723
        %v2876 = vunpack.c.l.b16 %v2724
        %v2877 = vunpack.c.h.b16 %v2724
        %v2878 = vunpack.c.l.b16 %v2725
        %v2879 = vunpack.c.h.b16 %v2725
        %v2880 = vunpack.c.l.b16 %v2726
        %v2881 = vunpack.c.h.b16 %v2726
        %v2882 = vunpack.c.l.b16 %v2727
        %v2883 = vunpack.c.h.b16 %v2727
        %v2884 = vunpack.c.l.b16 %v2728
        %v2885 = vunpack.c.h.b16 %v2728
        %v2886 = vunpack.c.l.b16 %v2729
        %v2887 = vunpack.c.h.b16 %v2729
        %v2888 = vunpack.c.l.b16 %v2730
        %v2889 = vunpack.c.h.b16 %v2730
        %v2890 = vunpack.c.l.b16 %v2731
        %v2891 = vunpack.c.h.b16 %v2731
        %v2892 = vunpack.c.l.b16 %v2732
        %v2893 = vunpack.c.h.b16 %v2732
        %v2894 = vunpack.c.l.b16 %v2733
        %v2895 = vunpack.c.h.b16 %v2733
        %v2896 = vunpack.c.l.b16 %v2734
        %v2897 = vunpack.c.h.b16 %v2734
        %v2898 = vunpack.c.l.b16 %v2735
        %v2899 = vunpack.c.h.b16 %v2735
        %v2900 = vunpack.c.l.b16 %v2736
        %v2901 = vunpack.c.h.b16 %v2736
        %v2902 = vunpack.c.l.b16 %v2737
        %v2903 = vunpack.c.h.b16 %v2737
        %v2904 = vunpack.c.l.b16 %v2738
        %v2905 = vunpack.c.h.b16 %v2738
        %v2906 = vunpack.c.l.b16 %v2739
        %v2907 = vunpack.c.h.b16 %v2739
        %v2908 = vunpack.c.l.b16 %v2740
        %v2909 = vunpack.c.h.b16 %v2740
        %v2910 = vunpack.c.l.b16 %v2741
        %v2911 = vunpack.c.h.b16 %v2741
        %v2912 = vunpack.c.l.b16 %v2742
        %v2913 = vunpack.c.h.b16 %v2742
        %v2914 = vunpack.c.l.b16 %v2743
        %v2915 = vunpack.c.h.b16 %v2743
        %v2916 = vunpack.c.l.b16 %v2744
        %v2917 = vunpack.c.h.b16 %v2744
        %v2918 = vunpack.c.l.b16 %v2745
        %v2919 = vunpack.c.h.b16 %v2745
        %v2920 = vunpack.c.l.b16 %v2746
        %v2921 = vunpack.c.h.b16 %v2746
        %v2922 = vunpack.c.l.b16 %v2747
        %v2923 = vunpack.c.h.b16 %v2747
        %v2924 = vunpack.c.l.b16 %v2748
        %v2925 = vunpack.c.h.b16 %v2748
        %v2926 = vunpack.c.l.b16 %v2749
        %v2927 = vunpack.c.h.b16 %v2749
        %v2928 = vunpack.c.l.b16 %v2750
        %v2929 = vunpack.c.h.b16 %v2750
        %v2930 = vunpack.c.l.b16 %v2751
        %v2931 = vunpack.c.h.b16 %v2751
        %v2932 = vunpack.c.l.b16 %v2752
        %v2933 = vunpack.c.h.b16 %v2752
        %v2934 = vunpack.c.l.b16 %v2753
        %v2935 = vunpack.c.h.b16 %v2753
        %v2936 = vunpack.c.l.b16 %v2754
        %v2937 = vunpack.c.h.b16 %v2754
        %v2938 = vunpack.c.l.b16 %v2755
        %v2939 = vunpack.c.h.b16 %v2755
        %v2940 = vunpack.c.l.b16 %v2756
        %v2941 = vunpack.c.h.b16 %v2756
        %v2942 = vunpack.c.l.b16 %v2757
        %v2943 = vunpack.c.h.b16 %v2757
        %v2944 = vunpack.c.l.b16 %v2758
        %v2945 = vunpack.c.h.b16 %v2758
        %v2946 = vunpack.c.l.b16 %v2759
        %v2947 = vunpack.c.h.b16 %v2759
        %v2948 = vunpack.c.l.b16 %v2760
        %v2949 = vunpack.c.h.b16 %v2760
        %v2950 = vunpack.c.l.b16 %v2761
        %v2951 = vunpack.c.h.b16 %v2761
        %v2952 = vunpack.c.l.b16 %v2762
        %v2953 = vunpack.c.h.b16 %v2762
        %v2954 = vunpack.c.l.b16 %v2763
        %v2955 = vunpack.c.h.b16 %v2763
        %v2956 = vunpack.c.l.b16 %v2764
        %v2957 = vunpack.c.h.b16 %v2764
        %v2958 = vunpack.c.l.b16 %v2765
        %v2959 = vunpack.c.h.b16 %v2765
        %v2960 = vunpack.c.l.b16 %v2766
        %v2961 = vunpack.c.h.b16 %v2766
        %v2962 = vunpack.c.l.b16 %v2767
        %v2963 = vunpack.c.h.b16 %v2767
        %v2964 = vunpack.c.l.b16 %v2768
        %v2965 = vunpack.c.h.b16 %v2768
        %v2966 = vunpack.c.l.b16 %v2769
        %v2967 = vunpack.c.h.b16 %v2769
        %v2968 = vunpack.c.l.b16 %v2770
        %v2969 = vunpack.c.h.b16 %v2770
        %v2970 = vunpack.c.l.b16 %v2771
        %v2971 = vunpack.c.h.b16 %v2771
        %v2972 = vpack.c.b16 %v2846, %v2844
        %v2973 = vpack.c.b16 %v2847, %v2845
        %v2974 = vpack.c.b16 %v2850, %v2848
        %v2975 = vpack.c.b16 %v2851, %v2849
        %v2976 = vpack.c.b16 %v2854, %v2852
        %v2977 = vpack.c.b16 %v2855, %v2853
        %v2978 = vpack.c.b16 %v2858, %v2856
        %v2979 = vpack.c.b16 %v2859, %v2857
        %v2980 = vpack.c.b16 %v2862, %v2860
        %v2981 = vpack.c.b16 %v2863, %v2861
        %v2982 = vpack.c.b16 %v2866, %v2864
        %v2983 = vpack.c.b16 %v2867, %v2865
        %v2984 = vpack.c.b16 %v2870, %v2868
        %v2985 = vpack.c.b16 %v2871, %v2869
        %v2986 = vpack.c.b16 %v2874, %v2872
        %v2987 = vpack.c.b16 %v2875, %v2873
        %v2988 = vpack.c.b16 %v2878, %v2876
        %v2989 = vpack.c.b16 %v2879, %v2877
        %v2990 = vpack.c.b16 %v2882, %v2880
        %v2991 = vpack.c.b16 %v2883, %v2881
        %v2992 = vpack.c.b16 %v2886, %v2884
        %v2993 = vpack.c.b16 %v2887, %v2885
        %v2994 = vpack.c.b16 %v2890, %v2888
        %v2995 = vpack.c.b16 %v2891, %v2889
        %v2996 = vpack.c.b16 %v2894, %v2892
        %v2997 = vpack.c.b16 %v2895, %v2893
        %v2998 = vpack.c.b16 %v2898, %v2896
        %v2999 = vpack.c.b16 %v2899, %v2897
        %v3000 = vpack.c.b16 %v2902, %v2900
        %v3001 = vpack.c.b16 %v2903, %v2901
        %v3002 = vpack.c.b16 %v2906, %v2904
        %v3003 = vpack.c.b16 %v2907, %v2905
        %v3004 = vpack.c.b16 %v2910, %v2908
        %v3005 = vpack.c.b16 %v2911, %v2909
        %v3006 = vpack.c.b16 %v2914, %v2912
        %v3007 = vpack.c.b16 %v2915, %v2913
        %v3008 = vpack.c.b16 %v2918, %v2916
        %v3009 = vpack.c.b16 %v2919, %v2917
        %v3010 = vpack.c.b16 %v2922, %v2920
        %v3011 = vpack.c.b16 %v2923, %v2921
        %v3012 = vpack.c.b16 %v2926, %v2924
        %v3013 = vpack.c.b16 %v2927, %v2925
        %v3014 = vpack.c.b16 %v2930, %v2928
        %v3015 = vpack.c.b16 %v2931, %v2929
        %v3016 = vpack.c.b16 %v2934, %v2932
        %v3017 = vpack.c.b16 %v2935, %v2933
        %v3018 = vpack.c.b16 %v2938, %v2936
        %v3019 = vpack.c.b16 %v2939, %v2937
        %v3020 = vpack.c.b16 %v2942, %v2940
        %v3021 = vpack.c.b16 %v2943, %v2941
        %v3022 = vpack.c.b16 %v2946, %v2944
        %v3023 = vpack.c.b16 %v2947, %v2945
        %v3024 = vpack.c.b16 %v2950, %v2948
        %v3025 = vpack.c.b16 %v2951, %v2949
        %v3026 = vpack.c.b16 %v2954, %v2952
        %v3027 = vpack.c.b16 %v2955, %v2953
        %v3028 = vpack.c.b16 %v2958, %v2956
        %v3029 = vpack.c.b16 %v2959, %v2957
        %v3030 = vpack.c.b16 %v2962, %v2960
        %v3031 = vpack.c.b16 %v2963, %v2961
        %v3032 = vpack.c.b16 %v2966, %v2964
        %v3033 = vpack.c.b16 %v2967, %v2965
        %v3034 = vpack.c.b16 %v2970, %v2968
        %v3035 = vpack.c.b16 %v2971, %v2969
        %3100 = vmatprep.subr.bf16.mxu0 %v2973
        %3101 = vmatpush1.bf16.msra.mxu0 %v2972
        %3102 = vmatprep.subr.bf16.mxu0 %v2975
        %3103 = vmatpush1.bf16.msra.mxu0 %v2974
        %3104 = vmatprep.subr.bf16.mxu0 %v2977
        %3105 = vmatpush1.bf16.msra.mxu0 %v2976
        %3106 = vmatprep.subr.bf16.mxu0 %v2979
        %3107 = vmatpush1.bf16.msra.mxu0 %v2978
        %3108 = vmatprep.subr.bf16.mxu0 %v2981
        %3109 = vmatpush1.bf16.msra.mxu0 %v2980
        %3110 = vmatprep.subr.bf16.mxu0 %v2983
        %3111 = vmatpush1.bf16.msra.mxu0 %v2982
        %3112 = vmatprep.subr.bf16.mxu0 %v2985
        %3113 = vmatpush1.bf16.msra.mxu0 %v2984
        %3114 = vmatprep.subr.bf16.mxu0 %v2987
        %3115 = vmatpush1.bf16.msra.mxu0 %v2986
        %3116 = vmatprep.subr.bf16.mxu0 %v2989
        %3117 = vmatpush1.bf16.msra.mxu0 %v2988
        %3118 = vmatprep.subr.bf16.mxu0 %v2991
        %3119 = vmatpush1.bf16.msra.mxu0 %v2990
        %3120 = vmatprep.subr.bf16.mxu0 %v2993
        %3121 = vmatpush1.bf16.msra.mxu0 %v2992
        %3122 = vmatprep.subr.bf16.mxu0 %v2995
        %3123 = vmatpush1.bf16.msra.mxu0 %v2994
        %3124 = vmatprep.subr.bf16.mxu0 %v2997
        %3125 = vmatpush1.bf16.msra.mxu0 %v2996
        %3126 = vmatprep.subr.bf16.mxu0 %v2999
        %3127 = vmatpush1.bf16.msra.mxu0 %v2998
        %3128 = vmatprep.subr.bf16.mxu0 %v3001
        %3129 = vmatpush1.bf16.msra.mxu0 %v3000
        %3130 = vmatprep.subr.bf16.mxu0 %v3003
        %3131 = vmatpush1.bf16.msra.mxu0 %v3002
        %3132 = vmatprep.mubr.bf16.mxu0 %v2701
        %3133 = vmatmul.mubr.bf16.gmra.mrb[0].mxu0 %v2700
        %v3134 = vpop.f32.mrb[0].mxu0
        %v3135 = vadd.f32 %v2775, %v3134
        %v3136 = vpop.f32.mrb[0].mxu0
        %v3137 = vadd.f32 %v2779, %v3136
        %v3138 = vpop.f32.mrb[0].mxu0
        %v3139 = vadd.f32 %v2775, %v3138
        %v3140 = vpop.f32.mrb[0].mxu0
        %v3141 = vadd.f32 %v2779, %v3140
        %3142 = vmatprep.mubr.bf16.mxu0 %v2705
        %3143 = vmatmul.mubr.bf16.gmra.mrb[0].mxu0 %v2704
        %v3144 = vpop.f32.mrb[0].mxu0
        %v3145 = vadd.f32 %v2775, %v3144
        %v3146 = vpop.f32.mrb[0].mxu0
        %v3147 = vadd.f32 %v2779, %v3146
        %v3148 = vpop.f32.mrb[0].mxu0
        %v3149 = vadd.f32 %v2775, %v3148
        %v3150 = vpop.f32.mrb[0].mxu0
        %v3151 = vadd.f32 %v2779, %v3150
        %3152 = vdwg.mxu0
        %3153 = vmatprep.subr.bf16.mxu0 %v3005
        %3154 = vmatpush1.bf16.msra.mxu0 %v3004
        %3155 = vmatprep.subr.bf16.mxu0 %v3007
        %3156 = vmatpush1.bf16.msra.mxu0 %v3006
        %3157 = vmatprep.subr.bf16.mxu0 %v3009
        %3158 = vmatpush1.bf16.msra.mxu0 %v3008
        %3159 = vmatprep.subr.bf16.mxu0 %v3011
        %3160 = vmatpush1.bf16.msra.mxu0 %v3010
        %3161 = vmatprep.subr.bf16.mxu0 %v3013
        %3162 = vmatpush1.bf16.msra.mxu0 %v3012
        %3163 = vmatprep.subr.bf16.mxu0 %v3015
        %3164 = vmatpush1.bf16.msra.mxu0 %v3014
        %3165 = vmatprep.subr.bf16.mxu0 %v3017
        %3166 = vmatpush1.bf16.msra.mxu0 %v3016
        %3167 = vmatprep.subr.bf16.mxu0 %v3019
        %3168 = vmatpush1.bf16.msra.mxu0 %v3018
        %3169 = vmatprep.subr.bf16.mxu0 %v3021
        %3170 = vmatpush1.bf16.msra.mxu0 %v3020
        %3171 = vmatprep.subr.bf16.mxu0 %v3023
        %3172 = vmatpush1.bf16.msra.mxu0 %v3022
        %3173 = vmatprep.subr.bf16.mxu0 %v3025
        %3174 = vmatpush1.bf16.msra.mxu0 %v3024
        %3175 = vmatprep.subr.bf16.mxu0 %v3027
        %3176 = vmatpush1.bf16.msra.mxu0 %v3026
        %3177 = vmatprep.subr.bf16.mxu0 %v3029
        %3178 = vmatpush1.bf16.msra.mxu0 %v3028
        %3179 = vmatprep.subr.bf16.mxu0 %v3031
        %3180 = vmatpush1.bf16.msra.mxu0 %v3030
        %3181 = vmatprep.subr.bf16.mxu0 %v3033
        %3182 = vmatpush1.bf16.msra.mxu0 %v3032
        %3183 = vmatprep.subr.bf16.mxu0 %v3035
        %3184 = vmatpush1.bf16.msra.mxu0 %v3034
        %3185 = vmatprep.mubr.bf16.mxu0 %v2703
        %3186 = vmatmul.mubr.bf16.gmra.mrb[0].mxu0 %v2702
        %v3187 = vpop.f32.mrb[0].mxu0
        %v3188 = vadd.f32 %v3135, %v3187
        %v3189 = vpop.f32.mrb[0].mxu0
        %v3190 = vadd.f32 %v3137, %v3189
        %v3191 = vpop.f32.mrb[0].mxu0
        %v3192 = vadd.f32 %v3139, %v3191
        %v3193 = vpop.f32.mrb[0].mxu0
        %v3194 = vadd.f32 %v3141, %v3193
        %3195 = vmatprep.mubr.bf16.mxu0 %v2707
        %3196 = vmatmul.mubr.bf16.gmra.mrb[0].mxu0 %v2706
        %v3197 = vpop.f32.mrb[0].mxu0
        %v3198 = vadd.f32 %v3145, %v3197
        %v3199 = vpop.f32.mrb[0].mxu0
        %v3200 = vadd.f32 %v3147, %v3199
        %v3201 = vpop.f32.mrb[0].mxu0
        %v3202 = vadd.f32 %v3149, %v3201
        %v3203 = vpop.f32.mrb[0].mxu0
        %v3204 = vadd.f32 %v3151, %v3203
        %3205 = vdwg.mxu0
        %v3206 = vadd.f32 %v2160, %v3188
        %v3207 = vadd.f32 %v2161, %v3190
        %v3208 = vadd.f32 %v2162, %v3192
        %v3209 = vadd.f32 %v2163, %v3194
        %v3210 = vadd.f32 %v2164, %v3198
        %v3211 = vadd.f32 %v2165, %v3200
        %v3212 = vadd.f32 %v2166, %v3202
        %v3213 = vadd.f32 %v2167, %v3204
        %v3214 = vadd.f32 %v3206, %v3207
        %3215 = vadd.xlane.f32.xlu0 %v3214
        %v3216 = vpop.xlane.xlu0 %3215
        %v3217 = vadd.f32 %v3208, %v3209
        %3218 = vadd.xlane.f32.xlu0 %v3217
        %v3219 = vpop.xlane.xlu0 %3218
        %v3220 = vadd.f32 %v3210, %v3211
        %3221 = vadd.xlane.f32.xlu0 %v3220
        %v3222 = vpop.xlane.xlu0 %3221
        %v3223 = vadd.f32 %v3212, %v3213
        %3224 = vadd.xlane.f32.xlu0 %v3223
        %v3225 = vpop.xlane.xlu0 %3224
        %v3226 = vmul.f32 %v3216, %v2083
        %v3227 = vmul.f32 %v3219, %v2083
        %v3228 = vmul.f32 %v3222, %v2083
        %v3229 = vmul.f32 %v3225, %v2083
        %v3230 = vsub.f32 %v3206, %v3226
        %v3231 = vsub.f32 %v3207, %v3226
        %v3232 = vsub.f32 %v3208, %v3227
        %v3233 = vsub.f32 %v3209, %v3227
        %v3234 = vsub.f32 %v3210, %v3228
        %v3235 = vsub.f32 %v3211, %v3228
        %v3236 = vsub.f32 %v3212, %v3229
        %v3237 = vsub.f32 %v3213, %v3229
        %v3238 = vmul.f32 %v3230, %v3230
        %v3239 = vmul.f32 %v3231, %v3231
        %v3240 = vmul.f32 %v3232, %v3232
        %v3241 = vmul.f32 %v3233, %v3233
        %v3242 = vmul.f32 %v3234, %v3234
        %v3243 = vmul.f32 %v3235, %v3235
        %v3244 = vmul.f32 %v3236, %v3236
        %v3245 = vmul.f32 %v3237, %v3237
        %v3246 = vadd.f32 %v3238, %v3239
        %3247 = vadd.xlane.f32.xlu0 %v3246
        %v3248 = vpop.xlane.xlu0 %3247
        %v3249 = vadd.f32 %v3240, %v3241
        %3250 = vadd.xlane.f32.xlu0 %v3249
        %v3251 = vpop.xlane.xlu0 %3250
        %v3252 = vadd.f32 %v3242, %v3243
        %3253 = vadd.xlane.f32.xlu0 %v3252
        %v3254 = vpop.xlane.xlu0 %3253
        %v3255 = vadd.f32 %v3244, %v3245
        %3256 = vadd.xlane.f32.xlu0 %v3255
        %v3257 = vpop.xlane.xlu0 %3256
        %v3258 = vmul.f32 %v3248, %v2083
        %v3259 = vmul.f32 %v3251, %v2083
        %v3260 = vmul.f32 %v3254, %v2083
        %v3261 = vmul.f32 %v3257, %v2083
        %v3262 = vadd.f32 %v3258, 1e-05
        %v3263 = vadd.f32 %v3259, 1e-05
        %v3264 = vadd.f32 %v3260, 1e-05
        %v3265 = vadd.f32 %v3261, 1e-05
        %v3266 = vrsqrt.pop %v3262
        %v3267 = vrsqrt.pop %v3263
        %v3268 = vrsqrt.pop %v3264
        %v3269 = vrsqrt.pop %v3265
        %v3270 = vmul.f32 %v3230, %v3266
        %v3271 = vmul.f32 %v3231, %v3266
        %v3272 = vmul.f32 %v3232, %v3267
        %v3273 = vmul.f32 %v3233, %v3267
        %v3274 = vmul.f32 %v3234, %v3268
        %v3275 = vmul.f32 %v3235, %v3268
        %v3276 = vmul.f32 %v3236, %v3269
        %v3277 = vmul.f32 %v3237, %v3269
        %v3278 = vlaneseq
        %v3279 = vshrl.u32 %v3278, 7
        %v3280 = vsub.s32 4, %v3279
        %v3281 = vrot.slane %v592, %v3280
        %v3282 = vlaneseq
        %v3283 = vshrl.u32 %v3282, 7
        %v3284 = vsub.s32 4, %v3283
        %v3285 = vrot.slane %v593, %v3284
        %v3286 = vmul.f32 %v3270, %v3281
        %v3287 = vmul.f32 %v3271, %v3285
        %v3288 = vmul.f32 %v3272, %v3281
        %v3289 = vmul.f32 %v3273, %v3285
        %v3290 = vmul.f32 %v3274, %v3281
        %v3291 = vmul.f32 %v3275, %v3285
        %v3292 = vmul.f32 %v3276, %v3281
        %v3293 = vmul.f32 %v3277, %v3285
        %v3294 = vlaneseq
        %v3295 = vshrl.u32 %v3294, 7
        %v3296 = vsub.s32 5, %v3295
        %v3297 = vrot.slane %v592, %v3296
        %v3298 = vlaneseq
        %v3299 = vshrl.u32 %v3298, 7
        %v3300 = vsub.s32 5, %v3299
        %v3301 = vrot.slane %v593, %v3300
        %v3302 = vadd.f32 %v3286, %v3297
        %v3303 = vadd.f32 %v3287, %v3301
        %v3304 = vadd.f32 %v3288, %v3297
        %v3305 = vadd.f32 %v3289, %v3301
        %v3306 = vadd.f32 %v3290, %v3297
        %v3307 = vadd.f32 %v3291, %v3301
        %v3308 = vadd.f32 %v3292, %v3297
        %v3309 = vadd.f32 %v3293, %v3301
        %3310 = vst [vmem:[#allocation2] sm:$0xff] %v3302
        %3311 = vst [vmem:[#allocation2 + $0x8] sm:$0xff] %v3303
        %3312 = vst [vmem:[#allocation2 + $0x10] sm:$0xff] %v3304
        %3313 = vst [vmem:[#allocation2 + $0x18] sm:$0xff] %v3305
        %3314 = vst [vmem:[#allocation2 + $0x20] sm:$0xff] %v3306
        %3315 = vst [vmem:[#allocation2 + $0x28] sm:$0xff] %v3307
        %3316 = vst [vmem:[#allocation2 + $0x30] sm:$0xff] %v3308
        %3317 = vst [vmem:[#allocation2 + $0x38] sm:$0xff] %v3309
        %p3318 = scmp.eq.s32.totalorder %s35, 1
        // Predicated region
        $region85: #{tpu_custom_call.1} parent=51 // pred_check
          %p3319 = pneg %p3318
        $region86: #{tpu_custom_call.1} parent=51 // pred_check_branch
          %3321 = sbr.rel (%p3319) target = $region88
        $region87: #{tpu_custom_call.1} parent=51 // pred_region
          %v3322 = vpack.c.bf16 %v3304, %v3302
          %v3323 = vpack.c.bf16 %v3305, %v3303
          %v3324 = vpack.c.bf16 %v3308, %v3306
          %v3325 = vpack.c.bf16 %v3309, %v3307
          %v3330 = vunpack.c.l.b16 %v3322
          %v3331 = vunpack.c.l.b16 %v3323
          %v3332 = vunpack.c.h.b16 %v3322
          %v3333 = vunpack.c.h.b16 %v3323
          %v3334 = vunpack.c.l.b16 %v3324
          %v3335 = vunpack.c.l.b16 %v3325
          %v3336 = vunpack.c.h.b16 %v3324
          %v3337 = vunpack.c.h.b16 %v3325
          %v3338 = vpack.c.b16 %v3331, %v3330
          %v3339 = vpack.c.b16 %v3333, %v3332
          %v3340 = vpack.c.b16 %v3335, %v3334
          %v3341 = vpack.c.b16 %v3337, %v3336
          %3346 = vst [vmem:[#allocation15] sm:$0xff] %v3338
          %3347 = vst [vmem:[#allocation15 + $0x8] sm:$0xff] %v3339
          %3348 = vst [vmem:[#allocation15 + $0x10] sm:$0xff] %v3340
          %3349 = vst [vmem:[#allocation15 + $0x18] sm:$0xff] %v3341
        $region88: #{tpu_custom_call.1} parent=51 // pred_fallthru
          _
        // Predicated region
        $region89: #{tpu_custom_call.1} parent=51 // pred_check
          %p3350 = pneg %p268
        $region90: #{tpu_custom_call.1} parent=51 // pred_check_branch
          %3352 = sbr.rel (%p3350) target = $region92
        $region91: #{tpu_custom_call.1} parent=51 // pred_region
          %s3353 = smul.u32 2, %s34
          %s3355 = ssub.s32 512, 512
          %3356 = vsyncadd [#allocation5], %s3355
          %s3357 = smul.addr %s3353, 4
          %s3358 = smul.addr %s3357, 64
          %s3359 = scalar_lea.hbm %s8, %s3358
          %s3360 = sshll.u32 [#allocation15], 4
          %s3361 = int_to_ptr.vmem [resolvable:$true] %s3360
          %3366 = dma.vmem_to_hbm [thread:$0]  %s3361, 512, %s3359, [#allocation5], 128, 128, 8
        $region92: #{tpu_custom_call.1} parent=51 // pred_fallthru
          _
        // Predicated region
        $region93: #{tpu_custom_call.1} parent=51 // pred_check
          %p3367 = pneg %p268
        $region94: #{tpu_custom_call.1} parent=51 // pred_check_branch
          %3369 = sbr.rel (%p3367) target = $region96
        $region95: #{tpu_custom_call.1} parent=51 // pred_region
          %3370 = dma.done [#allocation5], 512
        $region96: #{tpu_custom_call.1} parent=51 // pred_fallthru
          _
      $region52: #{tpu_custom_call.1} parent=5 // pred_fallthru
        _
      %p3371 = scmp.le.s32.totalorder 2, %s25
      // Predicated region
      $region97: #{tpu_custom_call.1} parent=5 // pred_check
        %p3372 = pneg %p3371
      $region98: #{tpu_custom_call.1} parent=5 // pred_check_branch
        %3374 = sbr.rel (%p3372) target = $region100
      $region99: #{tpu_custom_call.1} parent=5 // pred_region
        %s3375 = ssub.s32 %s25, 2
      $region100: #{tpu_custom_call.1} parent=5 // pred_fallthru
        _
    $region6: #{tpu_custom_call.1} parent=1 // loop_footer
      %s29 = sadd.s32 1, %s25
    $region7: #{tpu_custom_call.1} parent=1 // loop_footer_branch
      %24 = sbr.rel target = $region3
    $region8: #{tpu_custom_call.1} parent=1 // loop_exit
      _
    %3376 = vsyncpa [#allocation4], 1
    %s3377 = scalar_lea.sflag [#allocation4], 1
    %3378 = vsyncpa %s3377, 1
    %3379 = vsyncpa [#allocation7], 1
    %s3380 = scalar_lea.sflag [#allocation7], 1
    %3381 = vsyncpa %s3380, 1
    %3382 = vsyncpa [#allocation10], 1
    %s3383 = scalar_lea.sflag [#allocation10], 1
    %3384 = vsyncpa %s3383, 1
    %3385 = vsyncpa [#allocation13], 1
    %s3386 = scalar_lea.sflag [#allocation13], 1
    %3387 = vsyncpa %s3386, 1
    %3388 = vsyncpa [#allocation5], 1
    %s3389 = scalar_lea.sflag [#allocation5], 1
    %3390 = vsyncpa %s3389, 1

</llo_original>
